<compile_context>
chip_gen: v6e
topology: v6e:2x2x1
jax: 0.10.0
libtpu: 0.0.40
codegen_flags: <defaults>
</compile_context>

<pallas_src>
import jax
import jax.numpy as jnp
from jax.experimental import pallas as pl
from jax.experimental.pallas import tpu as pltpu

IN_DIM = 784
H1, H1P = 500, 512      # fc1 width, lane-padded width
H2, H2P = 1000, 1024    # fc2 width, lane-padded width
OUT_DIM = 10


def _mlp_kernel(x_ref, w1_ref, b1_ref, w2_ref, b2_ref, w3_ref, b3_ref, o_ref):
    # fc1 + relu  (bf16 MXU matmul, f32 accumulate, f32 elementwise)
    x = x_ref[...].astype(jnp.bfloat16)
    h1 = jnp.dot(x, w1_ref[...], preferred_element_type=jnp.float32)
    h1 = jnp.maximum(h1 + b1_ref[...], 0.0)
    # fc2 + relu
    h2 = jnp.dot(h1.astype(jnp.bfloat16), w2_ref[...],
                 preferred_element_type=jnp.float32)
    h2 = jnp.maximum(h2 + b2_ref[...], 0.0)
    # fc3
    logits = jnp.dot(h2.astype(jnp.bfloat16), w3_ref[...],
                     preferred_element_type=jnp.float32)
    logits = logits + b3_ref[...]
    # log_softmax over dim=1 (numerically stable)
    m = jnp.max(logits, axis=-1, keepdims=True)
    shifted = logits - m
    lse = jnp.log(jnp.sum(jnp.exp(shifted), axis=-1, keepdims=True))
    o_ref[...] = (shifted - lse).astype(o_ref.dtype)


def _round_up(n, m):
    return ((n + m - 1) // m) * m


def init_params(key):
    """Deterministic synthetic parameters with nn.Linear-like scaling.

    Returned in the *logical* (unpadded) sizes, stored as (in, out)."""
    ks = jax.random.split(key, 6)

    def linear(kw, kb, fan_in, fan_out):
        bound = 1.0 / (fan_in ** 0.5)
        w = jax.random.uniform(kw, (fan_in, fan_out), jnp.float32, -bound, bound)
        b = jax.random.uniform(kb, (1, fan_out), jnp.float32, -bound, bound)
        return w, b

    w1, b1 = linear(ks[0], ks[1], IN_DIM, H1)
    w2, b2 = linear(ks[2], ks[3], H1, H2)
    w3, b3 = linear(ks[4], ks[5], H2, OUT_DIM)
    return (w1, b1, w2, b2, w3, b3)


def prepare_params(params):
    """One-time: zero-pad hidden dims to 512/1024 and cast weights to bf16."""
    w1, b1, w2, b2, w3, b3 = params
    w1p = jnp.zeros((IN_DIM, H1P), jnp.float32).at[:, :H1].set(w1).astype(jnp.bfloat16)
    b1p = jnp.zeros((1, H1P), jnp.float32).at[:, :H1].set(b1)
    w2p = jnp.zeros((H1P, H2P), jnp.float32).at[:H1, :H2].set(w2).astype(jnp.bfloat16)
    b2p = jnp.zeros((1, H2P), jnp.float32).at[:, :H2].set(b2)
    w3p = jnp.zeros((H2P, OUT_DIM), jnp.float32).at[:H2, :].set(w3).astype(jnp.bfloat16)
    b3p = b3.astype(jnp.float32)
    return (w1p, b1p, w2p, b2p, w3p, b3p)


def net_forward(x, prepared_params, *, tb=256):
    """x: any shape with trailing size 784 per example (e.g. (B, 1, 28, 28))."""
    w1p, b1p, w2p, b2p, w3p, b3p = prepared_params
    xb = x.reshape(-1, IN_DIM).astype(jnp.float32)  # x.view(-1, 784)
    B = xb.shape[0]

    # Batch tile: multiple of 8 (sublane), capped at `tb`; pad batch to a
    # multiple of the tile so every grid step sees a full block.
    TB = min(tb, _round_up(B, 8))
    Bp = _round_up(B, TB)
    if Bp != B:
        xb = jnp.pad(xb, ((0, Bp - B), (0, 0)))
    grid = (Bp // TB,)

    def resident(shape):
        # Constant block index across the grid -> weights stay VMEM-resident.
        return pl.BlockSpec(shape, lambda i: (0, 0))

    cost = pl.CostEstimate(
        flops=2 * Bp * (IN_DIM * H1P + H1P * H2P + H2P * OUT_DIM),
        transcendentals=Bp * (OUT_DIM + 1),  # exp per class + log per row
        bytes_accessed=(w1p.size + w2p.size + w3p.size) * 2
        + (b1p.size + b2p.size + b3p.size) * 4
        + xb.size * 4
        + Bp * OUT_DIM * 4,
    )

    out = pl.pallas_call(
        _mlp_kernel,
        out_shape=jax.ShapeDtypeStruct((Bp, OUT_DIM), jnp.float32),
        grid=grid,
        in_specs=[
            pl.BlockSpec((TB, IN_DIM), lambda i: (i, 0)),   # x tile (pipelined)
            resident((IN_DIM, H1P)),                        # w1
            resident((1, H1P)),                             # b1
            resident((H1P, H2P)),                           # w2
            resident((1, H2P)),                             # b2
            resident((H2P, OUT_DIM)),                       # w3
            resident((1, OUT_DIM)),                         # b3
        ],
        out_specs=pl.BlockSpec((TB, OUT_DIM), lambda i: (i, 0)),
        compiler_params=pltpu.CompilerParams(
            dimension_semantics=("parallel",),
        ),
        cost_estimate=cost,
    )(xb, w1p, b1p, w2p, b2p, w3p, b3p)
    return out[:B]


def _reference_forward_f32(x, params):
    """Pure-f32 reference of the original PyTorch forward."""
    w1, b1, w2, b2, w3, b3 = params
    xb = x.reshape(-1, IN_DIM).astype(jnp.float32)
    h1 = jnp.maximum(xb @ w1 + b1, 0.0)
    h2 = jnp.maximum(h1 @ w2 + b2, 0.0)
    logits = h2 @ w3 + b3
    return jax.nn.log_softmax(logits, axis=1)


def _reference_forward_bf16(x, prepared_params):
    """Reference matching the kernel's bf16-matmul / f32-accumulate math."""
    w1p, b1p, w2p, b2p, w3p, b3p = prepared_params
    xb = x.reshape(-1, IN_DIM).astype(jnp.float32)
    h1 = jnp.dot(xb.astype(jnp.bfloat16), w1p, preferred_element_type=jnp.float32)
    h1 = jnp.maximum(h1 + b1p, 0.0)
    h2 = jnp.dot(h1.astype(jnp.bfloat16), w2p, preferred_element_type=jnp.float32)
    h2 = jnp.maximum(h2 + b2p, 0.0)
    logits = jnp.dot(h2.astype(jnp.bfloat16), w3p, preferred_element_type=jnp.float32)
    logits = logits + b3p
    return jax.nn.log_softmax(logits, axis=1)


if __name__ == "__main__":
    key = jax.random.PRNGKey(0)
    kx, kp = jax.random.split(key)

    # Small MNIST-like batch in PyTorch NCHW layout: (B, 1, 28, 28)
    x = jax.random.normal(kx, (8, 1, 28, 28), dtype=jnp.float32)
    params = init_params(kp)
    prepared = prepare_params(params)

    out = jax.block_until_ready(net_forward(x, prepared))
    assert out.shape == (8, 10)

    # Exact-math check against a reference using identical bf16 matmul casts.
    ref_bf16 = _reference_forward_bf16(x, prepared)
    assert jnp.allclose(out, ref_bf16, atol=2e-3, rtol=2e-3)

    # Loose check against the full-f32 PyTorch-equivalent forward
    # (slack accounts for the intentional bf16 weight cast).
    ref_f32 = _reference_forward_f32(x, params)
    assert jnp.allclose(out, ref_f32, atol=5e-2, rtol=5e-2)

    print("KERNEL_OK")
</pallas_src>

<mosaic_0001>
module attributes {stable_mosaic.version = 11 : i64} {
  func.func @_mlp_kernel(%arg0: i32, %arg1: memref<8x784xf32, #tpu.memory_space<vmem>>, %arg2: memref<784x512xbf16, #tpu.memory_space<vmem>>, %arg3: memref<1x512xf32, #tpu.memory_space<vmem>>, %arg4: memref<512x1024xbf16, #tpu.memory_space<vmem>>, %arg5: memref<1x1024xf32, #tpu.memory_space<vmem>>, %arg6: memref<1024x10xbf16, #tpu.memory_space<vmem>>, %arg7: memref<1x10xf32, #tpu.memory_space<vmem>>, %arg8: memref<8x10xf32, #tpu.memory_space<vmem>>) attributes {dimension_semantics = [#tpu.dimension_semantics<parallel>], iteration_bounds = array<i64: 1>, scalar_prefetch = 0 : i64, scratch_operands = 0 : i64, tpu.core_type = #tpu.core_type<tc>, window_params = [{transform_indices = @transform_0, window_bounds = array<i64: 8, 784>}, {pipeline_mode = #tpu.pipeline_mode<synchronous>, transform_indices = @transform_1, window_bounds = array<i64: 784, 512>}, {pipeline_mode = #tpu.pipeline_mode<synchronous>, transform_indices = @transform_2, window_bounds = array<i64: 1, 512>}, {pipeline_mode = #tpu.pipeline_mode<synchronous>, transform_indices = @transform_3, window_bounds = array<i64: 512, 1024>}, {pipeline_mode = #tpu.pipeline_mode<synchronous>, transform_indices = @transform_4, window_bounds = array<i64: 1, 1024>}, {pipeline_mode = #tpu.pipeline_mode<synchronous>, transform_indices = @transform_5, window_bounds = array<i64: 1024, 10>}, {pipeline_mode = #tpu.pipeline_mode<synchronous>, transform_indices = @transform_6, window_bounds = array<i64: 1, 10>}, {transform_indices = @transform_7, window_bounds = array<i64: 8, 10>}]} {
    %c0 = arith.constant 0 : index
    %c0_0 = arith.constant 0 : index
    %0 = vector.load %arg1[%c0, %c0_0] : memref<8x784xf32, #tpu.memory_space<vmem>>, vector<8x784xf32>
    %1 = arith.truncf %0 : vector<8x784xf32> to vector<8x784xbf16>
    %c0_1 = arith.constant 0 : index
    %c0_2 = arith.constant 0 : index
    %2 = vector.load %arg2[%c0_1, %c0_2] : memref<784x512xbf16, #tpu.memory_space<vmem>>, vector<784x512xbf16>
    %cst = arith.constant dense<0.000000e+00> : vector<8x512xf32>
    %3 = tpu.matmul %1, %2, %cst {dimension_numbers = #tpu.dot_dimension_numbers<[1], [0], [0], [1], [0, 0, 1, 1], [], []>} : vector<8x784xbf16>, vector<784x512xbf16>, vector<8x512xf32> -> vector<8x512xf32>
    %c0_3 = arith.constant 0 : index
    %c0_4 = arith.constant 0 : index
    %4 = vector.load %arg3[%c0_3, %c0_4] : memref<1x512xf32, #tpu.memory_space<vmem>>, vector<1x512xf32>
    %5 = vector.broadcast %4 : vector<1x512xf32> to vector<8x512xf32>
    %6 = arith.addf %3, %5 : vector<8x512xf32>
    %cst_5 = arith.constant 0.000000e+00 : f32
    %7 = vector.broadcast %cst_5 : f32 to vector<8x512xf32>
    %8 = arith.maximumf %6, %7 : vector<8x512xf32>
    %9 = arith.truncf %8 : vector<8x512xf32> to vector<8x512xbf16>
    %c0_6 = arith.constant 0 : index
    %c0_7 = arith.constant 0 : index
    %10 = vector.load %arg4[%c0_6, %c0_7] : memref<512x1024xbf16, #tpu.memory_space<vmem>>, vector<512x1024xbf16>
    %cst_8 = arith.constant dense<0.000000e+00> : vector<8x1024xf32>
    %11 = tpu.matmul %9, %10, %cst_8 {dimension_numbers = #tpu.dot_dimension_numbers<[1], [0], [0], [1], [0, 0, 1, 1], [], []>} : vector<8x512xbf16>, vector<512x1024xbf16>, vector<8x1024xf32> -> vector<8x1024xf32>
    %c0_9 = arith.constant 0 : index
    %c0_10 = arith.constant 0 : index
    %12 = vector.load %arg5[%c0_9, %c0_10] : memref<1x1024xf32, #tpu.memory_space<vmem>>, vector<1x1024xf32>
    %13 = vector.broadcast %12 : vector<1x1024xf32> to vector<8x1024xf32>
    %14 = arith.addf %11, %13 : vector<8x1024xf32>
    %cst_11 = arith.constant 0.000000e+00 : f32
    %15 = vector.broadcast %cst_11 : f32 to vector<8x1024xf32>
    %16 = arith.maximumf %14, %15 : vector<8x1024xf32>
    %17 = arith.truncf %16 : vector<8x1024xf32> to vector<8x1024xbf16>
    %c0_12 = arith.constant 0 : index
    %c0_13 = arith.constant 0 : index
    %18 = vector.load %arg6[%c0_12, %c0_13] : memref<1024x10xbf16, #tpu.memory_space<vmem>>, vector<1024x10xbf16>
    %cst_14 = arith.constant dense<0.000000e+00> : vector<8x10xf32>
    %19 = tpu.matmul %17, %18, %cst_14 {dimension_numbers = #tpu.dot_dimension_numbers<[1], [0], [0], [1], [0, 0, 1, 1], [], []>} : vector<8x1024xbf16>, vector<1024x10xbf16>, vector<8x10xf32> -> vector<8x10xf32>
    %c0_15 = arith.constant 0 : index
    %c0_16 = arith.constant 0 : index
    %20 = vector.load %arg7[%c0_15, %c0_16] : memref<1x10xf32, #tpu.memory_space<vmem>>, vector<1x10xf32>
    %21 = vector.broadcast %20 : vector<1x10xf32> to vector<8x10xf32>
    %22 = arith.addf %19, %21 : vector<8x10xf32>
    %cst_17 = arith.constant dense<0xFF800000> : vector<8xf32>
    %23 = vector.multi_reduction <maximumf>, %22, %cst_17 [1] : vector<8x10xf32> to vector<8xf32>
    %24 = vector.shape_cast %23 : vector<8xf32> to vector<8x1xf32>
    %25 = vector.broadcast %24 : vector<8x1xf32> to vector<8x10xf32>
    %26 = arith.subf %22, %25 : vector<8x10xf32>
    %27 = math.exp %26 : vector<8x10xf32>
    %cst_18 = arith.constant dense<0.000000e+00> : vector<8xf32>
    %28 = vector.multi_reduction <add>, %27, %cst_18 [1] : vector<8x10xf32> to vector<8xf32>
    %29 = vector.shape_cast %28 : vector<8xf32> to vector<8x1xf32>
    %30 = math.log %29 : vector<8x1xf32>
    %31 = vector.broadcast %30 : vector<8x1xf32> to vector<8x10xf32>
    %32 = arith.subf %26, %31 : vector<8x10xf32>
    %c0_19 = arith.constant 0 : index
    %c0_20 = arith.constant 0 : index
    %33 = vector.load %arg8[%c0_19, %c0_20] : memref<8x10xf32, #tpu.memory_space<vmem>>, vector<8x10xf32>
    tpu.vector_store %arg8[%c0_19, %c0_20], %32 {strides = array<i32>} : memref<8x10xf32, #tpu.memory_space<vmem>>, vector<8x10xf32>,
    return
  }
  func.func @transform_0(%arg0: i32) -> (i32, i32) {
    %c0_i32 = arith.constant 0 : i32
    %c0_i32_0 = arith.constant 0 : i32
    return %arg0, %c0_i32 : i32, i32
  }
  func.func @transform_1(%arg0: i32) -> (i32, i32) {
    %c0_i32 = arith.constant 0 : i32
    %c0_i32_0 = arith.constant 0 : i32
    %c0_i32_1 = arith.constant 0 : i32
    return %c0_i32, %c0_i32_0 : i32, i32
  }
  func.func @transform_2(%arg0: i32) -> (i32, i32) {
    %c0_i32 = arith.constant 0 : i32
    %c0_i32_0 = arith.constant 0 : i32
    %c0_i32_1 = arith.constant 0 : i32
    return %c0_i32, %c0_i32_0 : i32, i32
  }
  func.func @transform_3(%arg0: i32) -> (i32, i32) {
    %c0_i32 = arith.constant 0 : i32
    %c0_i32_0 = arith.constant 0 : i32
    %c0_i32_1 = arith.constant 0 : i32
    return %c0_i32, %c0_i32_0 : i32, i32
  }
  func.func @transform_4(%arg0: i32) -> (i32, i32) {
    %c0_i32 = arith.constant 0 : i32
    %c0_i32_0 = arith.constant 0 : i32
    %c0_i32_1 = arith.constant 0 : i32
    return %c0_i32, %c0_i32_0 : i32, i32
  }
  func.func @transform_5(%arg0: i32) -> (i32, i32) {
    %c0_i32 = arith.constant 0 : i32
    %c0_i32_0 = arith.constant 0 : i32
    %c0_i32_1 = arith.constant 0 : i32
    return %c0_i32, %c0_i32_0 : i32, i32
  }
  func.func @transform_6(%arg0: i32) -> (i32, i32) {
    %c0_i32 = arith.constant 0 : i32
    %c0_i32_0 = arith.constant 0 : i32
    %c0_i32_1 = arith.constant 0 : i32
    return %c0_i32, %c0_i32_0 : i32, i32
  }
  func.func @transform_7(%arg0: i32) -> (i32, i32) {
    %c0_i32 = arith.constant 0 : i32
    %c0_i32_0 = arith.constant 0 : i32
    return %arg0, %c0_i32 : i32, i32
  }
}

</mosaic_0001>

<llo_original>
// kernel: tpu_custom_call.1
$region0: #{tpu_custom_call.1}
  #allocation0 [shape = 'u32[]', space=smem, size = 0x4, offset = 0x4, fixed_abs, tag = 'smem constant byte address 0x4 - core index']
  #allocation1 [shape = 'u32[144,128]{1,0:T(1,128)}', space=vmem, size = 0x12000, scoped, tag = 'internal scratch']
  %s0 = inlined_call_operand.vmem [shape: f32[8,784], index: 0, kind: input, shape index: {}]
  %s1 = inlined_call_operand.hbm [shape: bf16[784,512], index: 1, kind: input, shape index: {}]
  %s2 = inlined_call_operand.vmem [shape: f32[1,512], index: 2, kind: input, shape index: {}]
  %s3 = inlined_call_operand.hbm [shape: bf16[512,1024], index: 3, kind: input, shape index: {}]
  %s4 = inlined_call_operand.vmem [shape: f32[1,1024], index: 4, kind: input, shape index: {}]
  %s5 = inlined_call_operand.vmem [shape: bf16[1024,10], index: 5, kind: input, shape index: {}]
  %s6 = inlined_call_operand.vmem [shape: f32[1,10], index: 6, kind: input, shape index: {}]
  %s7 = inlined_call_operand.hbm [shape: f32[8,10], index: 7, kind: output, shape index: {}]
  %s8 = sld [smem:[#allocation0]]
  $region46: #{tpu_custom_call.1} parent=0
    _
  %s10 = ssub.s32 1, %s8
  %s11 = scalar_select 0, %s10, %s8
  $region1: #{tpu_custom_call.1} parent=0
    #allocation2 [shape = 'u8[802816]{0}', space=vmem, size = 0xc4000, scoped, tag = 'input window, operand 1, single buffered']
    #allocation3 [shape = 's32[1]{0}', space=sflag, size = 0x4, scoped, tag = 'scoped memory for tpu_custom_call.1']
    #allocation4 [shape = 's32[1]{0}', space=sflag, size = 0x4, scoped, tag = 'scoped memory for tpu_custom_call.1']
    #allocation5 [shape = 'u8[1048576]{0}', space=vmem, size = 0x100000, scoped, tag = 'input window, operand 3, single buffered']
    #allocation6 [shape = 's32[1]{0}', space=sflag, size = 0x4, scoped, tag = 'scoped memory for tpu_custom_call.1']
    #allocation7 [shape = 'u8[4096]{0}', space=vmem, size = 0x1000, scoped, tag = 'output window, operand 0, single buffered']
    %12 = vsyncpa [#allocation3], 0
    %13 = vsyncpa [#allocation6], 0
    %14 = vsyncpa [#allocation4], 0
    // Predicated region
    $region2: #{tpu_custom_call.1} parent=1 // pred_check
      _
    $region3: #{tpu_custom_call.1} parent=1 // pred_check_branch
      %16 = sbr.rel (0) target = $region5
    $region4: #{tpu_custom_call.1} parent=1 // pred_region
      _
    $region5: #{tpu_custom_call.1} parent=1 // pred_fallthru
      _
    // Predicated region
    $region6: #{tpu_custom_call.1} parent=1 // pred_check
      _
    $region7: #{tpu_custom_call.1} parent=1 // pred_check_branch
      %18 = sbr.rel (0) target = $region9
    $region8: #{tpu_custom_call.1} parent=1 // pred_region
      %s20 = ssub.s32 25088, 25088
      %21 = vsyncadd [#allocation3], %s20
      %s22 = sshll.u32 [#allocation2], 4
      %s23 = int_to_ptr.vmem [resolvable:$true] %s22
      %28 = dma.hbm_to_vmem [thread:$0]  %s1, 25088, %s23, [#allocation3], 256, 256, 16
    $region9: #{tpu_custom_call.1} parent=1 // pred_fallthru
      _
    // Predicated region
    $region10: #{tpu_custom_call.1} parent=1 // pred_check
      _
    $region11: #{tpu_custom_call.1} parent=1 // pred_check_branch
      %30 = sbr.rel (0) target = $region13
    $region12: #{tpu_custom_call.1} parent=1 // pred_region
      _
    $region13: #{tpu_custom_call.1} parent=1 // pred_fallthru
      _
    // Predicated region
    $region14: #{tpu_custom_call.1} parent=1 // pred_check
      _
    $region15: #{tpu_custom_call.1} parent=1 // pred_check_branch
      %32 = sbr.rel (0) target = $region17
    $region16: #{tpu_custom_call.1} parent=1 // pred_region
      %s34 = ssub.s32 32768, 32768
      %35 = vsyncadd [#allocation6], %s34
      %s36 = sshll.u32 [#allocation5], 4
      %s37 = int_to_ptr.vmem [resolvable:$true] %s36
      %42 = dma.hbm_to_vmem [thread:$0]  %s3, 32768, %s37, [#allocation6], 512, 512, 32
    $region17: #{tpu_custom_call.1} parent=1 // pred_fallthru
      _
    // Predicated region
    $region18: #{tpu_custom_call.1} parent=1 // pred_check
      _
    $region19: #{tpu_custom_call.1} parent=1 // pred_check_branch
      %44 = sbr.rel (0) target = $region21
    $region20: #{tpu_custom_call.1} parent=1 // pred_region
      _
    $region21: #{tpu_custom_call.1} parent=1 // pred_fallthru
      _
    // Predicated region
    $region22: #{tpu_custom_call.1} parent=1 // pred_check
      _
    $region23: #{tpu_custom_call.1} parent=1 // pred_check_branch
      %46 = sbr.rel (0) target = $region25
    $region24: #{tpu_custom_call.1} parent=1 // pred_region
      _
    $region25: #{tpu_custom_call.1} parent=1 // pred_fallthru
      _
    // Predicated region
    $region26: #{tpu_custom_call.1} parent=1 // pred_check
      _
    $region27: #{tpu_custom_call.1} parent=1 // pred_check_branch
      %48 = sbr.rel (0) target = $region29
    $region28: #{tpu_custom_call.1} parent=1 // pred_region
      _
    $region29: #{tpu_custom_call.1} parent=1 // pred_fallthru
      _
    // Predicated region
    $region30: #{tpu_custom_call.1} parent=1 // pred_check
      _
    $region31: #{tpu_custom_call.1} parent=1 // pred_check_branch
      %50 = sbr.rel (0) target = $region33
    $region32: #{tpu_custom_call.1} parent=1 // pred_region
      %51 = dma.done [#allocation3], 25088
    $region33: #{tpu_custom_call.1} parent=1 // pred_fallthru
      _
    // Predicated region
    $region34: #{tpu_custom_call.1} parent=1 // pred_check
      _
    $region35: #{tpu_custom_call.1} parent=1 // pred_check_branch
      %53 = sbr.rel (0) target = $region37
    $region36: #{tpu_custom_call.1} parent=1 // pred_region
      %54 = dma.done [#allocation6], 32768
    $region37: #{tpu_custom_call.1} parent=1 // pred_fallthru
      _
    %v56 = vld [vmem:[%s0] sm:$0xff]
    %v57 = vld [vmem:[%s0 + $0x8] sm:$0xff]
    %v58 = vld [vmem:[%s0 + $0x10] sm:$0xff]
    %v59 = vld [vmem:[%s0 + $0x18] sm:$0xff]
    %v60 = vld [vmem:[%s0 + $0x20] sm:$0xff]
    %v61 = vld [vmem:[%s0 + $0x28] sm:$0xff]
    %v62 = vld [vmem:[%s0 + $0x30] sm:$0xff]
    %v63 = vpack.c.bf16 %v56, %v56
    %v64 = vpack.c.bf16 %v57, %v57
    %v65 = vpack.c.bf16 %v58, %v58
    %v66 = vpack.c.bf16 %v59, %v59
    %v67 = vpack.c.bf16 %v60, %v60
    %v68 = vpack.c.bf16 %v61, %v61
    %v69 = vpack.c.bf16 %v62, %v62
    %v70 = vld [vmem:[#allocation2] sm:$0xff]
    %v71 = vld [vmem:[#allocation2 + $0x8] sm:$0xff]
    %v72 = vld [vmem:[#allocation2 + $0x10] sm:$0xff]
    %v73 = vld [vmem:[#allocation2 + $0x18] sm:$0xff]
    %v74 = vld [vmem:[#allocation2 + $0x20] sm:$0xff]
    %v75 = vld [vmem:[#allocation2 + $0x28] sm:$0xff]
    %v76 = vld [vmem:[#allocation2 + $0x30] sm:$0xff]
    %v77 = vld [vmem:[#allocation2 + $0x38] sm:$0xff]
    %v78 = vld [vmem:[#allocation2 + $0x40] sm:$0xff]
    %v79 = vld [vmem:[#allocation2 + $0x48] sm:$0xff]
    %v80 = vld [vmem:[#allocation2 + $0x50] sm:$0xff]
    %v81 = vld [vmem:[#allocation2 + $0x58] sm:$0xff]
    %v82 = vld [vmem:[#allocation2 + $0x60] sm:$0xff]
    %v83 = vld [vmem:[#allocation2 + $0x68] sm:$0xff]
    %v84 = vld [vmem:[#allocation2 + $0x70] sm:$0xff]
    %v85 = vld [vmem:[#allocation2 + $0x78] sm:$0xff]
    %v86 = vld [vmem:[#allocation2 + $0x80] sm:$0xff]
    %v87 = vld [vmem:[#allocation2 + $0x88] sm:$0xff]
    %v88 = vld [vmem:[#allocation2 + $0x90] sm:$0xff]
    %v89 = vld [vmem:[#allocation2 + $0x98] sm:$0xff]
    %v90 = vld [vmem:[#allocation2 + $0xa0] sm:$0xff]
    %v91 = vld [vmem:[#allocation2 + $0xa8] sm:$0xff]
    %v92 = vld [vmem:[#allocation2 + $0xb0] sm:$0xff]
    %v93 = vld [vmem:[#allocation2 + $0xb8] sm:$0xff]
    %v94 = vld [vmem:[#allocation2 + $0xc0] sm:$0xff]
    %v95 = vld [vmem:[#allocation2 + $0xc8] sm:$0xff]
    %v96 = vld [vmem:[#allocation2 + $0xd0] sm:$0xff]
    %v97 = vld [vmem:[#allocation2 + $0xd8] sm:$0xff]
    %v98 = vld [vmem:[#allocation2 + $0xe0] sm:$0xff]
    %v99 = vld [vmem:[#allocation2 + $0xe8] sm:$0xff]
    %v100 = vld [vmem:[#allocation2 + $0xf0] sm:$0xff]
    %v101 = vld [vmem:[#allocation2 + $0xf8] sm:$0xff]
    %v102 = vld [vmem:[#allocation2 + $0x100] sm:$0xff]
    %v103 = vld [vmem:[#allocation2 + $0x108] sm:$0xff]
    %v104 = vld [vmem:[#allocation2 + $0x110] sm:$0xff]
    %v105 = vld [vmem:[#allocation2 + $0x118] sm:$0xff]
    %v106 = vld [vmem:[#allocation2 + $0x120] sm:$0xff]
    %v107 = vld [vmem:[#allocation2 + $0x128] sm:$0xff]
    %v108 = vld [vmem:[#allocation2 + $0x130] sm:$0xff]
    %v109 = vld [vmem:[#allocation2 + $0x138] sm:$0xff]
    %v110 = vld [vmem:[#allocation2 + $0x140] sm:$0xff]
    %v111 = vld [vmem:[#allocation2 + $0x148] sm:$0xff]
    %v112 = vld [vmem:[#allocation2 + $0x150] sm:$0xff]
    %v113 = vld [vmem:[#allocation2 + $0x158] sm:$0xff]
    %v114 = vld [vmem:[#allocation2 + $0x160] sm:$0xff]
    %v115 = vld [vmem:[#allocation2 + $0x168] sm:$0xff]
    %v116 = vld [vmem:[#allocation2 + $0x170] sm:$0xff]
    %v117 = vld [vmem:[#allocation2 + $0x178] sm:$0xff]
    %v118 = vld [vmem:[#allocation2 + $0x180] sm:$0xff]
    %v119 = vld [vmem:[#allocation2 + $0x188] sm:$0xff]
    %v120 = vld [vmem:[#allocation2 + $0x190] sm:$0xff]
    %v121 = vld [vmem:[#allocation2 + $0x198] sm:$0xff]
    %v122 = vld [vmem:[#allocation2 + $0x1a0] sm:$0xff]
    %v123 = vld [vmem:[#allocation2 + $0x1a8] sm:$0xff]
    %v124 = vld [vmem:[#allocation2 + $0x1b0] sm:$0xff]
    %v125 = vld [vmem:[#allocation2 + $0x1b8] sm:$0xff]
    %v126 = vld [vmem:[#allocation2 + $0x1c0] sm:$0xff]
    %v127 = vld [vmem:[#allocation2 + $0x1c8] sm:$0xff]
    %v128 = vld [vmem:[#allocation2 + $0x1d0] sm:$0xff]
    %v129 = vld [vmem:[#allocation2 + $0x1d8] sm:$0xff]
    %v130 = vld [vmem:[#allocation2 + $0x1e0] sm:$0xff]
    %v131 = vld [vmem:[#allocation2 + $0x1e8] sm:$0xff]
    %v132 = vld [vmem:[#allocation2 + $0x1f0] sm:$0xff]
    %v133 = vld [vmem:[#allocation2 + $0x1f8] sm:$0xff]
    %v134 = vld [vmem:[#allocation2 + $0x200] sm:$0xff]
    %v135 = vld [vmem:[#allocation2 + $0x208] sm:$0xff]
    %v136 = vld [vmem:[#allocation2 + $0x210] sm:$0xff]
    %v137 = vld [vmem:[#allocation2 + $0x218] sm:$0xff]
    %v138 = vld [vmem:[#allocation2 + $0x220] sm:$0xff]
    %v139 = vld [vmem:[#allocation2 + $0x228] sm:$0xff]
    %v140 = vld [vmem:[#allocation2 + $0x230] sm:$0xff]
    %v141 = vld [vmem:[#allocation2 + $0x238] sm:$0xff]
    %v142 = vld [vmem:[#allocation2 + $0x240] sm:$0xff]
    %v143 = vld [vmem:[#allocation2 + $0x248] sm:$0xff]
    %v144 = vld [vmem:[#allocation2 + $0x250] sm:$0xff]
    %v145 = vld [vmem:[#allocation2 + $0x258] sm:$0xff]
    %v146 = vld [vmem:[#allocation2 + $0x260] sm:$0xff]
    %v147 = vld [vmem:[#allocation2 + $0x268] sm:$0xff]
    %v148 = vld [vmem:[#allocation2 + $0x270] sm:$0xff]
    %v149 = vld [vmem:[#allocation2 + $0x278] sm:$0xff]
    %v150 = vld [vmem:[#allocation2 + $0x280] sm:$0xff]
    %v151 = vld [vmem:[#allocation2 + $0x288] sm:$0xff]
    %v152 = vld [vmem:[#allocation2 + $0x290] sm:$0xff]
    %v153 = vld [vmem:[#allocation2 + $0x298] sm:$0xff]
    %v154 = vld [vmem:[#allocation2 + $0x2a0] sm:$0xff]
    %v155 = vld [vmem:[#allocation2 + $0x2a8] sm:$0xff]
    %v156 = vld [vmem:[#allocation2 + $0x2b0] sm:$0xff]
    %v157 = vld [vmem:[#allocation2 + $0x2b8] sm:$0xff]
    %v158 = vld [vmem:[#allocation2 + $0x2c0] sm:$0xff]
    %v159 = vld [vmem:[#allocation2 + $0x2c8] sm:$0xff]
    %v160 = vld [vmem:[#allocation2 + $0x2d0] sm:$0xff]
    %v161 = vld [vmem:[#allocation2 + $0x2d8] sm:$0xff]
    %v162 = vld [vmem:[#allocation2 + $0x2e0] sm:$0xff]
    %v163 = vld [vmem:[#allocation2 + $0x2e8] sm:$0xff]
    %v164 = vld [vmem:[#allocation2 + $0x2f0] sm:$0xff]
    %v165 = vld [vmem:[#allocation2 + $0x2f8] sm:$0xff]
    %v166 = vld [vmem:[#allocation2 + $0x300] sm:$0xff]
    %v167 = vld [vmem:[#allocation2 + $0x308] sm:$0xff]
    %v168 = vld [vmem:[#allocation2 + $0x310] sm:$0xff]
    %v169 = vld [vmem:[#allocation2 + $0x318] sm:$0xff]
    %v170 = vld [vmem:[#allocation2 + $0x320] sm:$0xff]
    %v171 = vld [vmem:[#allocation2 + $0x328] sm:$0xff]
    %v172 = vld [vmem:[#allocation2 + $0x330] sm:$0xff]
    %v173 = vld [vmem:[#allocation2 + $0x338] sm:$0xff]
    %v174 = vld [vmem:[#allocation2 + $0x340] sm:$0xff]
    %v175 = vld [vmem:[#allocation2 + $0x348] sm:$0xff]
    %v176 = vld [vmem:[#allocation2 + $0x350] sm:$0xff]
    %v177 = vld [vmem:[#allocation2 + $0x358] sm:$0xff]
    %v178 = vld [vmem:[#allocation2 + $0x360] sm:$0xff]
    %v179 = vld [vmem:[#allocation2 + $0x368] sm:$0xff]
    %v180 = vld [vmem:[#allocation2 + $0x370] sm:$0xff]
    %v181 = vld [vmem:[#allocation2 + $0x378] sm:$0xff]
    %v182 = vld [vmem:[#allocation2 + $0x380] sm:$0xff]
    %v183 = vld [vmem:[#allocation2 + $0x388] sm:$0xff]
    %v184 = vld [vmem:[#allocation2 + $0x390] sm:$0xff]
    %v185 = vld [vmem:[#allocation2 + $0x398] sm:$0xff]
    %v186 = vld [vmem:[#allocation2 + $0x3a0] sm:$0xff]
    %v187 = vld [vmem:[#allocation2 + $0x3a8] sm:$0xff]
    %v188 = vld [vmem:[#allocation2 + $0x3b0] sm:$0xff]
    %v189 = vld [vmem:[#allocation2 + $0x3b8] sm:$0xff]
    %v190 = vld [vmem:[#allocation2 + $0x3c0] sm:$0xff]
    %v191 = vld [vmem:[#allocation2 + $0x3c8] sm:$0xff]
    %v192 = vld [vmem:[#allocation2 + $0x3d0] sm:$0xff]
    %v193 = vld [vmem:[#allocation2 + $0x3d8] sm:$0xff]
    %v194 = vld [vmem:[#allocation2 + $0x3e0] sm:$0xff]
    %v195 = vld [vmem:[#allocation2 + $0x3e8] sm:$0xff]
    %v196 = vld [vmem:[#allocation2 + $0x3f0] sm:$0xff]
    %v197 = vld [vmem:[#allocation2 + $0x3f8] sm:$0xff]
    %v198 = vld [vmem:[#allocation2 + $0x400] sm:$0xff]
    %v199 = vld [vmem:[#allocation2 + $0x408] sm:$0xff]
    %v200 = vld [vmem:[#allocation2 + $0x410] sm:$0xff]
    %v201 = vld [vmem:[#allocation2 + $0x418] sm:$0xff]
    %v202 = vld [vmem:[#allocation2 + $0x420] sm:$0xff]
    %v203 = vld [vmem:[#allocation2 + $0x428] sm:$0xff]
    %v204 = vld [vmem:[#allocation2 + $0x430] sm:$0xff]
    %v205 = vld [vmem:[#allocation2 + $0x438] sm:$0xff]
    %v206 = vld [vmem:[#allocation2 + $0x440] sm:$0xff]
    %v207 = vld [vmem:[#allocation2 + $0x448] sm:$0xff]
    %v208 = vld [vmem:[#allocation2 + $0x450] sm:$0xff]
    %v209 = vld [vmem:[#allocation2 + $0x458] sm:$0xff]
    %v210 = vld [vmem:[#allocation2 + $0x460] sm:$0xff]
    %v211 = vld [vmem:[#allocation2 + $0x468] sm:$0xff]
    %v212 = vld [vmem:[#allocation2 + $0x470] sm:$0xff]
    %v213 = vld [vmem:[#allocation2 + $0x478] sm:$0xff]
    %v214 = vld [vmem:[#allocation2 + $0x480] sm:$0xff]
    %v215 = vld [vmem:[#allocation2 + $0x488] sm:$0xff]
    %v216 = vld [vmem:[#allocation2 + $0x490] sm:$0xff]
    %v217 = vld [vmem:[#allocation2 + $0x498] sm:$0xff]
    %v218 = vld [vmem:[#allocation2 + $0x4a0] sm:$0xff]
    %v219 = vld [vmem:[#allocation2 + $0x4a8] sm:$0xff]
    %v220 = vld [vmem:[#allocation2 + $0x4b0] sm:$0xff]
    %v221 = vld [vmem:[#allocation2 + $0x4b8] sm:$0xff]
    %v222 = vld [vmem:[#allocation2 + $0x4c0] sm:$0xff]
    %v223 = vld [vmem:[#allocation2 + $0x4c8] sm:$0xff]
    %v224 = vld [vmem:[#allocation2 + $0x4d0] sm:$0xff]
    %v225 = vld [vmem:[#allocation2 + $0x4d8] sm:$0xff]
    %v226 = vld [vmem:[#allocation2 + $0x4e0] sm:$0xff]
    %v227 = vld [vmem:[#allocation2 + $0x4e8] sm:$0xff]
    %v228 = vld [vmem:[#allocation2 + $0x4f0] sm:$0xff]
    %v229 = vld [vmem:[#allocation2 + $0x4f8] sm:$0xff]
    %v230 = vld [vmem:[#allocation2 + $0x500] sm:$0xff]
    %v231 = vld [vmem:[#allocation2 + $0x508] sm:$0xff]
    %v232 = vld [vmem:[#allocation2 + $0x510] sm:$0xff]
    %v233 = vld [vmem:[#allocation2 + $0x518] sm:$0xff]
    %v234 = vld [vmem:[#allocation2 + $0x520] sm:$0xff]
    %v235 = vld [vmem:[#allocation2 + $0x528] sm:$0xff]
    %v236 = vld [vmem:[#allocation2 + $0x530] sm:$0xff]
    %v237 = vld [vmem:[#allocation2 + $0x538] sm:$0xff]
    %v238 = vld [vmem:[#allocation2 + $0x540] sm:$0xff]
    %v239 = vld [vmem:[#allocation2 + $0x548] sm:$0xff]
    %v240 = vld [vmem:[#allocation2 + $0x550] sm:$0xff]
    %v241 = vld [vmem:[#allocation2 + $0x558] sm:$0xff]
    %v242 = vld [vmem:[#allocation2 + $0x560] sm:$0xff]
    %v243 = vld [vmem:[#allocation2 + $0x568] sm:$0xff]
    %v244 = vld [vmem:[#allocation2 + $0x570] sm:$0xff]
    %v245 = vld [vmem:[#allocation2 + $0x578] sm:$0xff]
    %v246 = vld [vmem:[#allocation2 + $0x580] sm:$0xff]
    %v247 = vld [vmem:[#allocation2 + $0x588] sm:$0xff]
    %v248 = vld [vmem:[#allocation2 + $0x590] sm:$0xff]
    %v249 = vld [vmem:[#allocation2 + $0x598] sm:$0xff]
    %v250 = vld [vmem:[#allocation2 + $0x5a0] sm:$0xff]
    %v251 = vld [vmem:[#allocation2 + $0x5a8] sm:$0xff]
    %v252 = vld [vmem:[#allocation2 + $0x5b0] sm:$0xff]
    %v253 = vld [vmem:[#allocation2 + $0x5b8] sm:$0xff]
    %v254 = vld [vmem:[#allocation2 + $0x5c0] sm:$0xff]
    %v255 = vld [vmem:[#allocation2 + $0x5c8] sm:$0xff]
    %v256 = vld [vmem:[#allocation2 + $0x5d0] sm:$0xff]
    %v257 = vld [vmem:[#allocation2 + $0x5d8] sm:$0xff]
    %v258 = vld [vmem:[#allocation2 + $0x5e0] sm:$0xff]
    %v259 = vld [vmem:[#allocation2 + $0x5e8] sm:$0xff]
    %v260 = vld [vmem:[#allocation2 + $0x5f0] sm:$0xff]
    %v261 = vld [vmem:[#allocation2 + $0x5f8] sm:$0xff]
    %v262 = vld [vmem:[#allocation2 + $0x600] sm:$0xff]
    %v263 = vld [vmem:[#allocation2 + $0x608] sm:$0xff]
    %v264 = vld [vmem:[#allocation2 + $0x610] sm:$0xff]
    %v265 = vld [vmem:[#allocation2 + $0x618] sm:$0xff]
    %v266 = vld [vmem:[%s2] sm:$0xf]
    %v268 = vlaneseq
    %v269 = vshrl.u32 %v268, 7
    %v270 = vsub.s32 0, %v269
    %v271 = vrot.slane %v266, %v270
    %v272 = vlaneseq
    %v273 = vshrl.u32 %v272, 7
    %v274 = vsub.s32 1, %v273
    %v275 = vrot.slane %v266, %v274
    %v276 = vlaneseq
    %v277 = vshrl.u32 %v276, 7
    %v278 = vsub.s32 2, %v277
    %v279 = vrot.slane %v266, %v278
    %v280 = vlaneseq
    %v281 = vshrl.u32 %v280, 7
    %v282 = vsub.s32 3, %v281
    %v283 = vrot.slane %v266, %v282
    %v484 = vunpack.c.l.b16 %v70
    %v485 = vunpack.c.h.b16 %v70
    %v486 = vunpack.c.l.b16 %v71
    %v487 = vunpack.c.h.b16 %v71
    %v488 = vunpack.c.l.b16 %v72
    %v489 = vunpack.c.h.b16 %v72
    %v490 = vunpack.c.l.b16 %v73
    %v491 = vunpack.c.h.b16 %v73
    %v492 = vunpack.c.l.b16 %v74
    %v493 = vunpack.c.h.b16 %v74
    %v494 = vunpack.c.l.b16 %v75
    %v495 = vunpack.c.h.b16 %v75
    %v496 = vunpack.c.l.b16 %v76
    %v497 = vunpack.c.h.b16 %v76
    %v498 = vunpack.c.l.b16 %v77
    %v499 = vunpack.c.h.b16 %v77
    %v500 = vunpack.c.l.b16 %v78
    %v501 = vunpack.c.h.b16 %v78
    %v502 = vunpack.c.l.b16 %v79
    %v503 = vunpack.c.h.b16 %v79
    %v504 = vunpack.c.l.b16 %v80
    %v505 = vunpack.c.h.b16 %v80
    %v506 = vunpack.c.l.b16 %v81
    %v507 = vunpack.c.h.b16 %v81
    %v508 = vunpack.c.l.b16 %v82
    %v509 = vunpack.c.h.b16 %v82
    %v510 = vunpack.c.l.b16 %v83
    %v511 = vunpack.c.h.b16 %v83
    %v512 = vunpack.c.l.b16 %v84
    %v513 = vunpack.c.h.b16 %v84
    %v514 = vunpack.c.l.b16 %v85
    %v515 = vunpack.c.h.b16 %v85
    %v516 = vunpack.c.l.b16 %v86
    %v517 = vunpack.c.h.b16 %v86
    %v518 = vunpack.c.l.b16 %v87
    %v519 = vunpack.c.h.b16 %v87
    %v520 = vunpack.c.l.b16 %v88
    %v521 = vunpack.c.h.b16 %v88
    %v522 = vunpack.c.l.b16 %v89
    %v523 = vunpack.c.h.b16 %v89
    %v524 = vunpack.c.l.b16 %v90
    %v525 = vunpack.c.h.b16 %v90
    %v526 = vunpack.c.l.b16 %v91
    %v527 = vunpack.c.h.b16 %v91
    %v528 = vunpack.c.l.b16 %v92
    %v529 = vunpack.c.h.b16 %v92
    %v530 = vunpack.c.l.b16 %v93
    %v531 = vunpack.c.h.b16 %v93
    %v532 = vunpack.c.l.b16 %v94
    %v533 = vunpack.c.h.b16 %v94
    %v534 = vunpack.c.l.b16 %v95
    %v535 = vunpack.c.h.b16 %v95
    %v536 = vunpack.c.l.b16 %v96
    %v537 = vunpack.c.h.b16 %v96
    %v538 = vunpack.c.l.b16 %v97
    %v539 = vunpack.c.h.b16 %v97
    %v540 = vunpack.c.l.b16 %v98
    %v541 = vunpack.c.h.b16 %v98
    %v542 = vunpack.c.l.b16 %v99
    %v543 = vunpack.c.h.b16 %v99
    %v544 = vunpack.c.l.b16 %v100
    %v545 = vunpack.c.h.b16 %v100
    %v546 = vunpack.c.l.b16 %v101
    %v547 = vunpack.c.h.b16 %v101
    %v548 = vunpack.c.l.b16 %v102
    %v549 = vunpack.c.h.b16 %v102
    %v550 = vunpack.c.l.b16 %v103
    %v551 = vunpack.c.h.b16 %v103
    %v552 = vunpack.c.l.b16 %v104
    %v553 = vunpack.c.h.b16 %v104
    %v554 = vunpack.c.l.b16 %v105
    %v555 = vunpack.c.h.b16 %v105
    %v556 = vunpack.c.l.b16 %v106
    %v557 = vunpack.c.h.b16 %v106
    %v558 = vunpack.c.l.b16 %v107
    %v559 = vunpack.c.h.b16 %v107
    %v560 = vunpack.c.l.b16 %v108
    %v561 = vunpack.c.h.b16 %v108
    %v562 = vunpack.c.l.b16 %v109
    %v563 = vunpack.c.h.b16 %v109
    %v564 = vunpack.c.l.b16 %v110
    %v565 = vunpack.c.h.b16 %v110
    %v566 = vunpack.c.l.b16 %v111
    %v567 = vunpack.c.h.b16 %v111
    %v568 = vunpack.c.l.b16 %v112
    %v569 = vunpack.c.h.b16 %v112
    %v570 = vunpack.c.l.b16 %v113
    %v571 = vunpack.c.h.b16 %v113
    %v572 = vunpack.c.l.b16 %v114
    %v573 = vunpack.c.h.b16 %v114
    %v574 = vunpack.c.l.b16 %v115
    %v575 = vunpack.c.h.b16 %v115
    %v576 = vunpack.c.l.b16 %v116
    %v577 = vunpack.c.h.b16 %v116
    %v578 = vunpack.c.l.b16 %v117
    %v579 = vunpack.c.h.b16 %v117
    %v580 = vunpack.c.l.b16 %v118
    %v581 = vunpack.c.h.b16 %v118
    %v582 = vunpack.c.l.b16 %v119
    %v583 = vunpack.c.h.b16 %v119
    %v584 = vunpack.c.l.b16 %v120
    %v585 = vunpack.c.h.b16 %v120
    %v586 = vunpack.c.l.b16 %v121
    %v587 = vunpack.c.h.b16 %v121
    %v588 = vunpack.c.l.b16 %v122
    %v589 = vunpack.c.h.b16 %v122
    %v590 = vunpack.c.l.b16 %v123
    %v591 = vunpack.c.h.b16 %v123
    %v592 = vunpack.c.l.b16 %v124
    %v593 = vunpack.c.h.b16 %v124
    %v594 = vunpack.c.l.b16 %v125
    %v595 = vunpack.c.h.b16 %v125
    %v596 = vunpack.c.l.b16 %v126
    %v597 = vunpack.c.h.b16 %v126
    %v598 = vunpack.c.l.b16 %v127
    %v599 = vunpack.c.h.b16 %v127
    %v600 = vunpack.c.l.b16 %v128
    %v601 = vunpack.c.h.b16 %v128
    %v602 = vunpack.c.l.b16 %v129
    %v603 = vunpack.c.h.b16 %v129
    %v604 = vunpack.c.l.b16 %v130
    %v605 = vunpack.c.h.b16 %v130
    %v606 = vunpack.c.l.b16 %v131
    %v607 = vunpack.c.h.b16 %v131
    %v608 = vunpack.c.l.b16 %v132
    %v609 = vunpack.c.h.b16 %v132
    %v610 = vunpack.c.l.b16 %v133
    %v611 = vunpack.c.h.b16 %v133
    %v612 = vunpack.c.l.b16 %v134
    %v613 = vunpack.c.h.b16 %v134
    %v614 = vunpack.c.l.b16 %v135
    %v615 = vunpack.c.h.b16 %v135
    %v616 = vunpack.c.l.b16 %v136
    %v617 = vunpack.c.h.b16 %v136
    %v618 = vunpack.c.l.b16 %v137
    %v619 = vunpack.c.h.b16 %v137
    %v620 = vunpack.c.l.b16 %v138
    %v621 = vunpack.c.h.b16 %v138
    %v622 = vunpack.c.l.b16 %v139
    %v623 = vunpack.c.h.b16 %v139
    %v624 = vunpack.c.l.b16 %v140
    %v625 = vunpack.c.h.b16 %v140
    %v626 = vunpack.c.l.b16 %v141
    %v627 = vunpack.c.h.b16 %v141
    %v628 = vunpack.c.l.b16 %v142
    %v629 = vunpack.c.h.b16 %v142
    %v630 = vunpack.c.l.b16 %v143
    %v631 = vunpack.c.h.b16 %v143
    %v632 = vunpack.c.l.b16 %v144
    %v633 = vunpack.c.h.b16 %v144
    %v634 = vunpack.c.l.b16 %v145
    %v635 = vunpack.c.h.b16 %v145
    %v636 = vunpack.c.l.b16 %v146
    %v637 = vunpack.c.h.b16 %v146
    %v638 = vunpack.c.l.b16 %v147
    %v639 = vunpack.c.h.b16 %v147
    %v640 = vunpack.c.l.b16 %v148
    %v641 = vunpack.c.h.b16 %v148
    %v642 = vunpack.c.l.b16 %v149
    %v643 = vunpack.c.h.b16 %v149
    %v644 = vunpack.c.l.b16 %v150
    %v645 = vunpack.c.h.b16 %v150
    %v646 = vunpack.c.l.b16 %v151
    %v647 = vunpack.c.h.b16 %v151
    %v648 = vunpack.c.l.b16 %v152
    %v649 = vunpack.c.h.b16 %v152
    %v650 = vunpack.c.l.b16 %v153
    %v651 = vunpack.c.h.b16 %v153
    %v652 = vunpack.c.l.b16 %v154
    %v653 = vunpack.c.h.b16 %v154
    %v654 = vunpack.c.l.b16 %v155
    %v655 = vunpack.c.h.b16 %v155
    %v656 = vunpack.c.l.b16 %v156
    %v657 = vunpack.c.h.b16 %v156
    %v658 = vunpack.c.l.b16 %v157
    %v659 = vunpack.c.h.b16 %v157
    %v660 = vunpack.c.l.b16 %v158
    %v661 = vunpack.c.h.b16 %v158
    %v662 = vunpack.c.l.b16 %v159
    %v663 = vunpack.c.h.b16 %v159
    %v664 = vunpack.c.l.b16 %v160
    %v665 = vunpack.c.h.b16 %v160
    %v666 = vunpack.c.l.b16 %v161
    %v667 = vunpack.c.h.b16 %v161
    %v668 = vunpack.c.l.b16 %v162
    %v669 = vunpack.c.h.b16 %v162
    %v670 = vunpack.c.l.b16 %v163
    %v671 = vunpack.c.h.b16 %v163
    %v672 = vunpack.c.l.b16 %v164
    %v673 = vunpack.c.h.b16 %v164
    %v674 = vunpack.c.l.b16 %v165
    %v675 = vunpack.c.h.b16 %v165
    %v676 = vunpack.c.l.b16 %v166
    %v677 = vunpack.c.h.b16 %v166
    %v678 = vunpack.c.l.b16 %v167
    %v679 = vunpack.c.h.b16 %v167
    %v680 = vunpack.c.l.b16 %v168
    %v681 = vunpack.c.h.b16 %v168
    %v682 = vunpack.c.l.b16 %v169
    %v683 = vunpack.c.h.b16 %v169
    %v684 = vunpack.c.l.b16 %v170
    %v685 = vunpack.c.h.b16 %v170
    %v686 = vunpack.c.l.b16 %v171
    %v687 = vunpack.c.h.b16 %v171
    %v688 = vunpack.c.l.b16 %v172
    %v689 = vunpack.c.h.b16 %v172
    %v690 = vunpack.c.l.b16 %v173
    %v691 = vunpack.c.h.b16 %v173
    %v692 = vunpack.c.l.b16 %v174
    %v693 = vunpack.c.h.b16 %v174
    %v694 = vunpack.c.l.b16 %v175
    %v695 = vunpack.c.h.b16 %v175
    %v696 = vunpack.c.l.b16 %v176
    %v697 = vunpack.c.h.b16 %v176
    %v698 = vunpack.c.l.b16 %v177
    %v699 = vunpack.c.h.b16 %v177
    %v700 = vunpack.c.l.b16 %v178
    %v701 = vunpack.c.h.b16 %v178
    %v702 = vunpack.c.l.b16 %v179
    %v703 = vunpack.c.h.b16 %v179
    %v704 = vunpack.c.l.b16 %v180
    %v705 = vunpack.c.h.b16 %v180
    %v706 = vunpack.c.l.b16 %v181
    %v707 = vunpack.c.h.b16 %v181
    %v708 = vunpack.c.l.b16 %v182
    %v709 = vunpack.c.h.b16 %v182
    %v710 = vunpack.c.l.b16 %v183
    %v711 = vunpack.c.h.b16 %v183
    %v712 = vunpack.c.l.b16 %v184
    %v713 = vunpack.c.h.b16 %v184
    %v714 = vunpack.c.l.b16 %v185
    %v715 = vunpack.c.h.b16 %v185
    %v716 = vunpack.c.l.b16 %v186
    %v717 = vunpack.c.h.b16 %v186
    %v718 = vunpack.c.l.b16 %v187
    %v719 = vunpack.c.h.b16 %v187
    %v720 = vunpack.c.l.b16 %v188
    %v721 = vunpack.c.h.b16 %v188
    %v722 = vunpack.c.l.b16 %v189
    %v723 = vunpack.c.h.b16 %v189
    %v724 = vunpack.c.l.b16 %v190
    %v725 = vunpack.c.h.b16 %v190
    %v726 = vunpack.c.l.b16 %v191
    %v727 = vunpack.c.h.b16 %v191
    %v728 = vunpack.c.l.b16 %v192
    %v729 = vunpack.c.h.b16 %v192
    %v730 = vunpack.c.l.b16 %v193
    %v731 = vunpack.c.h.b16 %v193
    %v732 = vunpack.c.l.b16 %v194
    %v733 = vunpack.c.h.b16 %v194
    %v734 = vunpack.c.l.b16 %v195
    %v735 = vunpack.c.h.b16 %v195
    %v736 = vunpack.c.l.b16 %v196
    %v737 = vunpack.c.h.b16 %v196
    %v738 = vunpack.c.l.b16 %v197
    %v739 = vunpack.c.h.b16 %v197
    %v740 = vunpack.c.l.b16 %v198
    %v741 = vunpack.c.h.b16 %v198
    %v742 = vunpack.c.l.b16 %v199
    %v743 = vunpack.c.h.b16 %v199
    %v744 = vunpack.c.l.b16 %v200
    %v745 = vunpack.c.h.b16 %v200
    %v746 = vunpack.c.l.b16 %v201
    %v747 = vunpack.c.h.b16 %v201
    %v748 = vunpack.c.l.b16 %v202
    %v749 = vunpack.c.h.b16 %v202
    %v750 = vunpack.c.l.b16 %v203
    %v751 = vunpack.c.h.b16 %v203
    %v752 = vunpack.c.l.b16 %v204
    %v753 = vunpack.c.h.b16 %v204
    %v754 = vunpack.c.l.b16 %v205
    %v755 = vunpack.c.h.b16 %v205
    %v756 = vunpack.c.l.b16 %v206
    %v757 = vunpack.c.h.b16 %v206
    %v758 = vunpack.c.l.b16 %v207
    %v759 = vunpack.c.h.b16 %v207
    %v760 = vunpack.c.l.b16 %v208
    %v761 = vunpack.c.h.b16 %v208
    %v762 = vunpack.c.l.b16 %v209
    %v763 = vunpack.c.h.b16 %v209
    %v764 = vunpack.c.l.b16 %v210
    %v765 = vunpack.c.h.b16 %v210
    %v766 = vunpack.c.l.b16 %v211
    %v767 = vunpack.c.h.b16 %v211
    %v768 = vunpack.c.l.b16 %v212
    %v769 = vunpack.c.h.b16 %v212
    %v770 = vunpack.c.l.b16 %v213
    %v771 = vunpack.c.h.b16 %v213
    %v772 = vunpack.c.l.b16 %v214
    %v773 = vunpack.c.h.b16 %v214
    %v774 = vunpack.c.l.b16 %v215
    %v775 = vunpack.c.h.b16 %v215
    %v776 = vunpack.c.l.b16 %v216
    %v777 = vunpack.c.h.b16 %v216
    %v778 = vunpack.c.l.b16 %v217
    %v779 = vunpack.c.h.b16 %v217
    %v780 = vunpack.c.l.b16 %v218
    %v781 = vunpack.c.h.b16 %v218
    %v782 = vunpack.c.l.b16 %v219
    %v783 = vunpack.c.h.b16 %v219
    %v784 = vunpack.c.l.b16 %v220
    %v785 = vunpack.c.h.b16 %v220
    %v786 = vunpack.c.l.b16 %v221
    %v787 = vunpack.c.h.b16 %v221
    %v788 = vunpack.c.l.b16 %v222
    %v789 = vunpack.c.h.b16 %v222
    %v790 = vunpack.c.l.b16 %v223
    %v791 = vunpack.c.h.b16 %v223
    %v792 = vunpack.c.l.b16 %v224
    %v793 = vunpack.c.h.b16 %v224
    %v794 = vunpack.c.l.b16 %v225
    %v795 = vunpack.c.h.b16 %v225
    %v796 = vunpack.c.l.b16 %v226
    %v797 = vunpack.c.h.b16 %v226
    %v798 = vunpack.c.l.b16 %v227
    %v799 = vunpack.c.h.b16 %v227
    %v800 = vunpack.c.l.b16 %v228
    %v801 = vunpack.c.h.b16 %v228
    %v802 = vunpack.c.l.b16 %v229
    %v803 = vunpack.c.h.b16 %v229
    %v804 = vunpack.c.l.b16 %v230
    %v805 = vunpack.c.h.b16 %v230
    %v806 = vunpack.c.l.b16 %v231
    %v807 = vunpack.c.h.b16 %v231
    %v808 = vunpack.c.l.b16 %v232
    %v809 = vunpack.c.h.b16 %v232
    %v810 = vunpack.c.l.b16 %v233
    %v811 = vunpack.c.h.b16 %v233
    %v812 = vunpack.c.l.b16 %v234
    %v813 = vunpack.c.h.b16 %v234
    %v814 = vunpack.c.l.b16 %v235
    %v815 = vunpack.c.h.b16 %v235
    %v816 = vunpack.c.l.b16 %v236
    %v817 = vunpack.c.h.b16 %v236
    %v818 = vunpack.c.l.b16 %v237
    %v819 = vunpack.c.h.b16 %v237
    %v820 = vunpack.c.l.b16 %v238
    %v821 = vunpack.c.h.b16 %v238
    %v822 = vunpack.c.l.b16 %v239
    %v823 = vunpack.c.h.b16 %v239
    %v824 = vunpack.c.l.b16 %v240
    %v825 = vunpack.c.h.b16 %v240
    %v826 = vunpack.c.l.b16 %v241
    %v827 = vunpack.c.h.b16 %v241
    %v828 = vunpack.c.l.b16 %v242
    %v829 = vunpack.c.h.b16 %v242
    %v830 = vunpack.c.l.b16 %v243
    %v831 = vunpack.c.h.b16 %v243
    %v832 = vunpack.c.l.b16 %v244
    %v833 = vunpack.c.h.b16 %v244
    %v834 = vunpack.c.l.b16 %v245
    %v835 = vunpack.c.h.b16 %v245
    %v836 = vunpack.c.l.b16 %v246
    %v837 = vunpack.c.h.b16 %v246
    %v838 = vunpack.c.l.b16 %v247
    %v839 = vunpack.c.h.b16 %v247
    %v840 = vunpack.c.l.b16 %v248
    %v841 = vunpack.c.h.b16 %v248
    %v842 = vunpack.c.l.b16 %v249
    %v843 = vunpack.c.h.b16 %v249
    %v844 = vunpack.c.l.b16 %v250
    %v845 = vunpack.c.h.b16 %v250
    %v846 = vunpack.c.l.b16 %v251
    %v847 = vunpack.c.h.b16 %v251
    %v848 = vunpack.c.l.b16 %v252
    %v849 = vunpack.c.h.b16 %v252
    %v850 = vunpack.c.l.b16 %v253
    %v851 = vunpack.c.h.b16 %v253
    %v852 = vunpack.c.l.b16 %v254
    %v853 = vunpack.c.h.b16 %v254
    %v854 = vunpack.c.l.b16 %v255
    %v855 = vunpack.c.h.b16 %v255
    %v856 = vunpack.c.l.b16 %v256
    %v857 = vunpack.c.h.b16 %v256
    %v858 = vunpack.c.l.b16 %v257
    %v859 = vunpack.c.h.b16 %v257
    %v860 = vunpack.c.l.b16 %v258
    %v861 = vunpack.c.h.b16 %v258
    %v862 = vunpack.c.l.b16 %v259
    %v863 = vunpack.c.h.b16 %v259
    %v864 = vunpack.c.l.b16 %v260
    %v865 = vunpack.c.h.b16 %v260
    %v866 = vunpack.c.l.b16 %v261
    %v867 = vunpack.c.h.b16 %v261
    %v868 = vunpack.c.l.b16 %v262
    %v869 = vunpack.c.h.b16 %v262
    %v870 = vunpack.c.l.b16 %v263
    %v871 = vunpack.c.h.b16 %v263
    %v872 = vunpack.c.l.b16 %v264
    %v873 = vunpack.c.h.b16 %v264
    %v874 = vunpack.c.l.b16 %v265
    %v875 = vunpack.c.h.b16 %v265
    %v876 = vpack.c.b16 %v488, %v484
    %v877 = vpack.c.b16 %v489, %v485
    %v878 = vpack.c.b16 %v490, %v486
    %v879 = vpack.c.b16 %v491, %v487
    %v880 = vpack.c.b16 %v496, %v492
    %v881 = vpack.c.b16 %v497, %v493
    %v882 = vpack.c.b16 %v498, %v494
    %v883 = vpack.c.b16 %v499, %v495
    %v884 = vpack.c.b16 %v504, %v500
    %v885 = vpack.c.b16 %v505, %v501
    %v886 = vpack.c.b16 %v506, %v502
    %v887 = vpack.c.b16 %v507, %v503
    %v888 = vpack.c.b16 %v512, %v508
    %v889 = vpack.c.b16 %v513, %v509
    %v890 = vpack.c.b16 %v514, %v510
    %v891 = vpack.c.b16 %v515, %v511
    %v892 = vpack.c.b16 %v520, %v516
    %v893 = vpack.c.b16 %v521, %v517
    %v894 = vpack.c.b16 %v522, %v518
    %v895 = vpack.c.b16 %v523, %v519
    %v896 = vpack.c.b16 %v528, %v524
    %v897 = vpack.c.b16 %v529, %v525
    %v898 = vpack.c.b16 %v530, %v526
    %v899 = vpack.c.b16 %v531, %v527
    %v900 = vpack.c.b16 %v536, %v532
    %v901 = vpack.c.b16 %v537, %v533
    %v902 = vpack.c.b16 %v538, %v534
    %v903 = vpack.c.b16 %v539, %v535
    %v904 = vpack.c.b16 %v544, %v540
    %v905 = vpack.c.b16 %v545, %v541
    %v906 = vpack.c.b16 %v546, %v542
    %v907 = vpack.c.b16 %v547, %v543
    %v908 = vpack.c.b16 %v552, %v548
    %v909 = vpack.c.b16 %v553, %v549
    %v910 = vpack.c.b16 %v554, %v550
    %v911 = vpack.c.b16 %v555, %v551
    %v912 = vpack.c.b16 %v560, %v556
    %v913 = vpack.c.b16 %v561, %v557
    %v914 = vpack.c.b16 %v562, %v558
    %v915 = vpack.c.b16 %v563, %v559
    %v916 = vpack.c.b16 %v568, %v564
    %v917 = vpack.c.b16 %v569, %v565
    %v918 = vpack.c.b16 %v570, %v566
    %v919 = vpack.c.b16 %v571, %v567
    %v920 = vpack.c.b16 %v576, %v572
    %v921 = vpack.c.b16 %v577, %v573
    %v922 = vpack.c.b16 %v578, %v574
    %v923 = vpack.c.b16 %v579, %v575
    %v924 = vpack.c.b16 %v584, %v580
    %v925 = vpack.c.b16 %v585, %v581
    %v926 = vpack.c.b16 %v586, %v582
    %v927 = vpack.c.b16 %v587, %v583
    %v928 = vpack.c.b16 %v592, %v588
    %v929 = vpack.c.b16 %v593, %v589
    %v930 = vpack.c.b16 %v594, %v590
    %v931 = vpack.c.b16 %v595, %v591
    %v932 = vpack.c.b16 %v600, %v596
    %v933 = vpack.c.b16 %v601, %v597
    %v934 = vpack.c.b16 %v602, %v598
    %v935 = vpack.c.b16 %v603, %v599
    %v936 = vpack.c.b16 %v608, %v604
    %v937 = vpack.c.b16 %v609, %v605
    %v938 = vpack.c.b16 %v610, %v606
    %v939 = vpack.c.b16 %v611, %v607
    %v940 = vpack.c.b16 %v616, %v612
    %v941 = vpack.c.b16 %v617, %v613
    %v942 = vpack.c.b16 %v618, %v614
    %v943 = vpack.c.b16 %v619, %v615
    %v944 = vpack.c.b16 %v624, %v620
    %v945 = vpack.c.b16 %v625, %v621
    %v946 = vpack.c.b16 %v626, %v622
    %v947 = vpack.c.b16 %v627, %v623
    %v948 = vpack.c.b16 %v632, %v628
    %v949 = vpack.c.b16 %v633, %v629
    %v950 = vpack.c.b16 %v634, %v630
    %v951 = vpack.c.b16 %v635, %v631
    %v952 = vpack.c.b16 %v640, %v636
    %v953 = vpack.c.b16 %v641, %v637
    %v954 = vpack.c.b16 %v642, %v638
    %v955 = vpack.c.b16 %v643, %v639
    %v956 = vpack.c.b16 %v648, %v644
    %v957 = vpack.c.b16 %v649, %v645
    %v958 = vpack.c.b16 %v650, %v646
    %v959 = vpack.c.b16 %v651, %v647
    %v960 = vpack.c.b16 %v656, %v652
    %v961 = vpack.c.b16 %v657, %v653
    %v962 = vpack.c.b16 %v658, %v654
    %v963 = vpack.c.b16 %v659, %v655
    %v964 = vpack.c.b16 %v664, %v660
    %v965 = vpack.c.b16 %v665, %v661
    %v966 = vpack.c.b16 %v666, %v662
    %v967 = vpack.c.b16 %v667, %v663
    %v968 = vpack.c.b16 %v672, %v668
    %v969 = vpack.c.b16 %v673, %v669
    %v970 = vpack.c.b16 %v674, %v670
    %v971 = vpack.c.b16 %v675, %v671
    %v972 = vpack.c.b16 %v680, %v676
    %v973 = vpack.c.b16 %v681, %v677
    %v974 = vpack.c.b16 %v682, %v678
    %v975 = vpack.c.b16 %v683, %v679
    %v976 = vpack.c.b16 %v688, %v684
    %v977 = vpack.c.b16 %v689, %v685
    %v978 = vpack.c.b16 %v690, %v686
    %v979 = vpack.c.b16 %v691, %v687
    %v980 = vpack.c.b16 %v696, %v692
    %v981 = vpack.c.b16 %v697, %v693
    %v982 = vpack.c.b16 %v698, %v694
    %v983 = vpack.c.b16 %v699, %v695
    %v984 = vpack.c.b16 %v704, %v700
    %v985 = vpack.c.b16 %v705, %v701
    %v986 = vpack.c.b16 %v706, %v702
    %v987 = vpack.c.b16 %v707, %v703
    %v988 = vpack.c.b16 %v712, %v708
    %v989 = vpack.c.b16 %v713, %v709
    %v990 = vpack.c.b16 %v714, %v710
    %v991 = vpack.c.b16 %v715, %v711
    %v992 = vpack.c.b16 %v720, %v716
    %v993 = vpack.c.b16 %v721, %v717
    %v994 = vpack.c.b16 %v722, %v718
    %v995 = vpack.c.b16 %v723, %v719
    %v996 = vpack.c.b16 %v728, %v724
    %v997 = vpack.c.b16 %v729, %v725
    %v998 = vpack.c.b16 %v730, %v726
    %v999 = vpack.c.b16 %v731, %v727
    %v1000 = vpack.c.b16 %v736, %v732
    %v1001 = vpack.c.b16 %v737, %v733
    %v1002 = vpack.c.b16 %v738, %v734
    %v1003 = vpack.c.b16 %v739, %v735
    %v1004 = vpack.c.b16 %v744, %v740
    %v1005 = vpack.c.b16 %v745, %v741
    %v1006 = vpack.c.b16 %v746, %v742
    %v1007 = vpack.c.b16 %v747, %v743
    %v1008 = vpack.c.b16 %v752, %v748
    %v1009 = vpack.c.b16 %v753, %v749
    %v1010 = vpack.c.b16 %v754, %v750
    %v1011 = vpack.c.b16 %v755, %v751
    %v1012 = vpack.c.b16 %v760, %v756
    %v1013 = vpack.c.b16 %v761, %v757
    %v1014 = vpack.c.b16 %v762, %v758
    %v1015 = vpack.c.b16 %v763, %v759
    %v1016 = vpack.c.b16 %v768, %v764
    %v1017 = vpack.c.b16 %v769, %v765
    %v1018 = vpack.c.b16 %v770, %v766
    %v1019 = vpack.c.b16 %v771, %v767
    %v1020 = vpack.c.b16 %v776, %v772
    %v1021 = vpack.c.b16 %v777, %v773
    %v1022 = vpack.c.b16 %v778, %v774
    %v1023 = vpack.c.b16 %v779, %v775
    %v1024 = vpack.c.b16 %v784, %v780
    %v1025 = vpack.c.b16 %v785, %v781
    %v1026 = vpack.c.b16 %v786, %v782
    %v1027 = vpack.c.b16 %v787, %v783
    %v1028 = vpack.c.b16 %v792, %v788
    %v1029 = vpack.c.b16 %v793, %v789
    %v1030 = vpack.c.b16 %v794, %v790
    %v1031 = vpack.c.b16 %v795, %v791
    %v1032 = vpack.c.b16 %v800, %v796
    %v1033 = vpack.c.b16 %v801, %v797
    %v1034 = vpack.c.b16 %v802, %v798
    %v1035 = vpack.c.b16 %v803, %v799
    %v1036 = vpack.c.b16 %v808, %v804
    %v1037 = vpack.c.b16 %v809, %v805
    %v1038 = vpack.c.b16 %v810, %v806
    %v1039 = vpack.c.b16 %v811, %v807
    %v1040 = vpack.c.b16 %v816, %v812
    %v1041 = vpack.c.b16 %v817, %v813
    %v1042 = vpack.c.b16 %v818, %v814
    %v1043 = vpack.c.b16 %v819, %v815
    %v1044 = vpack.c.b16 %v824, %v820
    %v1045 = vpack.c.b16 %v825, %v821
    %v1046 = vpack.c.b16 %v826, %v822
    %v1047 = vpack.c.b16 %v827, %v823
    %v1048 = vpack.c.b16 %v832, %v828
    %v1049 = vpack.c.b16 %v833, %v829
    %v1050 = vpack.c.b16 %v834, %v830
    %v1051 = vpack.c.b16 %v835, %v831
    %v1052 = vpack.c.b16 %v840, %v836
    %v1053 = vpack.c.b16 %v841, %v837
    %v1054 = vpack.c.b16 %v842, %v838
    %v1055 = vpack.c.b16 %v843, %v839
    %v1056 = vpack.c.b16 %v848, %v844
    %v1057 = vpack.c.b16 %v849, %v845
    %v1058 = vpack.c.b16 %v850, %v846
    %v1059 = vpack.c.b16 %v851, %v847
    %v1060 = vpack.c.b16 %v856, %v852
    %v1061 = vpack.c.b16 %v857, %v853
    %v1062 = vpack.c.b16 %v858, %v854
    %v1063 = vpack.c.b16 %v859, %v855
    %v1064 = vpack.c.b16 %v864, %v860
    %v1065 = vpack.c.b16 %v865, %v861
    %v1066 = vpack.c.b16 %v866, %v862
    %v1067 = vpack.c.b16 %v867, %v863
    %v1068 = vpack.c.b16 %v872, %v868
    %v1069 = vpack.c.b16 %v873, %v869
    %v1070 = vpack.c.b16 %v874, %v870
    %v1071 = vpack.c.b16 %v875, %v871
    %vm1268 = vcmask 130048
    %v1270 = vsel %vm1268, %v69, 0
    %1272 = vmatprep.subr.bf16.mxu0 %v905
    %1273 = vmatpush1.bf16.msra.mxu0 %v904
    %1274 = vmatprep.subr.bf16.mxu0 %v901
    %1275 = vmatpush1.bf16.msra.mxu0 %v900
    %1276 = vmatprep.subr.bf16.mxu0 %v897
    %1277 = vmatpush1.bf16.msra.mxu0 %v896
    %1278 = vmatprep.subr.bf16.mxu0 %v893
    %1279 = vmatpush1.bf16.msra.mxu0 %v892
    %1280 = vmatprep.subr.bf16.mxu0 %v889
    %1281 = vmatpush1.bf16.msra.mxu0 %v888
    %1282 = vmatprep.subr.bf16.mxu0 %v885
    %1283 = vmatpush1.bf16.msra.mxu0 %v884
    %1284 = vmatprep.subr.bf16.mxu0 %v881
    %1285 = vmatpush1.bf16.msra.mxu0 %v880
    %1286 = vmatprep.subr.bf16.mxu0 %v877
    %1287 = vmatpush1.bf16.msra.mxu0 %v876
    %1288 = vmatprep.subr.bf16.mxu0 %v937
    %1289 = vmatpush2.bf16.msra.mxu0 %v936
    %1290 = vmatprep.subr.bf16.mxu0 %v933
    %1291 = vmatpush2.bf16.msra.mxu0 %v932
    %1292 = vmatprep.subr.bf16.mxu0 %v929
    %1293 = vmatpush2.bf16.msra.mxu0 %v928
    %1294 = vmatprep.subr.bf16.mxu0 %v925
    %1295 = vmatpush2.bf16.msra.mxu0 %v924
    %1296 = vmatprep.subr.bf16.mxu0 %v921
    %1297 = vmatpush2.bf16.msra.mxu0 %v920
    %1298 = vmatprep.subr.bf16.mxu0 %v917
    %1299 = vmatpush2.bf16.msra.mxu0 %v916
    %1300 = vmatprep.subr.bf16.mxu0 %v913
    %1301 = vmatpush2.bf16.msra.mxu0 %v912
    %1302 = vmatprep.subr.bf16.mxu0 %v909
    %1303 = vmatpush2.bf16.msra.mxu0 %v908
    %1304 = vmatprep.mubr.bf16.mxu0 %v64
    %1305 = vmatmul.mubr.bf16.gmra.mxu0 %v63
    %v1306 = vpop.f32.mrf.mxu0
    %v1307 = vadd.f32 %v271, %v1306
    %v1308 = vpop.f32.mrf.mxu0
    %v1309 = vadd.f32 %v275, %v1308
    %v1310 = vpop.f32.mrf.mxu0
    %v1311 = vpop.f32.mrf.mxu0
    %1312 = vdwg.mxu0
    %1313 = vmatprep.subr.bf16.mxu0 %v969
    %1314 = vmatpush1.bf16.msra.mxu0 %v968
    %1315 = vmatprep.subr.bf16.mxu0 %v965
    %1316 = vmatpush1.bf16.msra.mxu0 %v964
    %1317 = vmatprep.subr.bf16.mxu0 %v961
    %1318 = vmatpush1.bf16.msra.mxu0 %v960
    %1319 = vmatprep.subr.bf16.mxu0 %v957
    %1320 = vmatpush1.bf16.msra.mxu0 %v956
    %1321 = vmatprep.subr.bf16.mxu0 %v953
    %1322 = vmatpush1.bf16.msra.mxu0 %v952
    %1323 = vmatprep.subr.bf16.mxu0 %v949
    %1324 = vmatpush1.bf16.msra.mxu0 %v948
    %1325 = vmatprep.subr.bf16.mxu0 %v945
    %1326 = vmatpush1.bf16.msra.mxu0 %v944
    %1327 = vmatprep.subr.bf16.mxu0 %v941
    %1328 = vmatpush1.bf16.msra.mxu0 %v940
    %1329 = vmatprep.subr.bf16.mxu0 %v1001
    %1330 = vmatpush2.bf16.msra.mxu0 %v1000
    %1331 = vmatprep.subr.bf16.mxu0 %v997
    %1332 = vmatpush2.bf16.msra.mxu0 %v996
    %1333 = vmatprep.subr.bf16.mxu0 %v993
    %1334 = vmatpush2.bf16.msra.mxu0 %v992
    %1335 = vmatprep.subr.bf16.mxu0 %v989
    %1336 = vmatpush2.bf16.msra.mxu0 %v988
    %1337 = vmatprep.subr.bf16.mxu0 %v985
    %1338 = vmatpush2.bf16.msra.mxu0 %v984
    %1339 = vmatprep.subr.bf16.mxu0 %v981
    %1340 = vmatpush2.bf16.msra.mxu0 %v980
    %1341 = vmatprep.subr.bf16.mxu0 %v977
    %1342 = vmatpush2.bf16.msra.mxu0 %v976
    %1343 = vmatprep.subr.bf16.mxu0 %v973
    %1344 = vmatpush2.bf16.msra.mxu0 %v972
    %1345 = vmatprep.mubr.bf16.mxu0 %v66
    %1346 = vmatmul.mubr.bf16.gmra.mxu0 %v65
    %v1347 = vpop.f32.mrf.mxu0
    %v1348 = vadd.f32 %v1307, %v1347
    %v1349 = vpop.f32.mrf.mxu0
    %v1350 = vadd.f32 %v1309, %v1349
    %v1351 = vpop.f32.mrf.mxu0
    %v1352 = vpop.f32.mrf.mxu0
    %1353 = vdwg.mxu0
    %1354 = vmatprep.subr.bf16.mxu0 %v1033
    %1355 = vmatpush1.bf16.msra.mxu0 %v1032
    %1356 = vmatprep.subr.bf16.mxu0 %v1029
    %1357 = vmatpush1.bf16.msra.mxu0 %v1028
    %1358 = vmatprep.subr.bf16.mxu0 %v1025
    %1359 = vmatpush1.bf16.msra.mxu0 %v1024
    %1360 = vmatprep.subr.bf16.mxu0 %v1021
    %1361 = vmatpush1.bf16.msra.mxu0 %v1020
    %1362 = vmatprep.subr.bf16.mxu0 %v1017
    %1363 = vmatpush1.bf16.msra.mxu0 %v1016
    %1364 = vmatprep.subr.bf16.mxu0 %v1013
    %1365 = vmatpush1.bf16.msra.mxu0 %v1012
    %1366 = vmatprep.subr.bf16.mxu0 %v1009
    %1367 = vmatpush1.bf16.msra.mxu0 %v1008
    %1368 = vmatprep.subr.bf16.mxu0 %v1005
    %1369 = vmatpush1.bf16.msra.mxu0 %v1004
    %1370 = vmatprep.subr.bf16.mxu0 %v1065
    %1371 = vmatpush2.bf16.msra.mxu0 %v1064
    %1372 = vmatprep.subr.bf16.mxu0 %v1061
    %1373 = vmatpush2.bf16.msra.mxu0 %v1060
    %1374 = vmatprep.subr.bf16.mxu0 %v1057
    %1375 = vmatpush2.bf16.msra.mxu0 %v1056
    %1376 = vmatprep.subr.bf16.mxu0 %v1053
    %1377 = vmatpush2.bf16.msra.mxu0 %v1052
    %1378 = vmatprep.subr.bf16.mxu0 %v1049
    %1379 = vmatpush2.bf16.msra.mxu0 %v1048
    %1380 = vmatprep.subr.bf16.mxu0 %v1045
    %1381 = vmatpush2.bf16.msra.mxu0 %v1044
    %1382 = vmatprep.subr.bf16.mxu0 %v1041
    %1383 = vmatpush2.bf16.msra.mxu0 %v1040
    %1384 = vmatprep.subr.bf16.mxu0 %v1037
    %1385 = vmatpush2.bf16.msra.mxu0 %v1036
    %1386 = vmatprep.mubr.bf16.mxu0 %v68
    %1387 = vmatmul.mubr.bf16.gmra.mxu0 %v67
    %v1388 = vpop.f32.mrf.mxu0
    %v1389 = vadd.f32 %v1348, %v1388
    %v1390 = vpop.f32.mrf.mxu0
    %v1391 = vadd.f32 %v1350, %v1390
    %v1392 = vpop.f32.mrf.mxu0
    %v1393 = vpop.f32.mrf.mxu0
    %1394 = vdwg.mxu0
    %1395 = vmatprep.subr.bf16.mxu0 0
    %1396 = vmatpush1.bf16.msra.mxu0 0
    %1397 = vmatprep.subr.bf16.mxu0 0
    %1398 = vmatpush1.bf16.msra.mxu0 0
    %1399 = vmatprep.subr.bf16.mxu0 0
    %1400 = vmatpush1.bf16.msra.mxu0 0
    %1401 = vmatprep.subr.bf16.mxu0 0
    %1402 = vmatpush1.bf16.msra.mxu0 0
    %1403 = vmatprep.subr.bf16.mxu0 0
    %1404 = vmatpush1.bf16.msra.mxu0 0
    %1405 = vmatprep.subr.bf16.mxu0 0
    %1406 = vmatpush1.bf16.msra.mxu0 0
    %1407 = vmatprep.subr.bf16.mxu0 0
    %1408 = vmatpush1.bf16.msra.mxu0 0
    %1409 = vmatprep.subr.bf16.mxu0 %v1069
    %1410 = vmatpush1.bf16.msra.mxu0 %v1068
    %1411 = vmatprep.subr.bf16.mxu0 0
    %1412 = vmatpush2.bf16.msra.mxu0 0
    %1413 = vmatprep.subr.bf16.mxu0 0
    %1414 = vmatpush2.bf16.msra.mxu0 0
    %1415 = vmatprep.subr.bf16.mxu0 0
    %1416 = vmatpush2.bf16.msra.mxu0 0
    %1417 = vmatprep.subr.bf16.mxu0 0
    %1418 = vmatpush2.bf16.msra.mxu0 0
    %1419 = vmatprep.subr.bf16.mxu0 0
    %1420 = vmatpush2.bf16.msra.mxu0 0
    %1421 = vmatprep.subr.bf16.mxu0 0
    %1422 = vmatpush2.bf16.msra.mxu0 0
    %1423 = vmatprep.subr.bf16.mxu0 0
    %1424 = vmatpush2.bf16.msra.mxu0 0
    %1425 = vmatprep.subr.bf16.mxu0 0
    %1426 = vmatpush2.bf16.msra.mxu0 0
    %1427 = vmatprep.mubr.bf16.mxu0 0
    %1428 = vmatmul.mubr.bf16.gmra.mxu0 %v1270
    %v1429 = vpop.f32.mrf.mxu0
    %v1430 = vadd.f32 %v1389, %v1429
    %v1431 = vpop.f32.mrf.mxu0
    %v1432 = vadd.f32 %v1391, %v1431
    %v1433 = vpop.f32.mrf.mxu0
    %v1434 = vpop.f32.mrf.mxu0
    %1435 = vdwg.mxu0
    %1436 = vmatprep.subr.bf16.mxu0 %v907
    %1437 = vmatpush1.bf16.msra.mxu0 %v906
    %1438 = vmatprep.subr.bf16.mxu0 %v903
    %1439 = vmatpush1.bf16.msra.mxu0 %v902
    %1440 = vmatprep.subr.bf16.mxu0 %v899
    %1441 = vmatpush1.bf16.msra.mxu0 %v898
    %1442 = vmatprep.subr.bf16.mxu0 %v895
    %1443 = vmatpush1.bf16.msra.mxu0 %v894
    %1444 = vmatprep.subr.bf16.mxu0 %v891
    %1445 = vmatpush1.bf16.msra.mxu0 %v890
    %1446 = vmatprep.subr.bf16.mxu0 %v887
    %1447 = vmatpush1.bf16.msra.mxu0 %v886
    %1448 = vmatprep.subr.bf16.mxu0 %v883
    %1449 = vmatpush1.bf16.msra.mxu0 %v882
    %1450 = vmatprep.subr.bf16.mxu0 %v879
    %1451 = vmatpush1.bf16.msra.mxu0 %v878
    %1452 = vmatprep.subr.bf16.mxu0 %v939
    %1453 = vmatpush2.bf16.msra.mxu0 %v938
    %1454 = vmatprep.subr.bf16.mxu0 %v935
    %1455 = vmatpush2.bf16.msra.mxu0 %v934
    %1456 = vmatprep.subr.bf16.mxu0 %v931
    %1457 = vmatpush2.bf16.msra.mxu0 %v930
    %1458 = vmatprep.subr.bf16.mxu0 %v927
    %1459 = vmatpush2.bf16.msra.mxu0 %v926
    %1460 = vmatprep.subr.bf16.mxu0 %v923
    %1461 = vmatpush2.bf16.msra.mxu0 %v922
    %1462 = vmatprep.subr.bf16.mxu0 %v919
    %1463 = vmatpush2.bf16.msra.mxu0 %v918
    %1464 = vmatprep.subr.bf16.mxu0 %v915
    %1465 = vmatpush2.bf16.msra.mxu0 %v914
    %1466 = vmatprep.subr.bf16.mxu0 %v911
    %1467 = vmatpush2.bf16.msra.mxu0 %v910
    %1468 = vmatprep.mubr.bf16.mxu0 %v64
    %1469 = vmatmul.mubr.bf16.gmra.mxu0 %v63
    %v1470 = vpop.f32.mrf.mxu0
    %v1471 = vadd.f32 %v279, %v1470
    %v1472 = vpop.f32.mrf.mxu0
    %v1473 = vadd.f32 %v283, %v1472
    %v1474 = vpop.f32.mrf.mxu0
    %v1475 = vpop.f32.mrf.mxu0
    %1476 = vdwg.mxu0
    %1477 = vmatprep.subr.bf16.mxu0 %v971
    %1478 = vmatpush1.bf16.msra.mxu0 %v970
    %1479 = vmatprep.subr.bf16.mxu0 %v967
    %1480 = vmatpush1.bf16.msra.mxu0 %v966
    %1481 = vmatprep.subr.bf16.mxu0 %v963
    %1482 = vmatpush1.bf16.msra.mxu0 %v962
    %1483 = vmatprep.subr.bf16.mxu0 %v959
    %1484 = vmatpush1.bf16.msra.mxu0 %v958
    %1485 = vmatprep.subr.bf16.mxu0 %v955
    %1486 = vmatpush1.bf16.msra.mxu0 %v954
    %1487 = vmatprep.subr.bf16.mxu0 %v951
    %1488 = vmatpush1.bf16.msra.mxu0 %v950
    %1489 = vmatprep.subr.bf16.mxu0 %v947
    %1490 = vmatpush1.bf16.msra.mxu0 %v946
    %1491 = vmatprep.subr.bf16.mxu0 %v943
    %1492 = vmatpush1.bf16.msra.mxu0 %v942
    %1493 = vmatprep.subr.bf16.mxu0 %v1003
    %1494 = vmatpush2.bf16.msra.mxu0 %v1002
    %1495 = vmatprep.subr.bf16.mxu0 %v999
    %1496 = vmatpush2.bf16.msra.mxu0 %v998
    %1497 = vmatprep.subr.bf16.mxu0 %v995
    %1498 = vmatpush2.bf16.msra.mxu0 %v994
    %1499 = vmatprep.subr.bf16.mxu0 %v991
    %1500 = vmatpush2.bf16.msra.mxu0 %v990
    %1501 = vmatprep.subr.bf16.mxu0 %v987
    %1502 = vmatpush2.bf16.msra.mxu0 %v986
    %1503 = vmatprep.subr.bf16.mxu0 %v983
    %1504 = vmatpush2.bf16.msra.mxu0 %v982
    %1505 = vmatprep.subr.bf16.mxu0 %v979
    %1506 = vmatpush2.bf16.msra.mxu0 %v978
    %1507 = vmatprep.subr.bf16.mxu0 %v975
    %1508 = vmatpush2.bf16.msra.mxu0 %v974
    %1509 = vmatprep.mubr.bf16.mxu0 %v66
    %1510 = vmatmul.mubr.bf16.gmra.mxu0 %v65
    %v1511 = vpop.f32.mrf.mxu0
    %v1512 = vadd.f32 %v1471, %v1511
    %v1513 = vpop.f32.mrf.mxu0
    %v1514 = vadd.f32 %v1473, %v1513
    %v1515 = vpop.f32.mrf.mxu0
    %v1516 = vpop.f32.mrf.mxu0
    %1517 = vdwg.mxu0
    %1518 = vmatprep.subr.bf16.mxu0 %v1035
    %1519 = vmatpush1.bf16.msra.mxu0 %v1034
    %1520 = vmatprep.subr.bf16.mxu0 %v1031
    %1521 = vmatpush1.bf16.msra.mxu0 %v1030
    %1522 = vmatprep.subr.bf16.mxu0 %v1027
    %1523 = vmatpush1.bf16.msra.mxu0 %v1026
    %1524 = vmatprep.subr.bf16.mxu0 %v1023
    %1525 = vmatpush1.bf16.msra.mxu0 %v1022
    %1526 = vmatprep.subr.bf16.mxu0 %v1019
    %1527 = vmatpush1.bf16.msra.mxu0 %v1018
    %1528 = vmatprep.subr.bf16.mxu0 %v1015
    %1529 = vmatpush1.bf16.msra.mxu0 %v1014
    %1530 = vmatprep.subr.bf16.mxu0 %v1011
    %1531 = vmatpush1.bf16.msra.mxu0 %v1010
    %1532 = vmatprep.subr.bf16.mxu0 %v1007
    %1533 = vmatpush1.bf16.msra.mxu0 %v1006
    %1534 = vmatprep.subr.bf16.mxu0 %v1067
    %1535 = vmatpush2.bf16.msra.mxu0 %v1066
    %1536 = vmatprep.subr.bf16.mxu0 %v1063
    %1537 = vmatpush2.bf16.msra.mxu0 %v1062
    %1538 = vmatprep.subr.bf16.mxu0 %v1059
    %1539 = vmatpush2.bf16.msra.mxu0 %v1058
    %1540 = vmatprep.subr.bf16.mxu0 %v1055
    %1541 = vmatpush2.bf16.msra.mxu0 %v1054
    %1542 = vmatprep.subr.bf16.mxu0 %v1051
    %1543 = vmatpush2.bf16.msra.mxu0 %v1050
    %1544 = vmatprep.subr.bf16.mxu0 %v1047
    %1545 = vmatpush2.bf16.msra.mxu0 %v1046
    %1546 = vmatprep.subr.bf16.mxu0 %v1043
    %1547 = vmatpush2.bf16.msra.mxu0 %v1042
    %1548 = vmatprep.subr.bf16.mxu0 %v1039
    %1549 = vmatpush2.bf16.msra.mxu0 %v1038
    %1550 = vmatprep.mubr.bf16.mxu0 %v68
    %1551 = vmatmul.mubr.bf16.gmra.mxu0 %v67
    %v1552 = vpop.f32.mrf.mxu0
    %v1553 = vadd.f32 %v1512, %v1552
    %v1554 = vpop.f32.mrf.mxu0
    %v1555 = vadd.f32 %v1514, %v1554
    %v1556 = vpop.f32.mrf.mxu0
    %v1557 = vpop.f32.mrf.mxu0
    %1558 = vdwg.mxu0
    %1559 = vmatprep.subr.bf16.mxu0 0
    %1560 = vmatpush1.bf16.msra.mxu0 0
    %1561 = vmatprep.subr.bf16.mxu0 0
    %1562 = vmatpush1.bf16.msra.mxu0 0
    %1563 = vmatprep.subr.bf16.mxu0 0
    %1564 = vmatpush1.bf16.msra.mxu0 0
    %1565 = vmatprep.subr.bf16.mxu0 0
    %1566 = vmatpush1.bf16.msra.mxu0 0
    %1567 = vmatprep.subr.bf16.mxu0 0
    %1568 = vmatpush1.bf16.msra.mxu0 0
    %1569 = vmatprep.subr.bf16.mxu0 0
    %1570 = vmatpush1.bf16.msra.mxu0 0
    %1571 = vmatprep.subr.bf16.mxu0 0
    %1572 = vmatpush1.bf16.msra.mxu0 0
    %1573 = vmatprep.subr.bf16.mxu0 %v1071
    %1574 = vmatpush1.bf16.msra.mxu0 %v1070
    %1575 = vmatprep.subr.bf16.mxu0 0
    %1576 = vmatpush2.bf16.msra.mxu0 0
    %1577 = vmatprep.subr.bf16.mxu0 0
    %1578 = vmatpush2.bf16.msra.mxu0 0
    %1579 = vmatprep.subr.bf16.mxu0 0
    %1580 = vmatpush2.bf16.msra.mxu0 0
    %1581 = vmatprep.subr.bf16.mxu0 0
    %1582 = vmatpush2.bf16.msra.mxu0 0
    %1583 = vmatprep.subr.bf16.mxu0 0
    %1584 = vmatpush2.bf16.msra.mxu0 0
    %1585 = vmatprep.subr.bf16.mxu0 0
    %1586 = vmatpush2.bf16.msra.mxu0 0
    %1587 = vmatprep.subr.bf16.mxu0 0
    %1588 = vmatpush2.bf16.msra.mxu0 0
    %1589 = vmatprep.subr.bf16.mxu0 0
    %1590 = vmatpush2.bf16.msra.mxu0 0
    %1591 = vmatprep.mubr.bf16.mxu0 0
    %1592 = vmatmul.mubr.bf16.gmra.mxu0 %v1270
    %v1593 = vpop.f32.mrf.mxu0
    %v1594 = vadd.f32 %v1553, %v1593
    %v1595 = vpop.f32.mrf.mxu0
    %v1596 = vadd.f32 %v1555, %v1595
    %v1597 = vpop.f32.mrf.mxu0
    %v1598 = vpop.f32.mrf.mxu0
    %1599 = vdwg.mxu0
    %v1600 = vmax.f32 %v1430, 0.0
    %v1601 = vmax.f32 %v1432, 0.0
    %v1602 = vmax.f32 %v1594, 0.0
    %v1603 = vmax.f32 %v1596, 0.0
    %v1604 = vpack.c.bf16 %v1600, %v1600
    %v1605 = vpack.c.bf16 %v1601, %v1601
    %v1606 = vpack.c.bf16 %v1602, %v1602
    %v1607 = vpack.c.bf16 %v1603, %v1603
    %v1608 = vld [vmem:[#allocation5] sm:$0xff]
    %v1609 = vld [vmem:[#allocation5 + $0x8] sm:$0xff]
    %v1610 = vld [vmem:[#allocation5 + $0x10] sm:$0xff]
    %v1611 = vld [vmem:[#allocation5 + $0x18] sm:$0xff]
    %v1612 = vld [vmem:[#allocation5 + $0x20] sm:$0xff]
    %v1613 = vld [vmem:[#allocation5 + $0x28] sm:$0xff]
    %v1614 = vld [vmem:[#allocation5 + $0x30] sm:$0xff]
    %v1615 = vld [vmem:[#allocation5 + $0x38] sm:$0xff]
    %v1616 = vld [vmem:[#allocation5 + $0x40] sm:$0xff]
    %v1617 = vld [vmem:[#allocation5 + $0x48] sm:$0xff]
    %v1618 = vld [vmem:[#allocation5 + $0x50] sm:$0xff]
    %v1619 = vld [vmem:[#allocation5 + $0x58] sm:$0xff]
    %v1620 = vld [vmem:[#allocation5 + $0x60] sm:$0xff]
    %v1621 = vld [vmem:[#allocation5 + $0x68] sm:$0xff]
    %v1622 = vld [vmem:[#allocation5 + $0x70] sm:$0xff]
    %v1623 = vld [vmem:[#allocation5 + $0x78] sm:$0xff]
    %v1624 = vld [vmem:[#allocation5 + $0x80] sm:$0xff]
    %v1625 = vld [vmem:[#allocation5 + $0x88] sm:$0xff]
    %v1626 = vld [vmem:[#allocation5 + $0x90] sm:$0xff]
    %v1627 = vld [vmem:[#allocation5 + $0x98] sm:$0xff]
    %v1628 = vld [vmem:[#allocation5 + $0xa0] sm:$0xff]
    %v1629 = vld [vmem:[#allocation5 + $0xa8] sm:$0xff]
    %v1630 = vld [vmem:[#allocation5 + $0xb0] sm:$0xff]
    %v1631 = vld [vmem:[#allocation5 + $0xb8] sm:$0xff]
    %v1632 = vld [vmem:[#allocation5 + $0xc0] sm:$0xff]
    %v1633 = vld [vmem:[#allocation5 + $0xc8] sm:$0xff]
    %v1634 = vld [vmem:[#allocation5 + $0xd0] sm:$0xff]
    %v1635 = vld [vmem:[#allocation5 + $0xd8] sm:$0xff]
    %v1636 = vld [vmem:[#allocation5 + $0xe0] sm:$0xff]
    %v1637 = vld [vmem:[#allocation5 + $0xe8] sm:$0xff]
    %v1638 = vld [vmem:[#allocation5 + $0xf0] sm:$0xff]
    %v1639 = vld [vmem:[#allocation5 + $0xf8] sm:$0xff]
    %v1640 = vld [vmem:[#allocation5 + $0x100] sm:$0xff]
    %v1641 = vld [vmem:[#allocation5 + $0x108] sm:$0xff]
    %v1642 = vld [vmem:[#allocation5 + $0x110] sm:$0xff]
    %v1643 = vld [vmem:[#allocation5 + $0x118] sm:$0xff]
    %v1644 = vld [vmem:[#allocation5 + $0x120] sm:$0xff]
    %v1645 = vld [vmem:[#allocation5 + $0x128] sm:$0xff]
    %v1646 = vld [vmem:[#allocation5 + $0x130] sm:$0xff]
    %v1647 = vld [vmem:[#allocation5 + $0x138] sm:$0xff]
    %v1648 = vld [vmem:[#allocation5 + $0x140] sm:$0xff]
    %v1649 = vld [vmem:[#allocation5 + $0x148] sm:$0xff]
    %v1650 = vld [vmem:[#allocation5 + $0x150] sm:$0xff]
    %v1651 = vld [vmem:[#allocation5 + $0x158] sm:$0xff]
    %v1652 = vld [vmem:[#allocation5 + $0x160] sm:$0xff]
    %v1653 = vld [vmem:[#allocation5 + $0x168] sm:$0xff]
    %v1654 = vld [vmem:[#allocation5 + $0x170] sm:$0xff]
    %v1655 = vld [vmem:[#allocation5 + $0x178] sm:$0xff]
    %v1656 = vld [vmem:[#allocation5 + $0x180] sm:$0xff]
    %v1657 = vld [vmem:[#allocation5 + $0x188] sm:$0xff]
    %v1658 = vld [vmem:[#allocation5 + $0x190] sm:$0xff]
    %v1659 = vld [vmem:[#allocation5 + $0x198] sm:$0xff]
    %v1660 = vld [vmem:[#allocation5 + $0x1a0] sm:$0xff]
    %v1661 = vld [vmem:[#allocation5 + $0x1a8] sm:$0xff]
    %v1662 = vld [vmem:[#allocation5 + $0x1b0] sm:$0xff]
    %v1663 = vld [vmem:[#allocation5 + $0x1b8] sm:$0xff]
    %v1664 = vld [vmem:[#allocation5 + $0x1c0] sm:$0xff]
    %v1665 = vld [vmem:[#allocation5 + $0x1c8] sm:$0xff]
    %v1666 = vld [vmem:[#allocation5 + $0x1d0] sm:$0xff]
    %v1667 = vld [vmem:[#allocation5 + $0x1d8] sm:$0xff]
    %v1668 = vld [vmem:[#allocation5 + $0x1e0] sm:$0xff]
    %v1669 = vld [vmem:[#allocation5 + $0x1e8] sm:$0xff]
    %v1670 = vld [vmem:[#allocation5 + $0x1f0] sm:$0xff]
    %v1671 = vld [vmem:[#allocation5 + $0x1f8] sm:$0xff]
    %v1672 = vld [vmem:[#allocation5 + $0x200] sm:$0xff]
    %v1673 = vld [vmem:[#allocation5 + $0x208] sm:$0xff]
    %v1674 = vld [vmem:[#allocation5 + $0x210] sm:$0xff]
    %v1675 = vld [vmem:[#allocation5 + $0x218] sm:$0xff]
    %v1676 = vld [vmem:[#allocation5 + $0x220] sm:$0xff]
    %v1677 = vld [vmem:[#allocation5 + $0x228] sm:$0xff]
    %v1678 = vld [vmem:[#allocation5 + $0x230] sm:$0xff]
    %v1679 = vld [vmem:[#allocation5 + $0x238] sm:$0xff]
    %v1680 = vld [vmem:[#allocation5 + $0x240] sm:$0xff]
    %v1681 = vld [vmem:[#allocation5 + $0x248] sm:$0xff]
    %v1682 = vld [vmem:[#allocation5 + $0x250] sm:$0xff]
    %v1683 = vld [vmem:[#allocation5 + $0x258] sm:$0xff]
    %v1684 = vld [vmem:[#allocation5 + $0x260] sm:$0xff]
    %v1685 = vld [vmem:[#allocation5 + $0x268] sm:$0xff]
    %v1686 = vld [vmem:[#allocation5 + $0x270] sm:$0xff]
    %v1687 = vld [vmem:[#allocation5 + $0x278] sm:$0xff]
    %v1688 = vld [vmem:[#allocation5 + $0x280] sm:$0xff]
    %v1689 = vld [vmem:[#allocation5 + $0x288] sm:$0xff]
    %v1690 = vld [vmem:[#allocation5 + $0x290] sm:$0xff]
    %v1691 = vld [vmem:[#allocation5 + $0x298] sm:$0xff]
    %v1692 = vld [vmem:[#allocation5 + $0x2a0] sm:$0xff]
    %v1693 = vld [vmem:[#allocation5 + $0x2a8] sm:$0xff]
    %v1694 = vld [vmem:[#allocation5 + $0x2b0] sm:$0xff]
    %v1695 = vld [vmem:[#allocation5 + $0x2b8] sm:$0xff]
    %v1696 = vld [vmem:[#allocation5 + $0x2c0] sm:$0xff]
    %v1697 = vld [vmem:[#allocation5 + $0x2c8] sm:$0xff]
    %v1698 = vld [vmem:[#allocation5 + $0x2d0] sm:$0xff]
    %v1699 = vld [vmem:[#allocation5 + $0x2d8] sm:$0xff]
    %v1700 = vld [vmem:[#allocation5 + $0x2e0] sm:$0xff]
    %v1701 = vld [vmem:[#allocation5 + $0x2e8] sm:$0xff]
    %v1702 = vld [vmem:[#allocation5 + $0x2f0] sm:$0xff]
    %v1703 = vld [vmem:[#allocation5 + $0x2f8] sm:$0xff]
    %v1704 = vld [vmem:[#allocation5 + $0x300] sm:$0xff]
    %v1705 = vld [vmem:[#allocation5 + $0x308] sm:$0xff]
    %v1706 = vld [vmem:[#allocation5 + $0x310] sm:$0xff]
    %v1707 = vld [vmem:[#allocation5 + $0x318] sm:$0xff]
    %v1708 = vld [vmem:[#allocation5 + $0x320] sm:$0xff]
    %v1709 = vld [vmem:[#allocation5 + $0x328] sm:$0xff]
    %v1710 = vld [vmem:[#allocation5 + $0x330] sm:$0xff]
    %v1711 = vld [vmem:[#allocation5 + $0x338] sm:$0xff]
    %v1712 = vld [vmem:[#allocation5 + $0x340] sm:$0xff]
    %v1713 = vld [vmem:[#allocation5 + $0x348] sm:$0xff]
    %v1714 = vld [vmem:[#allocation5 + $0x350] sm:$0xff]
    %v1715 = vld [vmem:[#allocation5 + $0x358] sm:$0xff]
    %v1716 = vld [vmem:[#allocation5 + $0x360] sm:$0xff]
    %v1717 = vld [vmem:[#allocation5 + $0x368] sm:$0xff]
    %v1718 = vld [vmem:[#allocation5 + $0x370] sm:$0xff]
    %v1719 = vld [vmem:[#allocation5 + $0x378] sm:$0xff]
    %v1720 = vld [vmem:[#allocation5 + $0x380] sm:$0xff]
    %v1721 = vld [vmem:[#allocation5 + $0x388] sm:$0xff]
    %v1722 = vld [vmem:[#allocation5 + $0x390] sm:$0xff]
    %v1723 = vld [vmem:[#allocation5 + $0x398] sm:$0xff]
    %v1724 = vld [vmem:[#allocation5 + $0x3a0] sm:$0xff]
    %v1725 = vld [vmem:[#allocation5 + $0x3a8] sm:$0xff]
    %v1726 = vld [vmem:[#allocation5 + $0x3b0] sm:$0xff]
    %v1727 = vld [vmem:[#allocation5 + $0x3b8] sm:$0xff]
    %v1728 = vld [vmem:[#allocation5 + $0x3c0] sm:$0xff]
    %v1729 = vld [vmem:[#allocation5 + $0x3c8] sm:$0xff]
    %v1730 = vld [vmem:[#allocation5 + $0x3d0] sm:$0xff]
    %v1731 = vld [vmem:[#allocation5 + $0x3d8] sm:$0xff]
    %v1732 = vld [vmem:[#allocation5 + $0x3e0] sm:$0xff]
    %v1733 = vld [vmem:[#allocation5 + $0x3e8] sm:$0xff]
    %v1734 = vld [vmem:[#allocation5 + $0x3f0] sm:$0xff]
    %v1735 = vld [vmem:[#allocation5 + $0x3f8] sm:$0xff]
    %v1736 = vld [vmem:[#allocation5 + $0x400] sm:$0xff]
    %v1737 = vld [vmem:[#allocation5 + $0x408] sm:$0xff]
    %v1738 = vld [vmem:[#allocation5 + $0x410] sm:$0xff]
    %v1739 = vld [vmem:[#allocation5 + $0x418] sm:$0xff]
    %v1740 = vld [vmem:[#allocation5 + $0x420] sm:$0xff]
    %v1741 = vld [vmem:[#allocation5 + $0x428] sm:$0xff]
    %v1742 = vld [vmem:[#allocation5 + $0x430] sm:$0xff]
    %v1743 = vld [vmem:[#allocation5 + $0x438] sm:$0xff]
    %v1744 = vld [vmem:[#allocation5 + $0x440] sm:$0xff]
    %v1745 = vld [vmem:[#allocation5 + $0x448] sm:$0xff]
    %v1746 = vld [vmem:[#allocation5 + $0x450] sm:$0xff]
    %v1747 = vld [vmem:[#allocation5 + $0x458] sm:$0xff]
    %v1748 = vld [vmem:[#allocation5 + $0x460] sm:$0xff]
    %v1749 = vld [vmem:[#allocation5 + $0x468] sm:$0xff]
    %v1750 = vld [vmem:[#allocation5 + $0x470] sm:$0xff]
    %v1751 = vld [vmem:[#allocation5 + $0x478] sm:$0xff]
    %v1752 = vld [vmem:[#allocation5 + $0x480] sm:$0xff]
    %v1753 = vld [vmem:[#allocation5 + $0x488] sm:$0xff]
    %v1754 = vld [vmem:[#allocation5 + $0x490] sm:$0xff]
    %v1755 = vld [vmem:[#allocation5 + $0x498] sm:$0xff]
    %v1756 = vld [vmem:[#allocation5 + $0x4a0] sm:$0xff]
    %v1757 = vld [vmem:[#allocation5 + $0x4a8] sm:$0xff]
    %v1758 = vld [vmem:[#allocation5 + $0x4b0] sm:$0xff]
    %v1759 = vld [vmem:[#allocation5 + $0x4b8] sm:$0xff]
    %v1760 = vld [vmem:[#allocation5 + $0x4c0] sm:$0xff]
    %v1761 = vld [vmem:[#allocation5 + $0x4c8] sm:$0xff]
    %v1762 = vld [vmem:[#allocation5 + $0x4d0] sm:$0xff]
    %v1763 = vld [vmem:[#allocation5 + $0x4d8] sm:$0xff]
    %v1764 = vld [vmem:[#allocation5 + $0x4e0] sm:$0xff]
    %v1765 = vld [vmem:[#allocation5 + $0x4e8] sm:$0xff]
    %v1766 = vld [vmem:[#allocation5 + $0x4f0] sm:$0xff]
    %v1767 = vld [vmem:[#allocation5 + $0x4f8] sm:$0xff]
    %v1768 = vld [vmem:[#allocation5 + $0x500] sm:$0xff]
    %v1769 = vld [vmem:[#allocation5 + $0x508] sm:$0xff]
    %v1770 = vld [vmem:[#allocation5 + $0x510] sm:$0xff]
    %v1771 = vld [vmem:[#allocation5 + $0x518] sm:$0xff]
    %v1772 = vld [vmem:[#allocation5 + $0x520] sm:$0xff]
    %v1773 = vld [vmem:[#allocation5 + $0x528] sm:$0xff]
    %v1774 = vld [vmem:[#allocation5 + $0x530] sm:$0xff]
    %v1775 = vld [vmem:[#allocation5 + $0x538] sm:$0xff]
    %v1776 = vld [vmem:[#allocation5 + $0x540] sm:$0xff]
    %v1777 = vld [vmem:[#allocation5 + $0x548] sm:$0xff]
    %v1778 = vld [vmem:[#allocation5 + $0x550] sm:$0xff]
    %v1779 = vld [vmem:[#allocation5 + $0x558] sm:$0xff]
    %v1780 = vld [vmem:[#allocation5 + $0x560] sm:$0xff]
    %v1781 = vld [vmem:[#allocation5 + $0x568] sm:$0xff]
    %v1782 = vld [vmem:[#allocation5 + $0x570] sm:$0xff]
    %v1783 = vld [vmem:[#allocation5 + $0x578] sm:$0xff]
    %v1784 = vld [vmem:[#allocation5 + $0x580] sm:$0xff]
    %v1785 = vld [vmem:[#allocation5 + $0x588] sm:$0xff]
    %v1786 = vld [vmem:[#allocation5 + $0x590] sm:$0xff]
    %v1787 = vld [vmem:[#allocation5 + $0x598] sm:$0xff]
    %v1788 = vld [vmem:[#allocation5 + $0x5a0] sm:$0xff]
    %v1789 = vld [vmem:[#allocation5 + $0x5a8] sm:$0xff]
    %v1790 = vld [vmem:[#allocation5 + $0x5b0] sm:$0xff]
    %v1791 = vld [vmem:[#allocation5 + $0x5b8] sm:$0xff]
    %v1792 = vld [vmem:[#allocation5 + $0x5c0] sm:$0xff]
    %v1793 = vld [vmem:[#allocation5 + $0x5c8] sm:$0xff]
    %v1794 = vld [vmem:[#allocation5 + $0x5d0] sm:$0xff]
    %v1795 = vld [vmem:[#allocation5 + $0x5d8] sm:$0xff]
    %v1796 = vld [vmem:[#allocation5 + $0x5e0] sm:$0xff]
    %v1797 = vld [vmem:[#allocation5 + $0x5e8] sm:$0xff]
    %v1798 = vld [vmem:[#allocation5 + $0x5f0] sm:$0xff]
    %v1799 = vld [vmem:[#allocation5 + $0x5f8] sm:$0xff]
    %v1800 = vld [vmem:[#allocation5 + $0x600] sm:$0xff]
    %v1801 = vld [vmem:[#allocation5 + $0x608] sm:$0xff]
    %v1802 = vld [vmem:[#allocation5 + $0x610] sm:$0xff]
    %v1803 = vld [vmem:[#allocation5 + $0x618] sm:$0xff]
    %v1804 = vld [vmem:[#allocation5 + $0x620] sm:$0xff]
    %v1805 = vld [vmem:[#allocation5 + $0x628] sm:$0xff]
    %v1806 = vld [vmem:[#allocation5 + $0x630] sm:$0xff]
    %v1807 = vld [vmem:[#allocation5 + $0x638] sm:$0xff]
    %v1808 = vld [vmem:[#allocation5 + $0x640] sm:$0xff]
    %v1809 = vld [vmem:[#allocation5 + $0x648] sm:$0xff]
    %v1810 = vld [vmem:[#allocation5 + $0x650] sm:$0xff]
    %v1811 = vld [vmem:[#allocation5 + $0x658] sm:$0xff]
    %v1812 = vld [vmem:[#allocation5 + $0x660] sm:$0xff]
    %v1813 = vld [vmem:[#allocation5 + $0x668] sm:$0xff]
    %v1814 = vld [vmem:[#allocation5 + $0x670] sm:$0xff]
    %v1815 = vld [vmem:[#allocation5 + $0x678] sm:$0xff]
    %v1816 = vld [vmem:[#allocation5 + $0x680] sm:$0xff]
    %v1817 = vld [vmem:[#allocation5 + $0x688] sm:$0xff]
    %v1818 = vld [vmem:[#allocation5 + $0x690] sm:$0xff]
    %v1819 = vld [vmem:[#allocation5 + $0x698] sm:$0xff]
    %v1820 = vld [vmem:[#allocation5 + $0x6a0] sm:$0xff]
    %v1821 = vld [vmem:[#allocation5 + $0x6a8] sm:$0xff]
    %v1822 = vld [vmem:[#allocation5 + $0x6b0] sm:$0xff]
    %v1823 = vld [vmem:[#allocation5 + $0x6b8] sm:$0xff]
    %v1824 = vld [vmem:[#allocation5 + $0x6c0] sm:$0xff]
    %v1825 = vld [vmem:[#allocation5 + $0x6c8] sm:$0xff]
    %v1826 = vld [vmem:[#allocation5 + $0x6d0] sm:$0xff]
    %v1827 = vld [vmem:[#allocation5 + $0x6d8] sm:$0xff]
    %v1828 = vld [vmem:[#allocation5 + $0x6e0] sm:$0xff]
    %v1829 = vld [vmem:[#allocation5 + $0x6e8] sm:$0xff]
    %v1830 = vld [vmem:[#allocation5 + $0x6f0] sm:$0xff]
    %v1831 = vld [vmem:[#allocation5 + $0x6f8] sm:$0xff]
    %v1832 = vld [vmem:[#allocation5 + $0x700] sm:$0xff]
    %v1833 = vld [vmem:[#allocation5 + $0x708] sm:$0xff]
    %v1834 = vld [vmem:[#allocation5 + $0x710] sm:$0xff]
    %v1835 = vld [vmem:[#allocation5 + $0x718] sm:$0xff]
    %v1836 = vld [vmem:[#allocation5 + $0x720] sm:$0xff]
    %v1837 = vld [vmem:[#allocation5 + $0x728] sm:$0xff]
    %v1838 = vld [vmem:[#allocation5 + $0x730] sm:$0xff]
    %v1839 = vld [vmem:[#allocation5 + $0x738] sm:$0xff]
    %v1840 = vld [vmem:[#allocation5 + $0x740] sm:$0xff]
    %v1841 = vld [vmem:[#allocation5 + $0x748] sm:$0xff]
    %v1842 = vld [vmem:[#allocation5 + $0x750] sm:$0xff]
    %v1843 = vld [vmem:[#allocation5 + $0x758] sm:$0xff]
    %v1844 = vld [vmem:[#allocation5 + $0x760] sm:$0xff]
    %v1845 = vld [vmem:[#allocation5 + $0x768] sm:$0xff]
    %v1846 = vld [vmem:[#allocation5 + $0x770] sm:$0xff]
    %v1847 = vld [vmem:[#allocation5 + $0x778] sm:$0xff]
    %v1848 = vld [vmem:[#allocation5 + $0x780] sm:$0xff]
    %v1849 = vld [vmem:[#allocation5 + $0x788] sm:$0xff]
    %v1850 = vld [vmem:[#allocation5 + $0x790] sm:$0xff]
    %v1851 = vld [vmem:[#allocation5 + $0x798] sm:$0xff]
    %v1852 = vld [vmem:[#allocation5 + $0x7a0] sm:$0xff]
    %v1853 = vld [vmem:[#allocation5 + $0x7a8] sm:$0xff]
    %v1854 = vld [vmem:[#allocation5 + $0x7b0] sm:$0xff]
    %v1855 = vld [vmem:[#allocation5 + $0x7b8] sm:$0xff]
    %v1856 = vld [vmem:[#allocation5 + $0x7c0] sm:$0xff]
    %v1857 = vld [vmem:[#allocation5 + $0x7c8] sm:$0xff]
    %v1858 = vld [vmem:[#allocation5 + $0x7d0] sm:$0xff]
    %v1859 = vld [vmem:[#allocation5 + $0x7d8] sm:$0xff]
    %v1860 = vld [vmem:[#allocation5 + $0x7e0] sm:$0xff]
    %v1861 = vld [vmem:[#allocation5 + $0x7e8] sm:$0xff]
    %v1862 = vld [vmem:[#allocation5 + $0x7f0] sm:$0xff]
    %v1863 = vld [vmem:[#allocation5 + $0x7f8] sm:$0xff]
    %v1864 = vld [vmem:[%s4] sm:$0xff]
    %v1866 = vlaneseq
    %v1867 = vshrl.u32 %v1866, 7
    %v1868 = vsub.s32 0, %v1867
    %v1869 = vrot.slane %v1864, %v1868
    %v1870 = vlaneseq
    %v1871 = vshrl.u32 %v1870, 7
    %v1872 = vsub.s32 1, %v1871
    %v1873 = vrot.slane %v1864, %v1872
    %v1874 = vlaneseq
    %v1875 = vshrl.u32 %v1874, 7
    %v1876 = vsub.s32 2, %v1875
    %v1877 = vrot.slane %v1864, %v1876
    %v1878 = vlaneseq
    %v1879 = vshrl.u32 %v1878, 7
    %v1880 = vsub.s32 3, %v1879
    %v1881 = vrot.slane %v1864, %v1880
    %v1882 = vlaneseq
    %v1883 = vshrl.u32 %v1882, 7
    %v1884 = vsub.s32 4, %v1883
    %v1885 = vrot.slane %v1864, %v1884
    %v1886 = vlaneseq
    %v1887 = vshrl.u32 %v1886, 7
    %v1888 = vsub.s32 5, %v1887
    %v1889 = vrot.slane %v1864, %v1888
    %v1890 = vlaneseq
    %v1891 = vshrl.u32 %v1890, 7
    %v1892 = vsub.s32 6, %v1891
    %v1893 = vrot.slane %v1864, %v1892
    %v1894 = vlaneseq
    %v1895 = vshrl.u32 %v1894, 7
    %v1896 = vsub.s32 7, %v1895
    %v1897 = vrot.slane %v1864, %v1896
    %v2162 = vunpack.c.l.b16 %v1608
    %v2163 = vunpack.c.h.b16 %v1608
    %v2164 = vunpack.c.l.b16 %v1609
    %v2165 = vunpack.c.h.b16 %v1609
    %v2166 = vunpack.c.l.b16 %v1610
    %v2167 = vunpack.c.h.b16 %v1610
    %v2168 = vunpack.c.l.b16 %v1611
    %v2169 = vunpack.c.h.b16 %v1611
    %v2170 = vunpack.c.l.b16 %v1612
    %v2171 = vunpack.c.h.b16 %v1612
    %v2172 = vunpack.c.l.b16 %v1613
    %v2173 = vunpack.c.h.b16 %v1613
    %v2174 = vunpack.c.l.b16 %v1614
    %v2175 = vunpack.c.h.b16 %v1614
    %v2176 = vunpack.c.l.b16 %v1615
    %v2177 = vunpack.c.h.b16 %v1615
    %v2178 = vunpack.c.l.b16 %v1616
    %v2179 = vunpack.c.h.b16 %v1616
    %v2180 = vunpack.c.l.b16 %v1617
    %v2181 = vunpack.c.h.b16 %v1617
    %v2182 = vunpack.c.l.b16 %v1618
    %v2183 = vunpack.c.h.b16 %v1618
    %v2184 = vunpack.c.l.b16 %v1619
    %v2185 = vunpack.c.h.b16 %v1619
    %v2186 = vunpack.c.l.b16 %v1620
    %v2187 = vunpack.c.h.b16 %v1620
    %v2188 = vunpack.c.l.b16 %v1621
    %v2189 = vunpack.c.h.b16 %v1621
    %v2190 = vunpack.c.l.b16 %v1622
    %v2191 = vunpack.c.h.b16 %v1622
    %v2192 = vunpack.c.l.b16 %v1623
    %v2193 = vunpack.c.h.b16 %v1623
    %v2194 = vunpack.c.l.b16 %v1624
    %v2195 = vunpack.c.h.b16 %v1624
    %v2196 = vunpack.c.l.b16 %v1625
    %v2197 = vunpack.c.h.b16 %v1625
    %v2198 = vunpack.c.l.b16 %v1626
    %v2199 = vunpack.c.h.b16 %v1626
    %v2200 = vunpack.c.l.b16 %v1627
    %v2201 = vunpack.c.h.b16 %v1627
    %v2202 = vunpack.c.l.b16 %v1628
    %v2203 = vunpack.c.h.b16 %v1628
    %v2204 = vunpack.c.l.b16 %v1629
    %v2205 = vunpack.c.h.b16 %v1629
    %v2206 = vunpack.c.l.b16 %v1630
    %v2207 = vunpack.c.h.b16 %v1630
    %v2208 = vunpack.c.l.b16 %v1631
    %v2209 = vunpack.c.h.b16 %v1631
    %v2210 = vunpack.c.l.b16 %v1632
    %v2211 = vunpack.c.h.b16 %v1632
    %v2212 = vunpack.c.l.b16 %v1633
    %v2213 = vunpack.c.h.b16 %v1633
    %v2214 = vunpack.c.l.b16 %v1634
    %v2215 = vunpack.c.h.b16 %v1634
    %v2216 = vunpack.c.l.b16 %v1635
    %v2217 = vunpack.c.h.b16 %v1635
    %v2218 = vunpack.c.l.b16 %v1636
    %v2219 = vunpack.c.h.b16 %v1636
    %v2220 = vunpack.c.l.b16 %v1637
    %v2221 = vunpack.c.h.b16 %v1637
    %v2222 = vunpack.c.l.b16 %v1638
    %v2223 = vunpack.c.h.b16 %v1638
    %v2224 = vunpack.c.l.b16 %v1639
    %v2225 = vunpack.c.h.b16 %v1639
    %v2226 = vunpack.c.l.b16 %v1640
    %v2227 = vunpack.c.h.b16 %v1640
    %v2228 = vunpack.c.l.b16 %v1641
    %v2229 = vunpack.c.h.b16 %v1641
    %v2230 = vunpack.c.l.b16 %v1642
    %v2231 = vunpack.c.h.b16 %v1642
    %v2232 = vunpack.c.l.b16 %v1643
    %v2233 = vunpack.c.h.b16 %v1643
    %v2234 = vunpack.c.l.b16 %v1644
    %v2235 = vunpack.c.h.b16 %v1644
    %v2236 = vunpack.c.l.b16 %v1645
    %v2237 = vunpack.c.h.b16 %v1645
    %v2238 = vunpack.c.l.b16 %v1646
    %v2239 = vunpack.c.h.b16 %v1646
    %v2240 = vunpack.c.l.b16 %v1647
    %v2241 = vunpack.c.h.b16 %v1647
    %v2242 = vunpack.c.l.b16 %v1648
    %v2243 = vunpack.c.h.b16 %v1648
    %v2244 = vunpack.c.l.b16 %v1649
    %v2245 = vunpack.c.h.b16 %v1649
    %v2246 = vunpack.c.l.b16 %v1650
    %v2247 = vunpack.c.h.b16 %v1650
    %v2248 = vunpack.c.l.b16 %v1651
    %v2249 = vunpack.c.h.b16 %v1651
    %v2250 = vunpack.c.l.b16 %v1652
    %v2251 = vunpack.c.h.b16 %v1652
    %v2252 = vunpack.c.l.b16 %v1653
    %v2253 = vunpack.c.h.b16 %v1653
    %v2254 = vunpack.c.l.b16 %v1654
    %v2255 = vunpack.c.h.b16 %v1654
    %v2256 = vunpack.c.l.b16 %v1655
    %v2257 = vunpack.c.h.b16 %v1655
    %v2258 = vunpack.c.l.b16 %v1656
    %v2259 = vunpack.c.h.b16 %v1656
    %v2260 = vunpack.c.l.b16 %v1657
    %v2261 = vunpack.c.h.b16 %v1657
    %v2262 = vunpack.c.l.b16 %v1658
    %v2263 = vunpack.c.h.b16 %v1658
    %v2264 = vunpack.c.l.b16 %v1659
    %v2265 = vunpack.c.h.b16 %v1659
    %v2266 = vunpack.c.l.b16 %v1660
    %v2267 = vunpack.c.h.b16 %v1660
    %v2268 = vunpack.c.l.b16 %v1661
    %v2269 = vunpack.c.h.b16 %v1661
    %v2270 = vunpack.c.l.b16 %v1662
    %v2271 = vunpack.c.h.b16 %v1662
    %v2272 = vunpack.c.l.b16 %v1663
    %v2273 = vunpack.c.h.b16 %v1663
    %v2274 = vunpack.c.l.b16 %v1664
    %v2275 = vunpack.c.h.b16 %v1664
    %v2276 = vunpack.c.l.b16 %v1665
    %v2277 = vunpack.c.h.b16 %v1665
    %v2278 = vunpack.c.l.b16 %v1666
    %v2279 = vunpack.c.h.b16 %v1666
    %v2280 = vunpack.c.l.b16 %v1667
    %v2281 = vunpack.c.h.b16 %v1667
    %v2282 = vunpack.c.l.b16 %v1668
    %v2283 = vunpack.c.h.b16 %v1668
    %v2284 = vunpack.c.l.b16 %v1669
    %v2285 = vunpack.c.h.b16 %v1669
    %v2286 = vunpack.c.l.b16 %v1670
    %v2287 = vunpack.c.h.b16 %v1670
    %v2288 = vunpack.c.l.b16 %v1671
    %v2289 = vunpack.c.h.b16 %v1671
    %v2290 = vunpack.c.l.b16 %v1672
    %v2291 = vunpack.c.h.b16 %v1672
    %v2292 = vunpack.c.l.b16 %v1673
    %v2293 = vunpack.c.h.b16 %v1673
    %v2294 = vunpack.c.l.b16 %v1674
    %v2295 = vunpack.c.h.b16 %v1674
    %v2296 = vunpack.c.l.b16 %v1675
    %v2297 = vunpack.c.h.b16 %v1675
    %v2298 = vunpack.c.l.b16 %v1676
    %v2299 = vunpack.c.h.b16 %v1676
    %v2300 = vunpack.c.l.b16 %v1677
    %v2301 = vunpack.c.h.b16 %v1677
    %v2302 = vunpack.c.l.b16 %v1678
    %v2303 = vunpack.c.h.b16 %v1678
    %v2304 = vunpack.c.l.b16 %v1679
    %v2305 = vunpack.c.h.b16 %v1679
    %v2306 = vunpack.c.l.b16 %v1680
    %v2307 = vunpack.c.h.b16 %v1680
    %v2308 = vunpack.c.l.b16 %v1681
    %v2309 = vunpack.c.h.b16 %v1681
    %v2310 = vunpack.c.l.b16 %v1682
    %v2311 = vunpack.c.h.b16 %v1682
    %v2312 = vunpack.c.l.b16 %v1683
    %v2313 = vunpack.c.h.b16 %v1683
    %v2314 = vunpack.c.l.b16 %v1684
    %v2315 = vunpack.c.h.b16 %v1684
    %v2316 = vunpack.c.l.b16 %v1685
    %v2317 = vunpack.c.h.b16 %v1685
    %v2318 = vunpack.c.l.b16 %v1686
    %v2319 = vunpack.c.h.b16 %v1686
    %v2320 = vunpack.c.l.b16 %v1687
    %v2321 = vunpack.c.h.b16 %v1687
    %v2322 = vunpack.c.l.b16 %v1688
    %v2323 = vunpack.c.h.b16 %v1688
    %v2324 = vunpack.c.l.b16 %v1689
    %v2325 = vunpack.c.h.b16 %v1689
    %v2326 = vunpack.c.l.b16 %v1690
    %v2327 = vunpack.c.h.b16 %v1690
    %v2328 = vunpack.c.l.b16 %v1691
    %v2329 = vunpack.c.h.b16 %v1691
    %v2330 = vunpack.c.l.b16 %v1692
    %v2331 = vunpack.c.h.b16 %v1692
    %v2332 = vunpack.c.l.b16 %v1693
    %v2333 = vunpack.c.h.b16 %v1693
    %v2334 = vunpack.c.l.b16 %v1694
    %v2335 = vunpack.c.h.b16 %v1694
    %v2336 = vunpack.c.l.b16 %v1695
    %v2337 = vunpack.c.h.b16 %v1695
    %v2338 = vunpack.c.l.b16 %v1696
    %v2339 = vunpack.c.h.b16 %v1696
    %v2340 = vunpack.c.l.b16 %v1697
    %v2341 = vunpack.c.h.b16 %v1697
    %v2342 = vunpack.c.l.b16 %v1698
    %v2343 = vunpack.c.h.b16 %v1698
    %v2344 = vunpack.c.l.b16 %v1699
    %v2345 = vunpack.c.h.b16 %v1699
    %v2346 = vunpack.c.l.b16 %v1700
    %v2347 = vunpack.c.h.b16 %v1700
    %v2348 = vunpack.c.l.b16 %v1701
    %v2349 = vunpack.c.h.b16 %v1701
    %v2350 = vunpack.c.l.b16 %v1702
    %v2351 = vunpack.c.h.b16 %v1702
    %v2352 = vunpack.c.l.b16 %v1703
    %v2353 = vunpack.c.h.b16 %v1703
    %v2354 = vunpack.c.l.b16 %v1704
    %v2355 = vunpack.c.h.b16 %v1704
    %v2356 = vunpack.c.l.b16 %v1705
    %v2357 = vunpack.c.h.b16 %v1705
    %v2358 = vunpack.c.l.b16 %v1706
    %v2359 = vunpack.c.h.b16 %v1706
    %v2360 = vunpack.c.l.b16 %v1707
    %v2361 = vunpack.c.h.b16 %v1707
    %v2362 = vunpack.c.l.b16 %v1708
    %v2363 = vunpack.c.h.b16 %v1708
    %v2364 = vunpack.c.l.b16 %v1709
    %v2365 = vunpack.c.h.b16 %v1709
    %v2366 = vunpack.c.l.b16 %v1710
    %v2367 = vunpack.c.h.b16 %v1710
    %v2368 = vunpack.c.l.b16 %v1711
    %v2369 = vunpack.c.h.b16 %v1711
    %v2370 = vunpack.c.l.b16 %v1712
    %v2371 = vunpack.c.h.b16 %v1712
    %v2372 = vunpack.c.l.b16 %v1713
    %v2373 = vunpack.c.h.b16 %v1713
    %v2374 = vunpack.c.l.b16 %v1714
    %v2375 = vunpack.c.h.b16 %v1714
    %v2376 = vunpack.c.l.b16 %v1715
    %v2377 = vunpack.c.h.b16 %v1715
    %v2378 = vunpack.c.l.b16 %v1716
    %v2379 = vunpack.c.h.b16 %v1716
    %v2380 = vunpack.c.l.b16 %v1717
    %v2381 = vunpack.c.h.b16 %v1717
    %v2382 = vunpack.c.l.b16 %v1718
    %v2383 = vunpack.c.h.b16 %v1718
    %v2384 = vunpack.c.l.b16 %v1719
    %v2385 = vunpack.c.h.b16 %v1719
    %v2386 = vunpack.c.l.b16 %v1720
    %v2387 = vunpack.c.h.b16 %v1720
    %v2388 = vunpack.c.l.b16 %v1721
    %v2389 = vunpack.c.h.b16 %v1721
    %v2390 = vunpack.c.l.b16 %v1722
    %v2391 = vunpack.c.h.b16 %v1722
    %v2392 = vunpack.c.l.b16 %v1723
    %v2393 = vunpack.c.h.b16 %v1723
    %v2394 = vunpack.c.l.b16 %v1724
    %v2395 = vunpack.c.h.b16 %v1724
    %v2396 = vunpack.c.l.b16 %v1725
    %v2397 = vunpack.c.h.b16 %v1725
    %v2398 = vunpack.c.l.b16 %v1726
    %v2399 = vunpack.c.h.b16 %v1726
    %v2400 = vunpack.c.l.b16 %v1727
    %v2401 = vunpack.c.h.b16 %v1727
    %v2402 = vunpack.c.l.b16 %v1728
    %v2403 = vunpack.c.h.b16 %v1728
    %v2404 = vunpack.c.l.b16 %v1729
    %v2405 = vunpack.c.h.b16 %v1729
    %v2406 = vunpack.c.l.b16 %v1730
    %v2407 = vunpack.c.h.b16 %v1730
    %v2408 = vunpack.c.l.b16 %v1731
    %v2409 = vunpack.c.h.b16 %v1731
    %v2410 = vunpack.c.l.b16 %v1732
    %v2411 = vunpack.c.h.b16 %v1732
    %v2412 = vunpack.c.l.b16 %v1733
    %v2413 = vunpack.c.h.b16 %v1733
    %v2414 = vunpack.c.l.b16 %v1734
    %v2415 = vunpack.c.h.b16 %v1734
    %v2416 = vunpack.c.l.b16 %v1735
    %v2417 = vunpack.c.h.b16 %v1735
    %v2418 = vunpack.c.l.b16 %v1736
    %v2419 = vunpack.c.h.b16 %v1736
    %v2420 = vunpack.c.l.b16 %v1737
    %v2421 = vunpack.c.h.b16 %v1737
    %v2422 = vunpack.c.l.b16 %v1738
    %v2423 = vunpack.c.h.b16 %v1738
    %v2424 = vunpack.c.l.b16 %v1739
    %v2425 = vunpack.c.h.b16 %v1739
    %v2426 = vunpack.c.l.b16 %v1740
    %v2427 = vunpack.c.h.b16 %v1740
    %v2428 = vunpack.c.l.b16 %v1741
    %v2429 = vunpack.c.h.b16 %v1741
    %v2430 = vunpack.c.l.b16 %v1742
    %v2431 = vunpack.c.h.b16 %v1742
    %v2432 = vunpack.c.l.b16 %v1743
    %v2433 = vunpack.c.h.b16 %v1743
    %v2434 = vunpack.c.l.b16 %v1744
    %v2435 = vunpack.c.h.b16 %v1744
    %v2436 = vunpack.c.l.b16 %v1745
    %v2437 = vunpack.c.h.b16 %v1745
    %v2438 = vunpack.c.l.b16 %v1746
    %v2439 = vunpack.c.h.b16 %v1746
    %v2440 = vunpack.c.l.b16 %v1747
    %v2441 = vunpack.c.h.b16 %v1747
    %v2442 = vunpack.c.l.b16 %v1748
    %v2443 = vunpack.c.h.b16 %v1748
    %v2444 = vunpack.c.l.b16 %v1749
    %v2445 = vunpack.c.h.b16 %v1749
    %v2446 = vunpack.c.l.b16 %v1750
    %v2447 = vunpack.c.h.b16 %v1750
    %v2448 = vunpack.c.l.b16 %v1751
    %v2449 = vunpack.c.h.b16 %v1751
    %v2450 = vunpack.c.l.b16 %v1752
    %v2451 = vunpack.c.h.b16 %v1752
    %v2452 = vunpack.c.l.b16 %v1753
    %v2453 = vunpack.c.h.b16 %v1753
    %v2454 = vunpack.c.l.b16 %v1754
    %v2455 = vunpack.c.h.b16 %v1754
    %v2456 = vunpack.c.l.b16 %v1755
    %v2457 = vunpack.c.h.b16 %v1755
    %v2458 = vunpack.c.l.b16 %v1756
    %v2459 = vunpack.c.h.b16 %v1756
    %v2460 = vunpack.c.l.b16 %v1757
    %v2461 = vunpack.c.h.b16 %v1757
    %v2462 = vunpack.c.l.b16 %v1758
    %v2463 = vunpack.c.h.b16 %v1758
    %v2464 = vunpack.c.l.b16 %v1759
    %v2465 = vunpack.c.h.b16 %v1759
    %v2466 = vunpack.c.l.b16 %v1760
    %v2467 = vunpack.c.h.b16 %v1760
    %v2468 = vunpack.c.l.b16 %v1761
    %v2469 = vunpack.c.h.b16 %v1761
    %v2470 = vunpack.c.l.b16 %v1762
    %v2471 = vunpack.c.h.b16 %v1762
    %v2472 = vunpack.c.l.b16 %v1763
    %v2473 = vunpack.c.h.b16 %v1763
    %v2474 = vunpack.c.l.b16 %v1764
    %v2475 = vunpack.c.h.b16 %v1764
    %v2476 = vunpack.c.l.b16 %v1765
    %v2477 = vunpack.c.h.b16 %v1765
    %v2478 = vunpack.c.l.b16 %v1766
    %v2479 = vunpack.c.h.b16 %v1766
    %v2480 = vunpack.c.l.b16 %v1767
    %v2481 = vunpack.c.h.b16 %v1767
    %v2482 = vunpack.c.l.b16 %v1768
    %v2483 = vunpack.c.h.b16 %v1768
    %v2484 = vunpack.c.l.b16 %v1769
    %v2485 = vunpack.c.h.b16 %v1769
    %v2486 = vunpack.c.l.b16 %v1770
    %v2487 = vunpack.c.h.b16 %v1770
    %v2488 = vunpack.c.l.b16 %v1771
    %v2489 = vunpack.c.h.b16 %v1771
    %v2490 = vunpack.c.l.b16 %v1772
    %v2491 = vunpack.c.h.b16 %v1772
    %v2492 = vunpack.c.l.b16 %v1773
    %v2493 = vunpack.c.h.b16 %v1773
    %v2494 = vunpack.c.l.b16 %v1774
    %v2495 = vunpack.c.h.b16 %v1774
    %v2496 = vunpack.c.l.b16 %v1775
    %v2497 = vunpack.c.h.b16 %v1775
    %v2498 = vunpack.c.l.b16 %v1776
    %v2499 = vunpack.c.h.b16 %v1776
    %v2500 = vunpack.c.l.b16 %v1777
    %v2501 = vunpack.c.h.b16 %v1777
    %v2502 = vunpack.c.l.b16 %v1778
    %v2503 = vunpack.c.h.b16 %v1778
    %v2504 = vunpack.c.l.b16 %v1779
    %v2505 = vunpack.c.h.b16 %v1779
    %v2506 = vunpack.c.l.b16 %v1780
    %v2507 = vunpack.c.h.b16 %v1780
    %v2508 = vunpack.c.l.b16 %v1781
    %v2509 = vunpack.c.h.b16 %v1781
    %v2510 = vunpack.c.l.b16 %v1782
    %v2511 = vunpack.c.h.b16 %v1782
    %v2512 = vunpack.c.l.b16 %v1783
    %v2513 = vunpack.c.h.b16 %v1783
    %v2514 = vunpack.c.l.b16 %v1784
    %v2515 = vunpack.c.h.b16 %v1784
    %v2516 = vunpack.c.l.b16 %v1785
    %v2517 = vunpack.c.h.b16 %v1785
    %v2518 = vunpack.c.l.b16 %v1786
    %v2519 = vunpack.c.h.b16 %v1786
    %v2520 = vunpack.c.l.b16 %v1787
    %v2521 = vunpack.c.h.b16 %v1787
    %v2522 = vunpack.c.l.b16 %v1788
    %v2523 = vunpack.c.h.b16 %v1788
    %v2524 = vunpack.c.l.b16 %v1789
    %v2525 = vunpack.c.h.b16 %v1789
    %v2526 = vunpack.c.l.b16 %v1790
    %v2527 = vunpack.c.h.b16 %v1790
    %v2528 = vunpack.c.l.b16 %v1791
    %v2529 = vunpack.c.h.b16 %v1791
    %v2530 = vunpack.c.l.b16 %v1792
    %v2531 = vunpack.c.h.b16 %v1792
    %v2532 = vunpack.c.l.b16 %v1793
    %v2533 = vunpack.c.h.b16 %v1793
    %v2534 = vunpack.c.l.b16 %v1794
    %v2535 = vunpack.c.h.b16 %v1794
    %v2536 = vunpack.c.l.b16 %v1795
    %v2537 = vunpack.c.h.b16 %v1795
    %v2538 = vunpack.c.l.b16 %v1796
    %v2539 = vunpack.c.h.b16 %v1796
    %v2540 = vunpack.c.l.b16 %v1797
    %v2541 = vunpack.c.h.b16 %v1797
    %v2542 = vunpack.c.l.b16 %v1798
    %v2543 = vunpack.c.h.b16 %v1798
    %v2544 = vunpack.c.l.b16 %v1799
    %v2545 = vunpack.c.h.b16 %v1799
    %v2546 = vunpack.c.l.b16 %v1800
    %v2547 = vunpack.c.h.b16 %v1800
    %v2548 = vunpack.c.l.b16 %v1801
    %v2549 = vunpack.c.h.b16 %v1801
    %v2550 = vunpack.c.l.b16 %v1802
    %v2551 = vunpack.c.h.b16 %v1802
    %v2552 = vunpack.c.l.b16 %v1803
    %v2553 = vunpack.c.h.b16 %v1803
    %v2554 = vunpack.c.l.b16 %v1804
    %v2555 = vunpack.c.h.b16 %v1804
    %v2556 = vunpack.c.l.b16 %v1805
    %v2557 = vunpack.c.h.b16 %v1805
    %v2558 = vunpack.c.l.b16 %v1806
    %v2559 = vunpack.c.h.b16 %v1806
    %v2560 = vunpack.c.l.b16 %v1807
    %v2561 = vunpack.c.h.b16 %v1807
    %v2562 = vunpack.c.l.b16 %v1808
    %v2563 = vunpack.c.h.b16 %v1808
    %v2564 = vunpack.c.l.b16 %v1809
    %v2565 = vunpack.c.h.b16 %v1809
    %v2566 = vunpack.c.l.b16 %v1810
    %v2567 = vunpack.c.h.b16 %v1810
    %v2568 = vunpack.c.l.b16 %v1811
    %v2569 = vunpack.c.h.b16 %v1811
    %v2570 = vunpack.c.l.b16 %v1812
    %v2571 = vunpack.c.h.b16 %v1812
    %v2572 = vunpack.c.l.b16 %v1813
    %v2573 = vunpack.c.h.b16 %v1813
    %v2574 = vunpack.c.l.b16 %v1814
    %v2575 = vunpack.c.h.b16 %v1814
    %v2576 = vunpack.c.l.b16 %v1815
    %v2577 = vunpack.c.h.b16 %v1815
    %v2578 = vunpack.c.l.b16 %v1816
    %v2579 = vunpack.c.h.b16 %v1816
    %v2580 = vunpack.c.l.b16 %v1817
    %v2581 = vunpack.c.h.b16 %v1817
    %v2582 = vunpack.c.l.b16 %v1818
    %v2583 = vunpack.c.h.b16 %v1818
    %v2584 = vunpack.c.l.b16 %v1819
    %v2585 = vunpack.c.h.b16 %v1819
    %v2586 = vunpack.c.l.b16 %v1820
    %v2587 = vunpack.c.h.b16 %v1820
    %v2588 = vunpack.c.l.b16 %v1821
    %v2589 = vunpack.c.h.b16 %v1821
    %v2590 = vunpack.c.l.b16 %v1822
    %v2591 = vunpack.c.h.b16 %v1822
    %v2592 = vunpack.c.l.b16 %v1823
    %v2593 = vunpack.c.h.b16 %v1823
    %v2594 = vunpack.c.l.b16 %v1824
    %v2595 = vunpack.c.h.b16 %v1824
    %v2596 = vunpack.c.l.b16 %v1825
    %v2597 = vunpack.c.h.b16 %v1825
    %v2598 = vunpack.c.l.b16 %v1826
    %v2599 = vunpack.c.h.b16 %v1826
    %v2600 = vunpack.c.l.b16 %v1827
    %v2601 = vunpack.c.h.b16 %v1827
    %v2602 = vunpack.c.l.b16 %v1828
    %v2603 = vunpack.c.h.b16 %v1828
    %v2604 = vunpack.c.l.b16 %v1829
    %v2605 = vunpack.c.h.b16 %v1829
    %v2606 = vunpack.c.l.b16 %v1830
    %v2607 = vunpack.c.h.b16 %v1830
    %v2608 = vunpack.c.l.b16 %v1831
    %v2609 = vunpack.c.h.b16 %v1831
    %v2610 = vunpack.c.l.b16 %v1832
    %v2611 = vunpack.c.h.b16 %v1832
    %v2612 = vunpack.c.l.b16 %v1833
    %v2613 = vunpack.c.h.b16 %v1833
    %v2614 = vunpack.c.l.b16 %v1834
    %v2615 = vunpack.c.h.b16 %v1834
    %v2616 = vunpack.c.l.b16 %v1835
    %v2617 = vunpack.c.h.b16 %v1835
    %v2618 = vunpack.c.l.b16 %v1836
    %v2619 = vunpack.c.h.b16 %v1836
    %v2620 = vunpack.c.l.b16 %v1837
    %v2621 = vunpack.c.h.b16 %v1837
    %v2622 = vunpack.c.l.b16 %v1838
    %v2623 = vunpack.c.h.b16 %v1838
    %v2624 = vunpack.c.l.b16 %v1839
    %v2625 = vunpack.c.h.b16 %v1839
    %v2626 = vunpack.c.l.b16 %v1840
    %v2627 = vunpack.c.h.b16 %v1840
    %v2628 = vunpack.c.l.b16 %v1841
    %v2629 = vunpack.c.h.b16 %v1841
    %v2630 = vunpack.c.l.b16 %v1842
    %v2631 = vunpack.c.h.b16 %v1842
    %v2632 = vunpack.c.l.b16 %v1843
    %v2633 = vunpack.c.h.b16 %v1843
    %v2634 = vunpack.c.l.b16 %v1844
    %v2635 = vunpack.c.h.b16 %v1844
    %v2636 = vunpack.c.l.b16 %v1845
    %v2637 = vunpack.c.h.b16 %v1845
    %v2638 = vunpack.c.l.b16 %v1846
    %v2639 = vunpack.c.h.b16 %v1846
    %v2640 = vunpack.c.l.b16 %v1847
    %v2641 = vunpack.c.h.b16 %v1847
    %v2642 = vunpack.c.l.b16 %v1848
    %v2643 = vunpack.c.h.b16 %v1848
    %v2644 = vunpack.c.l.b16 %v1849
    %v2645 = vunpack.c.h.b16 %v1849
    %v2646 = vunpack.c.l.b16 %v1850
    %v2647 = vunpack.c.h.b16 %v1850
    %v2648 = vunpack.c.l.b16 %v1851
    %v2649 = vunpack.c.h.b16 %v1851
    %v2650 = vunpack.c.l.b16 %v1852
    %v2651 = vunpack.c.h.b16 %v1852
    %v2652 = vunpack.c.l.b16 %v1853
    %v2653 = vunpack.c.h.b16 %v1853
    %v2654 = vunpack.c.l.b16 %v1854
    %v2655 = vunpack.c.h.b16 %v1854
    %v2656 = vunpack.c.l.b16 %v1855
    %v2657 = vunpack.c.h.b16 %v1855
    %v2658 = vunpack.c.l.b16 %v1856
    %v2659 = vunpack.c.h.b16 %v1856
    %v2660 = vunpack.c.l.b16 %v1857
    %v2661 = vunpack.c.h.b16 %v1857
    %v2662 = vunpack.c.l.b16 %v1858
    %v2663 = vunpack.c.h.b16 %v1858
    %v2664 = vunpack.c.l.b16 %v1859
    %v2665 = vunpack.c.h.b16 %v1859
    %v2666 = vunpack.c.l.b16 %v1860
    %v2667 = vunpack.c.h.b16 %v1860
    %v2668 = vunpack.c.l.b16 %v1861
    %v2669 = vunpack.c.h.b16 %v1861
    %v2670 = vunpack.c.l.b16 %v1862
    %v2671 = vunpack.c.h.b16 %v1862
    %v2672 = vunpack.c.l.b16 %v1863
    %v2673 = vunpack.c.h.b16 %v1863
    %v2674 = vpack.c.b16 %v2170, %v2162
    %v2675 = vpack.c.b16 %v2171, %v2163
    %v2676 = vpack.c.b16 %v2172, %v2164
    %v2677 = vpack.c.b16 %v2173, %v2165
    %v2678 = vpack.c.b16 %v2174, %v2166
    %v2679 = vpack.c.b16 %v2175, %v2167
    %v2680 = vpack.c.b16 %v2176, %v2168
    %v2681 = vpack.c.b16 %v2177, %v2169
    %v2682 = vpack.c.b16 %v2186, %v2178
    %v2683 = vpack.c.b16 %v2187, %v2179
    %v2684 = vpack.c.b16 %v2188, %v2180
    %v2685 = vpack.c.b16 %v2189, %v2181
    %v2686 = vpack.c.b16 %v2190, %v2182
    %v2687 = vpack.c.b16 %v2191, %v2183
    %v2688 = vpack.c.b16 %v2192, %v2184
    %v2689 = vpack.c.b16 %v2193, %v2185
    %v2690 = vpack.c.b16 %v2202, %v2194
    %v2691 = vpack.c.b16 %v2203, %v2195
    %v2692 = vpack.c.b16 %v2204, %v2196
    %v2693 = vpack.c.b16 %v2205, %v2197
    %v2694 = vpack.c.b16 %v2206, %v2198
    %v2695 = vpack.c.b16 %v2207, %v2199
    %v2696 = vpack.c.b16 %v2208, %v2200
    %v2697 = vpack.c.b16 %v2209, %v2201
    %v2698 = vpack.c.b16 %v2218, %v2210
    %v2699 = vpack.c.b16 %v2219, %v2211
    %v2700 = vpack.c.b16 %v2220, %v2212
    %v2701 = vpack.c.b16 %v2221, %v2213
    %v2702 = vpack.c.b16 %v2222, %v2214
    %v2703 = vpack.c.b16 %v2223, %v2215
    %v2704 = vpack.c.b16 %v2224, %v2216
    %v2705 = vpack.c.b16 %v2225, %v2217
    %v2706 = vpack.c.b16 %v2234, %v2226
    %v2707 = vpack.c.b16 %v2235, %v2227
    %v2708 = vpack.c.b16 %v2236, %v2228
    %v2709 = vpack.c.b16 %v2237, %v2229
    %v2710 = vpack.c.b16 %v2238, %v2230
    %v2711 = vpack.c.b16 %v2239, %v2231
    %v2712 = vpack.c.b16 %v2240, %v2232
    %v2713 = vpack.c.b16 %v2241, %v2233
    %v2714 = vpack.c.b16 %v2250, %v2242
    %v2715 = vpack.c.b16 %v2251, %v2243
    %v2716 = vpack.c.b16 %v2252, %v2244
    %v2717 = vpack.c.b16 %v2253, %v2245
    %v2718 = vpack.c.b16 %v2254, %v2246
    %v2719 = vpack.c.b16 %v2255, %v2247
    %v2720 = vpack.c.b16 %v2256, %v2248
    %v2721 = vpack.c.b16 %v2257, %v2249
    %v2722 = vpack.c.b16 %v2266, %v2258
    %v2723 = vpack.c.b16 %v2267, %v2259
    %v2724 = vpack.c.b16 %v2268, %v2260
    %v2725 = vpack.c.b16 %v2269, %v2261
    %v2726 = vpack.c.b16 %v2270, %v2262
    %v2727 = vpack.c.b16 %v2271, %v2263
    %v2728 = vpack.c.b16 %v2272, %v2264
    %v2729 = vpack.c.b16 %v2273, %v2265
    %v2730 = vpack.c.b16 %v2282, %v2274
    %v2731 = vpack.c.b16 %v2283, %v2275
    %v2732 = vpack.c.b16 %v2284, %v2276
    %v2733 = vpack.c.b16 %v2285, %v2277
    %v2734 = vpack.c.b16 %v2286, %v2278
    %v2735 = vpack.c.b16 %v2287, %v2279
    %v2736 = vpack.c.b16 %v2288, %v2280
    %v2737 = vpack.c.b16 %v2289, %v2281
    %v2738 = vpack.c.b16 %v2298, %v2290
    %v2739 = vpack.c.b16 %v2299, %v2291
    %v2740 = vpack.c.b16 %v2300, %v2292
    %v2741 = vpack.c.b16 %v2301, %v2293
    %v2742 = vpack.c.b16 %v2302, %v2294
    %v2743 = vpack.c.b16 %v2303, %v2295
    %v2744 = vpack.c.b16 %v2304, %v2296
    %v2745 = vpack.c.b16 %v2305, %v2297
    %v2746 = vpack.c.b16 %v2314, %v2306
    %v2747 = vpack.c.b16 %v2315, %v2307
    %v2748 = vpack.c.b16 %v2316, %v2308
    %v2749 = vpack.c.b16 %v2317, %v2309
    %v2750 = vpack.c.b16 %v2318, %v2310
    %v2751 = vpack.c.b16 %v2319, %v2311
    %v2752 = vpack.c.b16 %v2320, %v2312
    %v2753 = vpack.c.b16 %v2321, %v2313
    %v2754 = vpack.c.b16 %v2330, %v2322
    %v2755 = vpack.c.b16 %v2331, %v2323
    %v2756 = vpack.c.b16 %v2332, %v2324
    %v2757 = vpack.c.b16 %v2333, %v2325
    %v2758 = vpack.c.b16 %v2334, %v2326
    %v2759 = vpack.c.b16 %v2335, %v2327
    %v2760 = vpack.c.b16 %v2336, %v2328
    %v2761 = vpack.c.b16 %v2337, %v2329
    %v2762 = vpack.c.b16 %v2346, %v2338
    %v2763 = vpack.c.b16 %v2347, %v2339
    %v2764 = vpack.c.b16 %v2348, %v2340
    %v2765 = vpack.c.b16 %v2349, %v2341
    %v2766 = vpack.c.b16 %v2350, %v2342
    %v2767 = vpack.c.b16 %v2351, %v2343
    %v2768 = vpack.c.b16 %v2352, %v2344
    %v2769 = vpack.c.b16 %v2353, %v2345
    %v2770 = vpack.c.b16 %v2362, %v2354
    %v2771 = vpack.c.b16 %v2363, %v2355
    %v2772 = vpack.c.b16 %v2364, %v2356
    %v2773 = vpack.c.b16 %v2365, %v2357
    %v2774 = vpack.c.b16 %v2366, %v2358
    %v2775 = vpack.c.b16 %v2367, %v2359
    %v2776 = vpack.c.b16 %v2368, %v2360
    %v2777 = vpack.c.b16 %v2369, %v2361
    %v2778 = vpack.c.b16 %v2378, %v2370
    %v2779 = vpack.c.b16 %v2379, %v2371
    %v2780 = vpack.c.b16 %v2380, %v2372
    %v2781 = vpack.c.b16 %v2381, %v2373
    %v2782 = vpack.c.b16 %v2382, %v2374
    %v2783 = vpack.c.b16 %v2383, %v2375
    %v2784 = vpack.c.b16 %v2384, %v2376
    %v2785 = vpack.c.b16 %v2385, %v2377
    %v2786 = vpack.c.b16 %v2394, %v2386
    %v2787 = vpack.c.b16 %v2395, %v2387
    %v2788 = vpack.c.b16 %v2396, %v2388
    %v2789 = vpack.c.b16 %v2397, %v2389
    %v2790 = vpack.c.b16 %v2398, %v2390
    %v2791 = vpack.c.b16 %v2399, %v2391
    %v2792 = vpack.c.b16 %v2400, %v2392
    %v2793 = vpack.c.b16 %v2401, %v2393
    %v2794 = vpack.c.b16 %v2410, %v2402
    %v2795 = vpack.c.b16 %v2411, %v2403
    %v2796 = vpack.c.b16 %v2412, %v2404
    %v2797 = vpack.c.b16 %v2413, %v2405
    %v2798 = vpack.c.b16 %v2414, %v2406
    %v2799 = vpack.c.b16 %v2415, %v2407
    %v2800 = vpack.c.b16 %v2416, %v2408
    %v2801 = vpack.c.b16 %v2417, %v2409
    %v2802 = vpack.c.b16 %v2426, %v2418
    %v2803 = vpack.c.b16 %v2427, %v2419
    %v2804 = vpack.c.b16 %v2428, %v2420
    %v2805 = vpack.c.b16 %v2429, %v2421
    %v2806 = vpack.c.b16 %v2430, %v2422
    %v2807 = vpack.c.b16 %v2431, %v2423
    %v2808 = vpack.c.b16 %v2432, %v2424
    %v2809 = vpack.c.b16 %v2433, %v2425
    %v2810 = vpack.c.b16 %v2442, %v2434
    %v2811 = vpack.c.b16 %v2443, %v2435
    %v2812 = vpack.c.b16 %v2444, %v2436
    %v2813 = vpack.c.b16 %v2445, %v2437
    %v2814 = vpack.c.b16 %v2446, %v2438
    %v2815 = vpack.c.b16 %v2447, %v2439
    %v2816 = vpack.c.b16 %v2448, %v2440
    %v2817 = vpack.c.b16 %v2449, %v2441
    %v2818 = vpack.c.b16 %v2458, %v2450
    %v2819 = vpack.c.b16 %v2459, %v2451
    %v2820 = vpack.c.b16 %v2460, %v2452
    %v2821 = vpack.c.b16 %v2461, %v2453
    %v2822 = vpack.c.b16 %v2462, %v2454
    %v2823 = vpack.c.b16 %v2463, %v2455
    %v2824 = vpack.c.b16 %v2464, %v2456
    %v2825 = vpack.c.b16 %v2465, %v2457
    %v2826 = vpack.c.b16 %v2474, %v2466
    %v2827 = vpack.c.b16 %v2475, %v2467
    %v2828 = vpack.c.b16 %v2476, %v2468
    %v2829 = vpack.c.b16 %v2477, %v2469
    %v2830 = vpack.c.b16 %v2478, %v2470
    %v2831 = vpack.c.b16 %v2479, %v2471
    %v2832 = vpack.c.b16 %v2480, %v2472
    %v2833 = vpack.c.b16 %v2481, %v2473
    %v2834 = vpack.c.b16 %v2490, %v2482
    %v2835 = vpack.c.b16 %v2491, %v2483
    %v2836 = vpack.c.b16 %v2492, %v2484
    %v2837 = vpack.c.b16 %v2493, %v2485
    %v2838 = vpack.c.b16 %v2494, %v2486
    %v2839 = vpack.c.b16 %v2495, %v2487
    %v2840 = vpack.c.b16 %v2496, %v2488
    %v2841 = vpack.c.b16 %v2497, %v2489
    %v2842 = vpack.c.b16 %v2506, %v2498
    %v2843 = vpack.c.b16 %v2507, %v2499
    %v2844 = vpack.c.b16 %v2508, %v2500
    %v2845 = vpack.c.b16 %v2509, %v2501
    %v2846 = vpack.c.b16 %v2510, %v2502
    %v2847 = vpack.c.b16 %v2511, %v2503
    %v2848 = vpack.c.b16 %v2512, %v2504
    %v2849 = vpack.c.b16 %v2513, %v2505
    %v2850 = vpack.c.b16 %v2522, %v2514
    %v2851 = vpack.c.b16 %v2523, %v2515
    %v2852 = vpack.c.b16 %v2524, %v2516
    %v2853 = vpack.c.b16 %v2525, %v2517
    %v2854 = vpack.c.b16 %v2526, %v2518
    %v2855 = vpack.c.b16 %v2527, %v2519
    %v2856 = vpack.c.b16 %v2528, %v2520
    %v2857 = vpack.c.b16 %v2529, %v2521
    %v2858 = vpack.c.b16 %v2538, %v2530
    %v2859 = vpack.c.b16 %v2539, %v2531
    %v2860 = vpack.c.b16 %v2540, %v2532
    %v2861 = vpack.c.b16 %v2541, %v2533
    %v2862 = vpack.c.b16 %v2542, %v2534
    %v2863 = vpack.c.b16 %v2543, %v2535
    %v2864 = vpack.c.b16 %v2544, %v2536
    %v2865 = vpack.c.b16 %v2545, %v2537
    %v2866 = vpack.c.b16 %v2554, %v2546
    %v2867 = vpack.c.b16 %v2555, %v2547
    %v2868 = vpack.c.b16 %v2556, %v2548
    %v2869 = vpack.c.b16 %v2557, %v2549
    %v2870 = vpack.c.b16 %v2558, %v2550
    %v2871 = vpack.c.b16 %v2559, %v2551
    %v2872 = vpack.c.b16 %v2560, %v2552
    %v2873 = vpack.c.b16 %v2561, %v2553
    %v2874 = vpack.c.b16 %v2570, %v2562
    %v2875 = vpack.c.b16 %v2571, %v2563
    %v2876 = vpack.c.b16 %v2572, %v2564
    %v2877 = vpack.c.b16 %v2573, %v2565
    %v2878 = vpack.c.b16 %v2574, %v2566
    %v2879 = vpack.c.b16 %v2575, %v2567
    %v2880 = vpack.c.b16 %v2576, %v2568
    %v2881 = vpack.c.b16 %v2577, %v2569
    %v2882 = vpack.c.b16 %v2586, %v2578
    %v2883 = vpack.c.b16 %v2587, %v2579
    %v2884 = vpack.c.b16 %v2588, %v2580
    %v2885 = vpack.c.b16 %v2589, %v2581
    %v2886 = vpack.c.b16 %v2590, %v2582
    %v2887 = vpack.c.b16 %v2591, %v2583
    %v2888 = vpack.c.b16 %v2592, %v2584
    %v2889 = vpack.c.b16 %v2593, %v2585
    %v2890 = vpack.c.b16 %v2602, %v2594
    %v2891 = vpack.c.b16 %v2603, %v2595
    %v2892 = vpack.c.b16 %v2604, %v2596
    %v2893 = vpack.c.b16 %v2605, %v2597
    %v2894 = vpack.c.b16 %v2606, %v2598
    %v2895 = vpack.c.b16 %v2607, %v2599
    %v2896 = vpack.c.b16 %v2608, %v2600
    %v2897 = vpack.c.b16 %v2609, %v2601
    %v2898 = vpack.c.b16 %v2618, %v2610
    %v2899 = vpack.c.b16 %v2619, %v2611
    %v2900 = vpack.c.b16 %v2620, %v2612
    %v2901 = vpack.c.b16 %v2621, %v2613
    %v2902 = vpack.c.b16 %v2622, %v2614
    %v2903 = vpack.c.b16 %v2623, %v2615
    %v2904 = vpack.c.b16 %v2624, %v2616
    %v2905 = vpack.c.b16 %v2625, %v2617
    %v2906 = vpack.c.b16 %v2634, %v2626
    %v2907 = vpack.c.b16 %v2635, %v2627
    %v2908 = vpack.c.b16 %v2636, %v2628
    %v2909 = vpack.c.b16 %v2637, %v2629
    %v2910 = vpack.c.b16 %v2638, %v2630
    %v2911 = vpack.c.b16 %v2639, %v2631
    %v2912 = vpack.c.b16 %v2640, %v2632
    %v2913 = vpack.c.b16 %v2641, %v2633
    %v2914 = vpack.c.b16 %v2650, %v2642
    %v2915 = vpack.c.b16 %v2651, %v2643
    %v2916 = vpack.c.b16 %v2652, %v2644
    %v2917 = vpack.c.b16 %v2653, %v2645
    %v2918 = vpack.c.b16 %v2654, %v2646
    %v2919 = vpack.c.b16 %v2655, %v2647
    %v2920 = vpack.c.b16 %v2656, %v2648
    %v2921 = vpack.c.b16 %v2657, %v2649
    %v2922 = vpack.c.b16 %v2666, %v2658
    %v2923 = vpack.c.b16 %v2667, %v2659
    %v2924 = vpack.c.b16 %v2668, %v2660
    %v2925 = vpack.c.b16 %v2669, %v2661
    %v2926 = vpack.c.b16 %v2670, %v2662
    %v2927 = vpack.c.b16 %v2671, %v2663
    %v2928 = vpack.c.b16 %v2672, %v2664
    %v2929 = vpack.c.b16 %v2673, %v2665
    %3186 = vmatprep.subr.bf16.mxu0 %v2731
    %3187 = vmatpush1.bf16.msra.mxu0 %v2730
    %3188 = vmatprep.subr.bf16.mxu0 %v2723
    %3189 = vmatpush1.bf16.msra.mxu0 %v2722
    %3190 = vmatprep.subr.bf16.mxu0 %v2715
    %3191 = vmatpush1.bf16.msra.mxu0 %v2714
    %3192 = vmatprep.subr.bf16.mxu0 %v2707
    %3193 = vmatpush1.bf16.msra.mxu0 %v2706
    %3194 = vmatprep.subr.bf16.mxu0 %v2699
    %3195 = vmatpush1.bf16.msra.mxu0 %v2698
    %3196 = vmatprep.subr.bf16.mxu0 %v2691
    %3197 = vmatpush1.bf16.msra.mxu0 %v2690
    %3198 = vmatprep.subr.bf16.mxu0 %v2683
    %3199 = vmatpush1.bf16.msra.mxu0 %v2682
    %3200 = vmatprep.subr.bf16.mxu0 %v2675
    %3201 = vmatpush1.bf16.msra.mxu0 %v2674
    %3202 = vmatprep.subr.bf16.mxu0 %v2795
    %3203 = vmatpush2.bf16.msra.mxu0 %v2794
    %3204 = vmatprep.subr.bf16.mxu0 %v2787
    %3205 = vmatpush2.bf16.msra.mxu0 %v2786
    %3206 = vmatprep.subr.bf16.mxu0 %v2779
    %3207 = vmatpush2.bf16.msra.mxu0 %v2778
    %3208 = vmatprep.subr.bf16.mxu0 %v2771
    %3209 = vmatpush2.bf16.msra.mxu0 %v2770
    %3210 = vmatprep.subr.bf16.mxu0 %v2763
    %3211 = vmatpush2.bf16.msra.mxu0 %v2762
    %3212 = vmatprep.subr.bf16.mxu0 %v2755
    %3213 = vmatpush2.bf16.msra.mxu0 %v2754
    %3214 = vmatprep.subr.bf16.mxu0 %v2747
    %3215 = vmatpush2.bf16.msra.mxu0 %v2746
    %3216 = vmatprep.subr.bf16.mxu0 %v2739
    %3217 = vmatpush2.bf16.msra.mxu0 %v2738
    %3218 = vmatprep.mubr.bf16.mxu0 %v1605
    %3219 = vmatmul.mubr.bf16.gmra.mxu0 %v1604
    %v3220 = vpop.f32.mrf.mxu0
    %v3221 = vadd.f32 %v1869, %v3220
    %v3222 = vpop.f32.mrf.mxu0
    %v3223 = vadd.f32 %v1873, %v3222
    %v3224 = vpop.f32.mrf.mxu0
    %v3225 = vpop.f32.mrf.mxu0
    %3226 = vdwg.mxu0
    %3227 = vmatprep.subr.bf16.mxu0 %v2859
    %3228 = vmatpush1.bf16.msra.mxu0 %v2858
    %3229 = vmatprep.subr.bf16.mxu0 %v2851
    %3230 = vmatpush1.bf16.msra.mxu0 %v2850
    %3231 = vmatprep.subr.bf16.mxu0 %v2843
    %3232 = vmatpush1.bf16.msra.mxu0 %v2842
    %3233 = vmatprep.subr.bf16.mxu0 %v2835
    %3234 = vmatpush1.bf16.msra.mxu0 %v2834
    %3235 = vmatprep.subr.bf16.mxu0 %v2827
    %3236 = vmatpush1.bf16.msra.mxu0 %v2826
    %3237 = vmatprep.subr.bf16.mxu0 %v2819
    %3238 = vmatpush1.bf16.msra.mxu0 %v2818
    %3239 = vmatprep.subr.bf16.mxu0 %v2811
    %3240 = vmatpush1.bf16.msra.mxu0 %v2810
    %3241 = vmatprep.subr.bf16.mxu0 %v2803
    %3242 = vmatpush1.bf16.msra.mxu0 %v2802
    %3243 = vmatprep.subr.bf16.mxu0 %v2923
    %3244 = vmatpush2.bf16.msra.mxu0 %v2922
    %3245 = vmatprep.subr.bf16.mxu0 %v2915
    %3246 = vmatpush2.bf16.msra.mxu0 %v2914
    %3247 = vmatprep.subr.bf16.mxu0 %v2907
    %3248 = vmatpush2.bf16.msra.mxu0 %v2906
    %3249 = vmatprep.subr.bf16.mxu0 %v2899
    %3250 = vmatpush2.bf16.msra.mxu0 %v2898
    %3251 = vmatprep.subr.bf16.mxu0 %v2891
    %3252 = vmatpush2.bf16.msra.mxu0 %v2890
    %3253 = vmatprep.subr.bf16.mxu0 %v2883
    %3254 = vmatpush2.bf16.msra.mxu0 %v2882
    %3255 = vmatprep.subr.bf16.mxu0 %v2875
    %3256 = vmatpush2.bf16.msra.mxu0 %v2874
    %3257 = vmatprep.subr.bf16.mxu0 %v2867
    %3258 = vmatpush2.bf16.msra.mxu0 %v2866
    %3259 = vmatprep.mubr.bf16.mxu0 %v1607
    %3260 = vmatmul.mubr.bf16.gmra.mxu0 %v1606
    %v3261 = vpop.f32.mrf.mxu0
    %v3262 = vadd.f32 %v3221, %v3261
    %v3263 = vpop.f32.mrf.mxu0
    %v3264 = vadd.f32 %v3223, %v3263
    %v3265 = vpop.f32.mrf.mxu0
    %v3266 = vpop.f32.mrf.mxu0
    %3267 = vdwg.mxu0
    %3268 = vmatprep.subr.bf16.mxu0 %v2733
    %3269 = vmatpush1.bf16.msra.mxu0 %v2732
    %3270 = vmatprep.subr.bf16.mxu0 %v2725
    %3271 = vmatpush1.bf16.msra.mxu0 %v2724
    %3272 = vmatprep.subr.bf16.mxu0 %v2717
    %3273 = vmatpush1.bf16.msra.mxu0 %v2716
    %3274 = vmatprep.subr.bf16.mxu0 %v2709
    %3275 = vmatpush1.bf16.msra.mxu0 %v2708
    %3276 = vmatprep.subr.bf16.mxu0 %v2701
    %3277 = vmatpush1.bf16.msra.mxu0 %v2700
    %3278 = vmatprep.subr.bf16.mxu0 %v2693
    %3279 = vmatpush1.bf16.msra.mxu0 %v2692
    %3280 = vmatprep.subr.bf16.mxu0 %v2685
    %3281 = vmatpush1.bf16.msra.mxu0 %v2684
    %3282 = vmatprep.subr.bf16.mxu0 %v2677
    %3283 = vmatpush1.bf16.msra.mxu0 %v2676
    %3284 = vmatprep.subr.bf16.mxu0 %v2797
    %3285 = vmatpush2.bf16.msra.mxu0 %v2796
    %3286 = vmatprep.subr.bf16.mxu0 %v2789
    %3287 = vmatpush2.bf16.msra.mxu0 %v2788
    %3288 = vmatprep.subr.bf16.mxu0 %v2781
    %3289 = vmatpush2.bf16.msra.mxu0 %v2780
    %3290 = vmatprep.subr.bf16.mxu0 %v2773
    %3291 = vmatpush2.bf16.msra.mxu0 %v2772
    %3292 = vmatprep.subr.bf16.mxu0 %v2765
    %3293 = vmatpush2.bf16.msra.mxu0 %v2764
    %3294 = vmatprep.subr.bf16.mxu0 %v2757
    %3295 = vmatpush2.bf16.msra.mxu0 %v2756
    %3296 = vmatprep.subr.bf16.mxu0 %v2749
    %3297 = vmatpush2.bf16.msra.mxu0 %v2748
    %3298 = vmatprep.subr.bf16.mxu0 %v2741
    %3299 = vmatpush2.bf16.msra.mxu0 %v2740
    %3300 = vmatprep.mubr.bf16.mxu0 %v1605
    %3301 = vmatmul.mubr.bf16.gmra.mxu0 %v1604
    %v3302 = vpop.f32.mrf.mxu0
    %v3303 = vadd.f32 %v1877, %v3302
    %v3304 = vpop.f32.mrf.mxu0
    %v3305 = vadd.f32 %v1881, %v3304
    %v3306 = vpop.f32.mrf.mxu0
    %v3307 = vpop.f32.mrf.mxu0
    %3308 = vdwg.mxu0
    %3309 = vmatprep.subr.bf16.mxu0 %v2861
    %3310 = vmatpush1.bf16.msra.mxu0 %v2860
    %3311 = vmatprep.subr.bf16.mxu0 %v2853
    %3312 = vmatpush1.bf16.msra.mxu0 %v2852
    %3313 = vmatprep.subr.bf16.mxu0 %v2845
    %3314 = vmatpush1.bf16.msra.mxu0 %v2844
    %3315 = vmatprep.subr.bf16.mxu0 %v2837
    %3316 = vmatpush1.bf16.msra.mxu0 %v2836
    %3317 = vmatprep.subr.bf16.mxu0 %v2829
    %3318 = vmatpush1.bf16.msra.mxu0 %v2828
    %3319 = vmatprep.subr.bf16.mxu0 %v2821
    %3320 = vmatpush1.bf16.msra.mxu0 %v2820
    %3321 = vmatprep.subr.bf16.mxu0 %v2813
    %3322 = vmatpush1.bf16.msra.mxu0 %v2812
    %3323 = vmatprep.subr.bf16.mxu0 %v2805
    %3324 = vmatpush1.bf16.msra.mxu0 %v2804
    %3325 = vmatprep.subr.bf16.mxu0 %v2925
    %3326 = vmatpush2.bf16.msra.mxu0 %v2924
    %3327 = vmatprep.subr.bf16.mxu0 %v2917
    %3328 = vmatpush2.bf16.msra.mxu0 %v2916
    %3329 = vmatprep.subr.bf16.mxu0 %v2909
    %3330 = vmatpush2.bf16.msra.mxu0 %v2908
    %3331 = vmatprep.subr.bf16.mxu0 %v2901
    %3332 = vmatpush2.bf16.msra.mxu0 %v2900
    %3333 = vmatprep.subr.bf16.mxu0 %v2893
    %3334 = vmatpush2.bf16.msra.mxu0 %v2892
    %3335 = vmatprep.subr.bf16.mxu0 %v2885
    %3336 = vmatpush2.bf16.msra.mxu0 %v2884
    %3337 = vmatprep.subr.bf16.mxu0 %v2877
    %3338 = vmatpush2.bf16.msra.mxu0 %v2876
    %3339 = vmatprep.subr.bf16.mxu0 %v2869
    %3340 = vmatpush2.bf16.msra.mxu0 %v2868
    %3341 = vmatprep.mubr.bf16.mxu0 %v1607
    %3342 = vmatmul.mubr.bf16.gmra.mxu0 %v1606
    %v3343 = vpop.f32.mrf.mxu0
    %v3344 = vadd.f32 %v3303, %v3343
    %v3345 = vpop.f32.mrf.mxu0
    %v3346 = vadd.f32 %v3305, %v3345
    %v3347 = vpop.f32.mrf.mxu0
    %v3348 = vpop.f32.mrf.mxu0
    %3349 = vdwg.mxu0
    %3350 = vmatprep.subr.bf16.mxu0 %v2735
    %3351 = vmatpush1.bf16.msra.mxu0 %v2734
    %3352 = vmatprep.subr.bf16.mxu0 %v2727
    %3353 = vmatpush1.bf16.msra.mxu0 %v2726
    %3354 = vmatprep.subr.bf16.mxu0 %v2719
    %3355 = vmatpush1.bf16.msra.mxu0 %v2718
    %3356 = vmatprep.subr.bf16.mxu0 %v2711
    %3357 = vmatpush1.bf16.msra.mxu0 %v2710
    %3358 = vmatprep.subr.bf16.mxu0 %v2703
    %3359 = vmatpush1.bf16.msra.mxu0 %v2702
    %3360 = vmatprep.subr.bf16.mxu0 %v2695
    %3361 = vmatpush1.bf16.msra.mxu0 %v2694
    %3362 = vmatprep.subr.bf16.mxu0 %v2687
    %3363 = vmatpush1.bf16.msra.mxu0 %v2686
    %3364 = vmatprep.subr.bf16.mxu0 %v2679
    %3365 = vmatpush1.bf16.msra.mxu0 %v2678
    %3366 = vmatprep.subr.bf16.mxu0 %v2799
    %3367 = vmatpush2.bf16.msra.mxu0 %v2798
    %3368 = vmatprep.subr.bf16.mxu0 %v2791
    %3369 = vmatpush2.bf16.msra.mxu0 %v2790
    %3370 = vmatprep.subr.bf16.mxu0 %v2783
    %3371 = vmatpush2.bf16.msra.mxu0 %v2782
    %3372 = vmatprep.subr.bf16.mxu0 %v2775
    %3373 = vmatpush2.bf16.msra.mxu0 %v2774
    %3374 = vmatprep.subr.bf16.mxu0 %v2767
    %3375 = vmatpush2.bf16.msra.mxu0 %v2766
    %3376 = vmatprep.subr.bf16.mxu0 %v2759
    %3377 = vmatpush2.bf16.msra.mxu0 %v2758
    %3378 = vmatprep.subr.bf16.mxu0 %v2751
    %3379 = vmatpush2.bf16.msra.mxu0 %v2750
    %3380 = vmatprep.subr.bf16.mxu0 %v2743
    %3381 = vmatpush2.bf16.msra.mxu0 %v2742
    %3382 = vmatprep.mubr.bf16.mxu0 %v1605
    %3383 = vmatmul.mubr.bf16.gmra.mxu0 %v1604
    %v3384 = vpop.f32.mrf.mxu0
    %v3385 = vadd.f32 %v1885, %v3384
    %v3386 = vpop.f32.mrf.mxu0
    %v3387 = vadd.f32 %v1889, %v3386
    %v3388 = vpop.f32.mrf.mxu0
    %v3389 = vpop.f32.mrf.mxu0
    %3390 = vdwg.mxu0
    %3391 = vmatprep.subr.bf16.mxu0 %v2863
    %3392 = vmatpush1.bf16.msra.mxu0 %v2862
    %3393 = vmatprep.subr.bf16.mxu0 %v2855
    %3394 = vmatpush1.bf16.msra.mxu0 %v2854
    %3395 = vmatprep.subr.bf16.mxu0 %v2847
    %3396 = vmatpush1.bf16.msra.mxu0 %v2846
    %3397 = vmatprep.subr.bf16.mxu0 %v2839
    %3398 = vmatpush1.bf16.msra.mxu0 %v2838
    %3399 = vmatprep.subr.bf16.mxu0 %v2831
    %3400 = vmatpush1.bf16.msra.mxu0 %v2830
    %3401 = vmatprep.subr.bf16.mxu0 %v2823
    %3402 = vmatpush1.bf16.msra.mxu0 %v2822
    %3403 = vmatprep.subr.bf16.mxu0 %v2815
    %3404 = vmatpush1.bf16.msra.mxu0 %v2814
    %3405 = vmatprep.subr.bf16.mxu0 %v2807
    %3406 = vmatpush1.bf16.msra.mxu0 %v2806
    %3407 = vmatprep.subr.bf16.mxu0 %v2927
    %3408 = vmatpush2.bf16.msra.mxu0 %v2926
    %3409 = vmatprep.subr.bf16.mxu0 %v2919
    %3410 = vmatpush2.bf16.msra.mxu0 %v2918
    %3411 = vmatprep.subr.bf16.mxu0 %v2911
    %3412 = vmatpush2.bf16.msra.mxu0 %v2910
    %3413 = vmatprep.subr.bf16.mxu0 %v2903
    %3414 = vmatpush2.bf16.msra.mxu0 %v2902
    %3415 = vmatprep.subr.bf16.mxu0 %v2895
    %3416 = vmatpush2.bf16.msra.mxu0 %v2894
    %3417 = vmatprep.subr.bf16.mxu0 %v2887
    %3418 = vmatpush2.bf16.msra.mxu0 %v2886
    %3419 = vmatprep.subr.bf16.mxu0 %v2879
    %3420 = vmatpush2.bf16.msra.mxu0 %v2878
    %3421 = vmatprep.subr.bf16.mxu0 %v2871
    %3422 = vmatpush2.bf16.msra.mxu0 %v2870
    %3423 = vmatprep.mubr.bf16.mxu0 %v1607
    %3424 = vmatmul.mubr.bf16.gmra.mxu0 %v1606
    %v3425 = vpop.f32.mrf.mxu0
    %v3426 = vadd.f32 %v3385, %v3425
    %v3427 = vpop.f32.mrf.mxu0
    %v3428 = vadd.f32 %v3387, %v3427
    %v3429 = vpop.f32.mrf.mxu0
    %v3430 = vpop.f32.mrf.mxu0
    %3431 = vdwg.mxu0
    %3432 = vmatprep.subr.bf16.mxu0 %v2737
    %3433 = vmatpush1.bf16.msra.mxu0 %v2736
    %3434 = vmatprep.subr.bf16.mxu0 %v2729
    %3435 = vmatpush1.bf16.msra.mxu0 %v2728
    %3436 = vmatprep.subr.bf16.mxu0 %v2721
    %3437 = vmatpush1.bf16.msra.mxu0 %v2720
    %3438 = vmatprep.subr.bf16.mxu0 %v2713
    %3439 = vmatpush1.bf16.msra.mxu0 %v2712
    %3440 = vmatprep.subr.bf16.mxu0 %v2705
    %3441 = vmatpush1.bf16.msra.mxu0 %v2704
    %3442 = vmatprep.subr.bf16.mxu0 %v2697
    %3443 = vmatpush1.bf16.msra.mxu0 %v2696
    %3444 = vmatprep.subr.bf16.mxu0 %v2689
    %3445 = vmatpush1.bf16.msra.mxu0 %v2688
    %3446 = vmatprep.subr.bf16.mxu0 %v2681
    %3447 = vmatpush1.bf16.msra.mxu0 %v2680
    %3448 = vmatprep.subr.bf16.mxu0 %v2801
    %3449 = vmatpush2.bf16.msra.mxu0 %v2800
    %3450 = vmatprep.subr.bf16.mxu0 %v2793
    %3451 = vmatpush2.bf16.msra.mxu0 %v2792
    %3452 = vmatprep.subr.bf16.mxu0 %v2785
    %3453 = vmatpush2.bf16.msra.mxu0 %v2784
    %3454 = vmatprep.subr.bf16.mxu0 %v2777
    %3455 = vmatpush2.bf16.msra.mxu0 %v2776
    %3456 = vmatprep.subr.bf16.mxu0 %v2769
    %3457 = vmatpush2.bf16.msra.mxu0 %v2768
    %3458 = vmatprep.subr.bf16.mxu0 %v2761
    %3459 = vmatpush2.bf16.msra.mxu0 %v2760
    %3460 = vmatprep.subr.bf16.mxu0 %v2753
    %3461 = vmatpush2.bf16.msra.mxu0 %v2752
    %3462 = vmatprep.subr.bf16.mxu0 %v2745
    %3463 = vmatpush2.bf16.msra.mxu0 %v2744
    %3464 = vmatprep.mubr.bf16.mxu0 %v1605
    %3465 = vmatmul.mubr.bf16.gmra.mxu0 %v1604
    %v3466 = vpop.f32.mrf.mxu0
    %v3467 = vadd.f32 %v1893, %v3466
    %v3468 = vpop.f32.mrf.mxu0
    %v3469 = vadd.f32 %v1897, %v3468
    %v3470 = vpop.f32.mrf.mxu0
    %v3471 = vpop.f32.mrf.mxu0
    %3472 = vdwg.mxu0
    %3473 = vmatprep.subr.bf16.mxu0 %v2865
    %3474 = vmatpush1.bf16.msra.mxu0 %v2864
    %3475 = vmatprep.subr.bf16.mxu0 %v2857
    %3476 = vmatpush1.bf16.msra.mxu0 %v2856
    %3477 = vmatprep.subr.bf16.mxu0 %v2849
    %3478 = vmatpush1.bf16.msra.mxu0 %v2848
    %3479 = vmatprep.subr.bf16.mxu0 %v2841
    %3480 = vmatpush1.bf16.msra.mxu0 %v2840
    %3481 = vmatprep.subr.bf16.mxu0 %v2833
    %3482 = vmatpush1.bf16.msra.mxu0 %v2832
    %3483 = vmatprep.subr.bf16.mxu0 %v2825
    %3484 = vmatpush1.bf16.msra.mxu0 %v2824
    %3485 = vmatprep.subr.bf16.mxu0 %v2817
    %3486 = vmatpush1.bf16.msra.mxu0 %v2816
    %3487 = vmatprep.subr.bf16.mxu0 %v2809
    %3488 = vmatpush1.bf16.msra.mxu0 %v2808
    %3489 = vmatprep.subr.bf16.mxu0 %v2929
    %3490 = vmatpush2.bf16.msra.mxu0 %v2928
    %3491 = vmatprep.subr.bf16.mxu0 %v2921
    %3492 = vmatpush2.bf16.msra.mxu0 %v2920
    %3493 = vmatprep.subr.bf16.mxu0 %v2913
    %3494 = vmatpush2.bf16.msra.mxu0 %v2912
    %3495 = vmatprep.subr.bf16.mxu0 %v2905
    %3496 = vmatpush2.bf16.msra.mxu0 %v2904
    %3497 = vmatprep.subr.bf16.mxu0 %v2897
    %3498 = vmatpush2.bf16.msra.mxu0 %v2896
    %3499 = vmatprep.subr.bf16.mxu0 %v2889
    %3500 = vmatpush2.bf16.msra.mxu0 %v2888
    %3501 = vmatprep.subr.bf16.mxu0 %v2881
    %3502 = vmatpush2.bf16.msra.mxu0 %v2880
    %3503 = vmatprep.subr.bf16.mxu0 %v2873
    %3504 = vmatpush2.bf16.msra.mxu0 %v2872
    %3505 = vmatprep.mubr.bf16.mxu0 %v1607
    %3506 = vmatmul.mubr.bf16.gmra.mxu0 %v1606
    %v3507 = vpop.f32.mrf.mxu0
    %v3508 = vadd.f32 %v3467, %v3507
    %v3509 = vpop.f32.mrf.mxu0
    %v3510 = vadd.f32 %v3469, %v3509
    %v3511 = vpop.f32.mrf.mxu0
    %v3512 = vpop.f32.mrf.mxu0
    %3513 = vdwg.mxu0
    %v3514 = vmax.f32 %v3262, 0.0
    %v3515 = vmax.f32 %v3264, 0.0
    %v3516 = vmax.f32 %v3344, 0.0
    %v3517 = vmax.f32 %v3346, 0.0
    %v3518 = vmax.f32 %v3426, 0.0
    %v3519 = vmax.f32 %v3428, 0.0
    %v3520 = vmax.f32 %v3508, 0.0
    %v3521 = vmax.f32 %v3510, 0.0
    %v3522 = vpack.c.bf16 %v3514, %v3514
    %v3523 = vpack.c.bf16 %v3515, %v3515
    %v3524 = vpack.c.bf16 %v3516, %v3516
    %v3525 = vpack.c.bf16 %v3517, %v3517
    %v3526 = vpack.c.bf16 %v3518, %v3518
    %v3527 = vpack.c.bf16 %v3519, %v3519
    %v3528 = vpack.c.bf16 %v3520, %v3520
    %v3529 = vpack.c.bf16 %v3521, %v3521
    %v3530 = vld [vmem:[%s5] sm:$0xf]
    %v3531 = vld [vmem:[%s5 + $0x4] sm:$0xf]
    %v3532 = vld [vmem:[%s5 + $0x8] sm:$0xf]
    %v3533 = vld [vmem:[%s5 + $0xc] sm:$0xf]
    %v3534 = vld [vmem:[%s5 + $0x10] sm:$0xf]
    %v3535 = vld [vmem:[%s5 + $0x14] sm:$0xf]
    %v3536 = vld [vmem:[%s5 + $0x18] sm:$0xf]
    %v3537 = vld [vmem:[%s5 + $0x1c] sm:$0xf]
    %v3538 = vld [vmem:[%s5 + $0x20] sm:$0xf]
    %v3539 = vld [vmem:[%s5 + $0x24] sm:$0xf]
    %v3540 = vld [vmem:[%s5 + $0x28] sm:$0xf]
    %v3541 = vld [vmem:[%s5 + $0x2c] sm:$0xf]
    %v3542 = vld [vmem:[%s5 + $0x30] sm:$0xf]
    %v3543 = vld [vmem:[%s5 + $0x34] sm:$0xf]
    %v3544 = vld [vmem:[%s5 + $0x38] sm:$0xf]
    %v3545 = vld [vmem:[%s5 + $0x3c] sm:$0xf]
    %v3546 = vld [vmem:[%s5 + $0x40] sm:$0xf]
    %v3547 = vld [vmem:[%s5 + $0x44] sm:$0xf]
    %v3548 = vld [vmem:[%s5 + $0x48] sm:$0xf]
    %v3549 = vld [vmem:[%s5 + $0x4c] sm:$0xf]
    %v3550 = vld [vmem:[%s5 + $0x50] sm:$0xf]
    %v3551 = vld [vmem:[%s5 + $0x54] sm:$0xf]
    %v3552 = vld [vmem:[%s5 + $0x58] sm:$0xf]
    %v3553 = vld [vmem:[%s5 + $0x5c] sm:$0xf]
    %v3554 = vld [vmem:[%s5 + $0x60] sm:$0xf]
    %v3555 = vld [vmem:[%s5 + $0x64] sm:$0xf]
    %v3556 = vld [vmem:[%s5 + $0x68] sm:$0xf]
    %v3557 = vld [vmem:[%s5 + $0x6c] sm:$0xf]
    %v3558 = vld [vmem:[%s5 + $0x70] sm:$0xf]
    %v3559 = vld [vmem:[%s5 + $0x74] sm:$0xf]
    %v3560 = vld [vmem:[%s5 + $0x78] sm:$0xf]
    %v3561 = vld [vmem:[%s5 + $0x7c] sm:$0xf]
    %v3562 = vld [vmem:[%s5 + $0x80] sm:$0xf]
    %v3563 = vld [vmem:[%s5 + $0x84] sm:$0xf]
    %v3564 = vld [vmem:[%s5 + $0x88] sm:$0xf]
    %v3565 = vld [vmem:[%s5 + $0x8c] sm:$0xf]
    %v3566 = vld [vmem:[%s5 + $0x90] sm:$0xf]
    %v3567 = vld [vmem:[%s5 + $0x94] sm:$0xf]
    %v3568 = vld [vmem:[%s5 + $0x98] sm:$0xf]
    %v3569 = vld [vmem:[%s5 + $0x9c] sm:$0xf]
    %v3570 = vld [vmem:[%s5 + $0xa0] sm:$0xf]
    %v3571 = vld [vmem:[%s5 + $0xa4] sm:$0xf]
    %v3572 = vld [vmem:[%s5 + $0xa8] sm:$0xf]
    %v3573 = vld [vmem:[%s5 + $0xac] sm:$0xf]
    %v3574 = vld [vmem:[%s5 + $0xb0] sm:$0xf]
    %v3575 = vld [vmem:[%s5 + $0xb4] sm:$0xf]
    %v3576 = vld [vmem:[%s5 + $0xb8] sm:$0xf]
    %v3577 = vld [vmem:[%s5 + $0xbc] sm:$0xf]
    %v3578 = vld [vmem:[%s5 + $0xc0] sm:$0xf]
    %v3579 = vld [vmem:[%s5 + $0xc4] sm:$0xf]
    %v3580 = vld [vmem:[%s5 + $0xc8] sm:$0xf]
    %v3581 = vld [vmem:[%s5 + $0xcc] sm:$0xf]
    %v3582 = vld [vmem:[%s5 + $0xd0] sm:$0xf]
    %v3583 = vld [vmem:[%s5 + $0xd4] sm:$0xf]
    %v3584 = vld [vmem:[%s5 + $0xd8] sm:$0xf]
    %v3585 = vld [vmem:[%s5 + $0xdc] sm:$0xf]
    %v3586 = vld [vmem:[%s5 + $0xe0] sm:$0xf]
    %v3587 = vld [vmem:[%s5 + $0xe4] sm:$0xf]
    %v3588 = vld [vmem:[%s5 + $0xe8] sm:$0xf]
    %v3589 = vld [vmem:[%s5 + $0xec] sm:$0xf]
    %v3590 = vld [vmem:[%s5 + $0xf0] sm:$0xf]
    %v3591 = vld [vmem:[%s5 + $0xf4] sm:$0xf]
    %v3592 = vld [vmem:[%s5 + $0xf8] sm:$0xf]
    %v3593 = vld [vmem:[%s5 + $0xfc] sm:$0xf]
    %v3594 = vld [vmem:[%s5 + $0x100] sm:$0xf]
    %v3595 = vld [vmem:[%s5 + $0x104] sm:$0xf]
    %v3596 = vld [vmem:[%s5 + $0x108] sm:$0xf]
    %v3597 = vld [vmem:[%s5 + $0x10c] sm:$0xf]
    %v3598 = vld [vmem:[%s5 + $0x110] sm:$0xf]
    %v3599 = vld [vmem:[%s5 + $0x114] sm:$0xf]
    %v3600 = vld [vmem:[%s5 + $0x118] sm:$0xf]
    %v3601 = vld [vmem:[%s5 + $0x11c] sm:$0xf]
    %v3602 = vld [vmem:[%s5 + $0x120] sm:$0xf]
    %v3603 = vld [vmem:[%s5 + $0x124] sm:$0xf]
    %v3604 = vld [vmem:[%s5 + $0x128] sm:$0xf]
    %v3605 = vld [vmem:[%s5 + $0x12c] sm:$0xf]
    %v3606 = vld [vmem:[%s5 + $0x130] sm:$0xf]
    %v3607 = vld [vmem:[%s5 + $0x134] sm:$0xf]
    %v3608 = vld [vmem:[%s5 + $0x138] sm:$0xf]
    %v3609 = vld [vmem:[%s5 + $0x13c] sm:$0xf]
    %v3610 = vld [vmem:[%s5 + $0x140] sm:$0xf]
    %v3611 = vld [vmem:[%s5 + $0x144] sm:$0xf]
    %v3612 = vld [vmem:[%s5 + $0x148] sm:$0xf]
    %v3613 = vld [vmem:[%s5 + $0x14c] sm:$0xf]
    %v3614 = vld [vmem:[%s5 + $0x150] sm:$0xf]
    %v3615 = vld [vmem:[%s5 + $0x154] sm:$0xf]
    %v3616 = vld [vmem:[%s5 + $0x158] sm:$0xf]
    %v3617 = vld [vmem:[%s5 + $0x15c] sm:$0xf]
    %v3618 = vld [vmem:[%s5 + $0x160] sm:$0xf]
    %v3619 = vld [vmem:[%s5 + $0x164] sm:$0xf]
    %v3620 = vld [vmem:[%s5 + $0x168] sm:$0xf]
    %v3621 = vld [vmem:[%s5 + $0x16c] sm:$0xf]
    %v3622 = vld [vmem:[%s5 + $0x170] sm:$0xf]
    %v3623 = vld [vmem:[%s5 + $0x174] sm:$0xf]
    %v3624 = vld [vmem:[%s5 + $0x178] sm:$0xf]
    %v3625 = vld [vmem:[%s5 + $0x17c] sm:$0xf]
    %v3626 = vld [vmem:[%s5 + $0x180] sm:$0xf]
    %v3627 = vld [vmem:[%s5 + $0x184] sm:$0xf]
    %v3628 = vld [vmem:[%s5 + $0x188] sm:$0xf]
    %v3629 = vld [vmem:[%s5 + $0x18c] sm:$0xf]
    %v3630 = vld [vmem:[%s5 + $0x190] sm:$0xf]
    %v3631 = vld [vmem:[%s5 + $0x194] sm:$0xf]
    %v3632 = vld [vmem:[%s5 + $0x198] sm:$0xf]
    %v3633 = vld [vmem:[%s5 + $0x19c] sm:$0xf]
    %v3634 = vld [vmem:[%s5 + $0x1a0] sm:$0xf]
    %v3635 = vld [vmem:[%s5 + $0x1a4] sm:$0xf]
    %v3636 = vld [vmem:[%s5 + $0x1a8] sm:$0xf]
    %v3637 = vld [vmem:[%s5 + $0x1ac] sm:$0xf]
    %v3638 = vld [vmem:[%s5 + $0x1b0] sm:$0xf]
    %v3639 = vld [vmem:[%s5 + $0x1b4] sm:$0xf]
    %v3640 = vld [vmem:[%s5 + $0x1b8] sm:$0xf]
    %v3641 = vld [vmem:[%s5 + $0x1bc] sm:$0xf]
    %v3642 = vld [vmem:[%s5 + $0x1c0] sm:$0xf]
    %v3643 = vld [vmem:[%s5 + $0x1c4] sm:$0xf]
    %v3644 = vld [vmem:[%s5 + $0x1c8] sm:$0xf]
    %v3645 = vld [vmem:[%s5 + $0x1cc] sm:$0xf]
    %v3646 = vld [vmem:[%s5 + $0x1d0] sm:$0xf]
    %v3647 = vld [vmem:[%s5 + $0x1d4] sm:$0xf]
    %v3648 = vld [vmem:[%s5 + $0x1d8] sm:$0xf]
    %v3649 = vld [vmem:[%s5 + $0x1dc] sm:$0xf]
    %v3650 = vld [vmem:[%s5 + $0x1e0] sm:$0xf]
    %v3651 = vld [vmem:[%s5 + $0x1e4] sm:$0xf]
    %v3652 = vld [vmem:[%s5 + $0x1e8] sm:$0xf]
    %v3653 = vld [vmem:[%s5 + $0x1ec] sm:$0xf]
    %v3654 = vld [vmem:[%s5 + $0x1f0] sm:$0xf]
    %v3655 = vld [vmem:[%s5 + $0x1f4] sm:$0xf]
    %v3656 = vld [vmem:[%s5 + $0x1f8] sm:$0xf]
    %v3657 = vld [vmem:[%s5 + $0x1fc] sm:$0xf]
    %v3658 = vld [vmem:[%s6] sm:$0x1]
    %v3660 = vlaneseq
    %v3661 = vshrl.u32 %v3660, 7
    %v3662 = vsub.s32 0, %v3661
    %v3663 = vrot.slane %v3658, %v3662
    %v3793 = vunpack.c.l.b16 %v3530
    %v3794 = vunpack.c.l.b16 %v3531
    %v3795 = vunpack.c.l.b16 %v3532
    %v3796 = vunpack.c.l.b16 %v3533
    %v3797 = vunpack.c.l.b16 %v3534
    %v3798 = vunpack.c.l.b16 %v3535
    %v3799 = vunpack.c.l.b16 %v3536
    %v3800 = vunpack.c.l.b16 %v3537
    %v3801 = vunpack.c.l.b16 %v3538
    %v3802 = vunpack.c.l.b16 %v3539
    %v3803 = vunpack.c.l.b16 %v3540
    %v3804 = vunpack.c.l.b16 %v3541
    %v3805 = vunpack.c.l.b16 %v3542
    %v3806 = vunpack.c.l.b16 %v3543
    %v3807 = vunpack.c.l.b16 %v3544
    %v3808 = vunpack.c.l.b16 %v3545
    %v3809 = vunpack.c.l.b16 %v3546
    %v3810 = vunpack.c.l.b16 %v3547
    %v3811 = vunpack.c.l.b16 %v3548
    %v3812 = vunpack.c.l.b16 %v3549
    %v3813 = vunpack.c.l.b16 %v3550
    %v3814 = vunpack.c.l.b16 %v3551
    %v3815 = vunpack.c.l.b16 %v3552
    %v3816 = vunpack.c.l.b16 %v3553
    %v3817 = vunpack.c.l.b16 %v3554
    %v3818 = vunpack.c.l.b16 %v3555
    %v3819 = vunpack.c.l.b16 %v3556
    %v3820 = vunpack.c.l.b16 %v3557
    %v3821 = vunpack.c.l.b16 %v3558
    %v3822 = vunpack.c.l.b16 %v3559
    %v3823 = vunpack.c.l.b16 %v3560
    %v3824 = vunpack.c.l.b16 %v3561
    %v3825 = vunpack.c.l.b16 %v3562
    %v3826 = vunpack.c.l.b16 %v3563
    %v3827 = vunpack.c.l.b16 %v3564
    %v3828 = vunpack.c.l.b16 %v3565
    %v3829 = vunpack.c.l.b16 %v3566
    %v3830 = vunpack.c.l.b16 %v3567
    %v3831 = vunpack.c.l.b16 %v3568
    %v3832 = vunpack.c.l.b16 %v3569
    %v3833 = vunpack.c.l.b16 %v3570
    %v3834 = vunpack.c.l.b16 %v3571
    %v3835 = vunpack.c.l.b16 %v3572
    %v3836 = vunpack.c.l.b16 %v3573
    %v3837 = vunpack.c.l.b16 %v3574
    %v3838 = vunpack.c.l.b16 %v3575
    %v3839 = vunpack.c.l.b16 %v3576
    %v3840 = vunpack.c.l.b16 %v3577
    %v3841 = vunpack.c.l.b16 %v3578
    %v3842 = vunpack.c.l.b16 %v3579
    %v3843 = vunpack.c.l.b16 %v3580
    %v3844 = vunpack.c.l.b16 %v3581
    %v3845 = vunpack.c.l.b16 %v3582
    %v3846 = vunpack.c.l.b16 %v3583
    %v3847 = vunpack.c.l.b16 %v3584
    %v3848 = vunpack.c.l.b16 %v3585
    %v3849 = vunpack.c.l.b16 %v3586
    %v3850 = vunpack.c.l.b16 %v3587
    %v3851 = vunpack.c.l.b16 %v3588
    %v3852 = vunpack.c.l.b16 %v3589
    %v3853 = vunpack.c.l.b16 %v3590
    %v3854 = vunpack.c.l.b16 %v3591
    %v3855 = vunpack.c.l.b16 %v3592
    %v3856 = vunpack.c.l.b16 %v3593
    %v3857 = vunpack.c.l.b16 %v3594
    %v3858 = vunpack.c.l.b16 %v3595
    %v3859 = vunpack.c.l.b16 %v3596
    %v3860 = vunpack.c.l.b16 %v3597
    %v3861 = vunpack.c.l.b16 %v3598
    %v3862 = vunpack.c.l.b16 %v3599
    %v3863 = vunpack.c.l.b16 %v3600
    %v3864 = vunpack.c.l.b16 %v3601
    %v3865 = vunpack.c.l.b16 %v3602
    %v3866 = vunpack.c.l.b16 %v3603
    %v3867 = vunpack.c.l.b16 %v3604
    %v3868 = vunpack.c.l.b16 %v3605
    %v3869 = vunpack.c.l.b16 %v3606
    %v3870 = vunpack.c.l.b16 %v3607
    %v3871 = vunpack.c.l.b16 %v3608
    %v3872 = vunpack.c.l.b16 %v3609
    %v3873 = vunpack.c.l.b16 %v3610
    %v3874 = vunpack.c.l.b16 %v3611
    %v3875 = vunpack.c.l.b16 %v3612
    %v3876 = vunpack.c.l.b16 %v3613
    %v3877 = vunpack.c.l.b16 %v3614
    %v3878 = vunpack.c.l.b16 %v3615
    %v3879 = vunpack.c.l.b16 %v3616
    %v3880 = vunpack.c.l.b16 %v3617
    %v3881 = vunpack.c.l.b16 %v3618
    %v3882 = vunpack.c.l.b16 %v3619
    %v3883 = vunpack.c.l.b16 %v3620
    %v3884 = vunpack.c.l.b16 %v3621
    %v3885 = vunpack.c.l.b16 %v3622
    %v3886 = vunpack.c.l.b16 %v3623
    %v3887 = vunpack.c.l.b16 %v3624
    %v3888 = vunpack.c.l.b16 %v3625
    %v3889 = vunpack.c.l.b16 %v3626
    %v3890 = vunpack.c.l.b16 %v3627
    %v3891 = vunpack.c.l.b16 %v3628
    %v3892 = vunpack.c.l.b16 %v3629
    %v3893 = vunpack.c.l.b16 %v3630
    %v3894 = vunpack.c.l.b16 %v3631
    %v3895 = vunpack.c.l.b16 %v3632
    %v3896 = vunpack.c.l.b16 %v3633
    %v3897 = vunpack.c.l.b16 %v3634
    %v3898 = vunpack.c.l.b16 %v3635
    %v3899 = vunpack.c.l.b16 %v3636
    %v3900 = vunpack.c.l.b16 %v3637
    %v3901 = vunpack.c.l.b16 %v3638
    %v3902 = vunpack.c.l.b16 %v3639
    %v3903 = vunpack.c.l.b16 %v3640
    %v3904 = vunpack.c.l.b16 %v3641
    %v3905 = vunpack.c.l.b16 %v3642
    %v3906 = vunpack.c.l.b16 %v3643
    %v3907 = vunpack.c.l.b16 %v3644
    %v3908 = vunpack.c.l.b16 %v3645
    %v3909 = vunpack.c.l.b16 %v3646
    %v3910 = vunpack.c.l.b16 %v3647
    %v3911 = vunpack.c.l.b16 %v3648
    %v3912 = vunpack.c.l.b16 %v3649
    %v3913 = vunpack.c.l.b16 %v3650
    %v3914 = vunpack.c.l.b16 %v3651
    %v3915 = vunpack.c.l.b16 %v3652
    %v3916 = vunpack.c.l.b16 %v3653
    %v3917 = vunpack.c.l.b16 %v3654
    %v3918 = vunpack.c.l.b16 %v3655
    %v3919 = vunpack.c.l.b16 %v3656
    %v3920 = vunpack.c.l.b16 %v3657
    %v3921 = vpack.c.b16 %v3794, %v3793
    %v3922 = vpack.c.b16 %v3796, %v3795
    %v3923 = vpack.c.b16 %v3798, %v3797
    %v3924 = vpack.c.b16 %v3800, %v3799
    %v3925 = vpack.c.b16 %v3802, %v3801
    %v3926 = vpack.c.b16 %v3804, %v3803
    %v3927 = vpack.c.b16 %v3806, %v3805
    %v3928 = vpack.c.b16 %v3808, %v3807
    %v3929 = vpack.c.b16 %v3810, %v3809
    %v3930 = vpack.c.b16 %v3812, %v3811
    %v3931 = vpack.c.b16 %v3814, %v3813
    %v3932 = vpack.c.b16 %v3816, %v3815
    %v3933 = vpack.c.b16 %v3818, %v3817
    %v3934 = vpack.c.b16 %v3820, %v3819
    %v3935 = vpack.c.b16 %v3822, %v3821
    %v3936 = vpack.c.b16 %v3824, %v3823
    %v3937 = vpack.c.b16 %v3826, %v3825
    %v3938 = vpack.c.b16 %v3828, %v3827
    %v3939 = vpack.c.b16 %v3830, %v3829
    %v3940 = vpack.c.b16 %v3832, %v3831
    %v3941 = vpack.c.b16 %v3834, %v3833
    %v3942 = vpack.c.b16 %v3836, %v3835
    %v3943 = vpack.c.b16 %v3838, %v3837
    %v3944 = vpack.c.b16 %v3840, %v3839
    %v3945 = vpack.c.b16 %v3842, %v3841
    %v3946 = vpack.c.b16 %v3844, %v3843
    %v3947 = vpack.c.b16 %v3846, %v3845
    %v3948 = vpack.c.b16 %v3848, %v3847
    %v3949 = vpack.c.b16 %v3850, %v3849
    %v3950 = vpack.c.b16 %v3852, %v3851
    %v3951 = vpack.c.b16 %v3854, %v3853
    %v3952 = vpack.c.b16 %v3856, %v3855
    %v3953 = vpack.c.b16 %v3858, %v3857
    %v3954 = vpack.c.b16 %v3860, %v3859
    %v3955 = vpack.c.b16 %v3862, %v3861
    %v3956 = vpack.c.b16 %v3864, %v3863
    %v3957 = vpack.c.b16 %v3866, %v3865
    %v3958 = vpack.c.b16 %v3868, %v3867
    %v3959 = vpack.c.b16 %v3870, %v3869
    %v3960 = vpack.c.b16 %v3872, %v3871
    %v3961 = vpack.c.b16 %v3874, %v3873
    %v3962 = vpack.c.b16 %v3876, %v3875
    %v3963 = vpack.c.b16 %v3878, %v3877
    %v3964 = vpack.c.b16 %v3880, %v3879
    %v3965 = vpack.c.b16 %v3882, %v3881
    %v3966 = vpack.c.b16 %v3884, %v3883
    %v3967 = vpack.c.b16 %v3886, %v3885
    %v3968 = vpack.c.b16 %v3888, %v3887
    %v3969 = vpack.c.b16 %v3890, %v3889
    %v3970 = vpack.c.b16 %v3892, %v3891
    %v3971 = vpack.c.b16 %v3894, %v3893
    %v3972 = vpack.c.b16 %v3896, %v3895
    %v3973 = vpack.c.b16 %v3898, %v3897
    %v3974 = vpack.c.b16 %v3900, %v3899
    %v3975 = vpack.c.b16 %v3902, %v3901
    %v3976 = vpack.c.b16 %v3904, %v3903
    %v3977 = vpack.c.b16 %v3906, %v3905
    %v3978 = vpack.c.b16 %v3908, %v3907
    %v3979 = vpack.c.b16 %v3910, %v3909
    %v3980 = vpack.c.b16 %v3912, %v3911
    %v3981 = vpack.c.b16 %v3914, %v3913
    %v3982 = vpack.c.b16 %v3916, %v3915
    %v3983 = vpack.c.b16 %v3918, %v3917
    %v3984 = vpack.c.b16 %v3920, %v3919
    %4049 = vmatprep.subr.bf16.mxu0 0
    %4050 = vmatpush1.bf16.msra.mxu0 %v3928
    %4051 = vmatprep.subr.bf16.mxu0 0
    %4052 = vmatpush1.bf16.msra.mxu0 %v3927
    %4053 = vmatprep.subr.bf16.mxu0 0
    %4054 = vmatpush1.bf16.msra.mxu0 %v3926
    %4055 = vmatprep.subr.bf16.mxu0 0
    %4056 = vmatpush1.bf16.msra.mxu0 %v3925
    %4057 = vmatprep.subr.bf16.mxu0 0
    %4058 = vmatpush1.bf16.msra.mxu0 %v3924
    %4059 = vmatprep.subr.bf16.mxu0 0
    %4060 = vmatpush1.bf16.msra.mxu0 %v3923
    %4061 = vmatprep.subr.bf16.mxu0 0
    %4062 = vmatpush1.bf16.msra.mxu0 %v3922
    %4063 = vmatprep.subr.bf16.mxu0 0
    %4064 = vmatpush1.bf16.msra.mxu0 %v3921
    %4065 = vmatprep.subr.bf16.mxu0 0
    %4066 = vmatpush2.bf16.msra.mxu0 %v3936
    %4067 = vmatprep.subr.bf16.mxu0 0
    %4068 = vmatpush2.bf16.msra.mxu0 %v3935
    %4069 = vmatprep.subr.bf16.mxu0 0
    %4070 = vmatpush2.bf16.msra.mxu0 %v3934
    %4071 = vmatprep.subr.bf16.mxu0 0
    %4072 = vmatpush2.bf16.msra.mxu0 %v3933
    %4073 = vmatprep.subr.bf16.mxu0 0
    %4074 = vmatpush2.bf16.msra.mxu0 %v3932
    %4075 = vmatprep.subr.bf16.mxu0 0
    %4076 = vmatpush2.bf16.msra.mxu0 %v3931
    %4077 = vmatprep.subr.bf16.mxu0 0
    %4078 = vmatpush2.bf16.msra.mxu0 %v3930
    %4079 = vmatprep.subr.bf16.mxu0 0
    %4080 = vmatpush2.bf16.msra.mxu0 %v3929
    %4081 = vmatprep.mubr.bf16.mxu0 %v3523
    %4082 = vmatmul.mubr.bf16.gmra.mxu0 %v3522
    %v4083 = vpop.f32.mrf.mxu0
    %v4084 = vadd.f32 %v3663, %v4083
    %v4085 = vpop.f32.mrf.mxu0
    %v4086 = vpop.f32.mrf.mxu0
    %v4087 = vpop.f32.mrf.mxu0
    %4088 = vdwg.mxu0
    %4089 = vmatprep.subr.bf16.mxu0 0
    %4090 = vmatpush1.bf16.msra.mxu0 %v3944
    %4091 = vmatprep.subr.bf16.mxu0 0
    %4092 = vmatpush1.bf16.msra.mxu0 %v3943
    %4093 = vmatprep.subr.bf16.mxu0 0
    %4094 = vmatpush1.bf16.msra.mxu0 %v3942
    %4095 = vmatprep.subr.bf16.mxu0 0
    %4096 = vmatpush1.bf16.msra.mxu0 %v3941
    %4097 = vmatprep.subr.bf16.mxu0 0
    %4098 = vmatpush1.bf16.msra.mxu0 %v3940
    %4099 = vmatprep.subr.bf16.mxu0 0
    %4100 = vmatpush1.bf16.msra.mxu0 %v3939
    %4101 = vmatprep.subr.bf16.mxu0 0
    %4102 = vmatpush1.bf16.msra.mxu0 %v3938
    %4103 = vmatprep.subr.bf16.mxu0 0
    %4104 = vmatpush1.bf16.msra.mxu0 %v3937
    %4105 = vmatprep.subr.bf16.mxu0 0
    %4106 = vmatpush2.bf16.msra.mxu0 %v3952
    %4107 = vmatprep.subr.bf16.mxu0 0
    %4108 = vmatpush2.bf16.msra.mxu0 %v3951
    %4109 = vmatprep.subr.bf16.mxu0 0
    %4110 = vmatpush2.bf16.msra.mxu0 %v3950
    %4111 = vmatprep.subr.bf16.mxu0 0
    %4112 = vmatpush2.bf16.msra.mxu0 %v3949
    %4113 = vmatprep.subr.bf16.mxu0 0
    %4114 = vmatpush2.bf16.msra.mxu0 %v3948
    %4115 = vmatprep.subr.bf16.mxu0 0
    %4116 = vmatpush2.bf16.msra.mxu0 %v3947
    %4117 = vmatprep.subr.bf16.mxu0 0
    %4118 = vmatpush2.bf16.msra.mxu0 %v3946
    %4119 = vmatprep.subr.bf16.mxu0 0
    %4120 = vmatpush2.bf16.msra.mxu0 %v3945
    %4121 = vmatprep.mubr.bf16.mxu0 %v3525
    %4122 = vmatmul.mubr.bf16.gmra.mxu0 %v3524
    %v4123 = vpop.f32.mrf.mxu0
    %v4124 = vadd.f32 %v4084, %v4123
    %v4125 = vpop.f32.mrf.mxu0
    %v4126 = vpop.f32.mrf.mxu0
    %v4127 = vpop.f32.mrf.mxu0
    %4128 = vdwg.mxu0
    %4129 = vmatprep.subr.bf16.mxu0 0
    %4130 = vmatpush1.bf16.msra.mxu0 %v3960
    %4131 = vmatprep.subr.bf16.mxu0 0
    %4132 = vmatpush1.bf16.msra.mxu0 %v3959
    %4133 = vmatprep.subr.bf16.mxu0 0
    %4134 = vmatpush1.bf16.msra.mxu0 %v3958
    %4135 = vmatprep.subr.bf16.mxu0 0
    %4136 = vmatpush1.bf16.msra.mxu0 %v3957
    %4137 = vmatprep.subr.bf16.mxu0 0
    %4138 = vmatpush1.bf16.msra.mxu0 %v3956
    %4139 = vmatprep.subr.bf16.mxu0 0
    %4140 = vmatpush1.bf16.msra.mxu0 %v3955
    %4141 = vmatprep.subr.bf16.mxu0 0
    %4142 = vmatpush1.bf16.msra.mxu0 %v3954
    %4143 = vmatprep.subr.bf16.mxu0 0
    %4144 = vmatpush1.bf16.msra.mxu0 %v3953
    %4145 = vmatprep.subr.bf16.mxu0 0
    %4146 = vmatpush2.bf16.msra.mxu0 %v3968
    %4147 = vmatprep.subr.bf16.mxu0 0
    %4148 = vmatpush2.bf16.msra.mxu0 %v3967
    %4149 = vmatprep.subr.bf16.mxu0 0
    %4150 = vmatpush2.bf16.msra.mxu0 %v3966
    %4151 = vmatprep.subr.bf16.mxu0 0
    %4152 = vmatpush2.bf16.msra.mxu0 %v3965
    %4153 = vmatprep.subr.bf16.mxu0 0
    %4154 = vmatpush2.bf16.msra.mxu0 %v3964
    %4155 = vmatprep.subr.bf16.mxu0 0
    %4156 = vmatpush2.bf16.msra.mxu0 %v3963
    %4157 = vmatprep.subr.bf16.mxu0 0
    %4158 = vmatpush2.bf16.msra.mxu0 %v3962
    %4159 = vmatprep.subr.bf16.mxu0 0
    %4160 = vmatpush2.bf16.msra.mxu0 %v3961
    %4161 = vmatprep.mubr.bf16.mxu0 %v3527
    %4162 = vmatmul.mubr.bf16.gmra.mxu0 %v3526
    %v4163 = vpop.f32.mrf.mxu0
    %v4164 = vadd.f32 %v4124, %v4163
    %v4165 = vpop.f32.mrf.mxu0
    %v4166 = vpop.f32.mrf.mxu0
    %v4167 = vpop.f32.mrf.mxu0
    %4168 = vdwg.mxu0
    %4169 = vmatprep.subr.bf16.mxu0 0
    %4170 = vmatpush1.bf16.msra.mxu0 %v3976
    %4171 = vmatprep.subr.bf16.mxu0 0
    %4172 = vmatpush1.bf16.msra.mxu0 %v3975
    %4173 = vmatprep.subr.bf16.mxu0 0
    %4174 = vmatpush1.bf16.msra.mxu0 %v3974
    %4175 = vmatprep.subr.bf16.mxu0 0
    %4176 = vmatpush1.bf16.msra.mxu0 %v3973
    %4177 = vmatprep.subr.bf16.mxu0 0
    %4178 = vmatpush1.bf16.msra.mxu0 %v3972
    %4179 = vmatprep.subr.bf16.mxu0 0
    %4180 = vmatpush1.bf16.msra.mxu0 %v3971
    %4181 = vmatprep.subr.bf16.mxu0 0
    %4182 = vmatpush1.bf16.msra.mxu0 %v3970
    %4183 = vmatprep.subr.bf16.mxu0 0
    %4184 = vmatpush1.bf16.msra.mxu0 %v3969
    %4185 = vmatprep.subr.bf16.mxu0 0
    %4186 = vmatpush2.bf16.msra.mxu0 %v3984
    %4187 = vmatprep.subr.bf16.mxu0 0
    %4188 = vmatpush2.bf16.msra.mxu0 %v3983
    %4189 = vmatprep.subr.bf16.mxu0 0
    %4190 = vmatpush2.bf16.msra.mxu0 %v3982
    %4191 = vmatprep.subr.bf16.mxu0 0
    %4192 = vmatpush2.bf16.msra.mxu0 %v3981
    %4193 = vmatprep.subr.bf16.mxu0 0
    %4194 = vmatpush2.bf16.msra.mxu0 %v3980
    %4195 = vmatprep.subr.bf16.mxu0 0
    %4196 = vmatpush2.bf16.msra.mxu0 %v3979
    %4197 = vmatprep.subr.bf16.mxu0 0
    %4198 = vmatpush2.bf16.msra.mxu0 %v3978
    %4199 = vmatprep.subr.bf16.mxu0 0
    %4200 = vmatpush2.bf16.msra.mxu0 %v3977
    %4201 = vmatprep.mubr.bf16.mxu0 %v3529
    %4202 = vmatmul.mubr.bf16.gmra.mxu0 %v3528
    %v4203 = vpop.f32.mrf.mxu0
    %v4204 = vadd.f32 %v4164, %v4203
    %v4205 = vpop.f32.mrf.mxu0
    %v4206 = vpop.f32.mrf.mxu0
    %v4207 = vpop.f32.mrf.mxu0
    %4208 = vdwg.mxu0
    %vm4209 = vcmask 80896
    %v4210 = vsel %vm4209, %v4204, -inf
    %4211 = vmax.xlane.f32.xlu0 %v4210
    %v4212 = vpop.xlane.xlu0 %4211
    %v4213 = vsub.f32 %v4204, %v4212
    %v4214 = vmul.f32 %v4213, 1.442695
    %v4215 = vpow.pop %v4214
    %v4216 = vsel %vm4209, %v4215, 0.0
    %4217 = vadd.xlane.f32.xlu0 %v4216
    %v4218 = vpop.xlane.xlu0 %4217
    %v4219 = vlog2.pop %v4218
    %v4220 = vmul.f32 %v4219, 0.6931472
    %v4221 = vsub.f32 %v4213, %v4220
    %4222 = vst.msk [vmem:[#allocation7] sm:$0xff] %vm4209, %v4221
    // Predicated region
    $region38: #{tpu_custom_call.1} parent=1 // pred_check
      _
    $region39: #{tpu_custom_call.1} parent=1 // pred_check_branch
      %4224 = sbr.rel (0) target = $region41
    $region40: #{tpu_custom_call.1} parent=1 // pred_region
      %s4226 = ssub.s32 128, 128
      %4227 = vsyncadd [#allocation4], %s4226
      %s4229 = sshll.u32 [#allocation7], 4
      %s4230 = int_to_ptr.vmem [resolvable:$true] %s4229
      %4232 = dma.vmem_to_hbm [thread:$0]  %s4230, 128, %s7, [#allocation4]
    $region41: #{tpu_custom_call.1} parent=1 // pred_fallthru
      _
    // Predicated region
    $region42: #{tpu_custom_call.1} parent=1 // pred_check
      _
    $region43: #{tpu_custom_call.1} parent=1 // pred_check_branch
      %4234 = sbr.rel (0) target = $region45
    $region44: #{tpu_custom_call.1} parent=1 // pred_region
      %4235 = dma.done [#allocation4], 128
    $region45: #{tpu_custom_call.1} parent=1 // pred_fallthru
      _
    %4236 = vsyncpa [#allocation3], 1
    %4237 = vsyncpa [#allocation6], 1
    %4238 = vsyncpa [#allocation4], 1

</llo_original>
